<compile_context>
chip_gen: v6e
topology: v6e:2x2x1
jax: 0.10.0
libtpu: 0.0.40
codegen_flags: <defaults>
</compile_context>

<pallas_src>
import functools

import jax
import jax.numpy as jnp
import numpy as np
from jax.experimental import pallas as pl
from jax.experimental.pallas import tpu as pltpu

EPS = 1e-5  # nn.InstanceNorm2d default eps (affine=False, biased variance)


def _resblock_in_kernel(x_ref, w1_ref, b1_ref, w2_ref, mask_ref, o_ref, g_ref,
                        *, H, W):
    """One batch element per grid step; NCHW-native, lane-dense spatial axis.

    x_ref   : (1, C, L)      padded-flat input with (Wp+1)-wide zero guard lanes,
                             L = Hp*Wp + 2*(Wp+1)
    w*_ref  : (9, C, C)      conv weights, tap-major (ky*3+kx, C_out, C_in), f32
    b1_ref  : (C, 1)         conv1 bias (conv2 bias is cancelled by InstanceNorm)
    mask_ref: (1, Hp*Wp)     1.0 on interior (real) pixels, 0.0 on the pad ring
    o_ref   : (1, C, Hp*Wp)  output in padded-flat layout (ring discarded outside)
    g_ref   : (C, L) f32     staging scratch: conv2 input, padded-flat + guards
    """
    C = x_ref.shape[1]
    Hp, Wp = H + 2, W + 2
    HpWp = Hp * Wp
    G = Wp + 1                      # guard width == max |tap offset|
    L = HpWp + 2 * G
    inv_n = 1.0 / float(H * W)

    keep = mask_ref[...]            # (1, HpWp) f32, broadcasts over channels
    b1 = b1_ref[...]                # (C, 1) f32

    def conv3x3(load_tap, w_ref):
        # 3x3 conv as 9 accumulating MXU matmuls (no im2col slab).  Each tap's RHS
        # is a static lane-offset slice of the padded-flat activation: for tap
        # (ky, kx) the slice starts at ky*Wp + kx and is Hp*Wp lanes long, so the
        # result stays in lane-dense (C_out, Hp*Wp) form.
        acc = None
        for ky in range(3):
            for kx in range(3):
                rhs = load_tap(ky * Wp + kx)                        # (C, HpWp)
                term = jnp.dot(w_ref[ky * 3 + kx], rhs,
                               preferred_element_type=jnp.float32)  # (C, HpWp)
                acc = term if acc is None else acc + term
        return acc

    def instance_norm(z):
        # per-channel stats over the H*W interior pixels only; single pass with
        # the variance clamped to guard the E[z^2] - mean^2 cancellation
        mean = jnp.sum(z * keep, axis=1, keepdims=True) * inv_n
        mean_sq = jnp.sum(z * z * keep, axis=1, keepdims=True) * inv_n
        var = jnp.maximum(mean_sq - mean * mean, 0.0)
        return (z - mean) * jax.lax.rsqrt(var + EPS)

    # ---- conv1 -> ReLU -> InstanceNorm
    a1 = conv3x3(lambda off: x_ref[0, :, off:off + HpWp], w1_ref) + b1
    z1 = instance_norm(jnp.maximum(a1, 0.0)) * keep     # zero the pad ring for conv2

    # ---- stage conv2 input (padded-flat + zero guards); the ring is already zero
    zero_guard = jnp.zeros((C, G), jnp.float32)
    g_ref[:, 0:G] = zero_guard
    g_ref[:, G + HpWp:L] = zero_guard
    g_ref[:, G:G + HpWp] = z1

    # ---- conv2 -> InstanceNorm   (conv2 bias omitted: a constant per-channel
    #      offset is exactly removed by the affine-free IN mean subtraction)
    a2 = conv3x3(lambda off: g_ref[:, off:off + HpWp], w2_ref)
    z2 = instance_norm(a2)

    # ---- residual add; non-interior lanes are don't-care and sliced away outside
    identity = x_ref[0, :, G:G + HpWp].astype(jnp.float32)
    o_ref[0] = (identity + z2).astype(o_ref.dtype)


def residual_block_in(x_nchw, w1_oihw, b1, w2_oihw, b2=None):
    """Pallas forward of ResidualBlock_IN.

    x_nchw : (N, C, H, W)    w*_oihw : (C, C, 3, 3) PyTorch OIHW    b* : (C,)
    b2 is accepted for API parity but unused: a per-channel bias immediately
    followed by affine-free InstanceNorm is mathematically a no-op.
    """
    del b2
    N, C, H, W = x_nchw.shape
    assert w1_oihw.shape == (C, C, 3, 3) and w2_oihw.shape == (C, C, 3, 3), (
        "kernel assumes C_in == C_out 3x3 convs")

    Hp, Wp = H + 2, W + 2
    HpWp = Hp * Wp
    G = Wp + 1
    L = HpWp + 2 * G

    # Spatial zero-pad + flatten + guard lanes (one fused XLA pad).  The kernel
    # stays in NCHW the whole way, so there are no NCHW<->NHWC transposes.
    x_flat = jnp.pad(x_nchw, ((0, 0), (0, 0), (1, 1), (1, 1))).reshape(N, C, HpWp)
    x_g = jnp.pad(x_flat, ((0, 0), (0, 0), (G, G)))

    # Tap-major (ky*3+kx, C_out, C_in) weights, already in the MXU dtype.
    w1_k = jnp.transpose(w1_oihw, (2, 3, 0, 1)).reshape(9, C, C).astype(jnp.float32)
    w2_k = jnp.transpose(w2_oihw, (2, 3, 0, 1)).reshape(9, C, C).astype(jnp.float32)
    b1_k = b1.reshape(C, 1).astype(jnp.float32)

    # 1.0 on real pixels, 0.0 on the pad ring (padded-flat coordinates).
    yy, xx = jnp.meshgrid(jnp.arange(Hp), jnp.arange(Wp), indexing="ij")
    interior = ((yy >= 1) & (yy <= H) & (xx >= 1) & (xx <= W))
    interior = interior.reshape(1, HpWp).astype(jnp.float32)

    # VMEM budget derived from the actual block/scratch sizes (+ headroom for f32
    # temporaries), capped below v7x's 64 MiB physical VMEM per TensorCore.
    itemsize = jnp.dtype(x_nchw.dtype).itemsize
    block_bytes = (
        2 * C * L * itemsize            # double-buffered input block
        + 2 * C * HpWp * itemsize       # double-buffered output block
        + 2 * 9 * C * C * 4             # resident weights
        + (C + HpWp) * 4                # bias + interior mask
        + C * L * 4                     # conv2 staging scratch
        + 12 * C * HpWp * 4             # f32 intermediates / relayout temporaries
    )
    vmem_limit = int(min(max(2 * block_bytes, 4 << 20), 56 << 20))

    kernel = functools.partial(_resblock_in_kernel, H=H, W=W)
    out_flat = pl.pallas_call(
        kernel,
        out_shape=jax.ShapeDtypeStruct((N, C, HpWp), x_nchw.dtype),
        grid_spec=pltpu.PrefetchScalarGridSpec(
            num_scalar_prefetch=0,
            grid=(N,),
            in_specs=[
                pl.BlockSpec((1, C, L), lambda n: (n, 0, 0)),
                pl.BlockSpec((9, C, C), lambda n: (0, 0, 0)),
                pl.BlockSpec((C, 1), lambda n: (0, 0)),
                pl.BlockSpec((9, C, C), lambda n: (0, 0, 0)),
                pl.BlockSpec((1, HpWp), lambda n: (0, 0)),
            ],
            out_specs=pl.BlockSpec((1, C, HpWp), lambda n: (n, 0, 0)),
            scratch_shapes=[pltpu.VMEM((C, L), jnp.float32)],
        ),
        compiler_params=pltpu.CompilerParams(
            dimension_semantics=("parallel",),   # batch images are independent
            vmem_limit_bytes=vmem_limit,
        ),
    )(x_g, w1_k, b1_k, w2_k, interior)

    # Drop the pad ring: (N, C, Hp*Wp) -> (N, C, H, W).
    return out_flat.reshape(N, C, Hp, Wp)[:, :, 1:H + 1, 1:W + 1]


def reference_forward(x_nchw, w1_oihw, b1, w2_oihw, b2):
    """Pure-JAX reference of the PyTorch forward (NCHW / OIHW, like nn.Conv2d)."""
    C = x_nchw.shape[1]

    def conv(z, w, b):
        y = jax.lax.conv_general_dilated(
            z, w, (1, 1), "SAME",
            dimension_numbers=("NCHW", "OIHW", "NCHW"))
        return y + b.reshape(1, C, 1, 1)

    def inorm(z):
        m = jnp.mean(z, axis=(2, 3), keepdims=True)
        v = jnp.mean((z - m) ** 2, axis=(2, 3), keepdims=True)
        return (z - m) * jax.lax.rsqrt(v + EPS)

    h = jnp.maximum(conv(x_nchw, w1_oihw, b1), 0.0)
    h = inorm(h)
    h = conv(h, w2_oihw, b2)
    h = inorm(h)
    return x_nchw + h


if __name__ == "__main__":
    N, C, H, W = 2, 4, 16, 16   # small nf for the synthetic test
    key = jax.random.PRNGKey(0)
    kx, k1, k2, kb1, kb2 = jax.random.split(key, 5)

    x = jax.random.normal(kx, (N, C, H, W), jnp.float32)

    # kaiming_normal (fan_in, a=0 -> std = sqrt(2/(Cin*3*3))) scaled by 0.1, OIHW.
    fan_in = C * 3 * 3
    std = np.sqrt(2.0 / fan_in)
    w1 = jax.random.normal(k1, (C, C, 3, 3), jnp.float32) * std * 0.1
    w2 = jax.random.normal(k2, (C, C, 3, 3), jnp.float32) * std * 0.1
    # module init zeroes biases; use small nonzero ones so the bias path (and the
    # "conv2 bias cancelled by IN" identity) is actually exercised by the check.
    b1 = jax.random.normal(kb1, (C,), jnp.float32) * 0.05
    b2 = jax.random.normal(kb2, (C,), jnp.float32) * 0.05

    out = jax.block_until_ready(residual_block_in(x, w1, b1, w2, b2))
    ref = jax.block_until_ready(reference_forward(x, w1, b1, w2, b2))
    np.testing.assert_allclose(np.asarray(out), np.asarray(ref),
                               rtol=1e-4, atol=1e-4)
    print("KERNEL_OK")
</pallas_src>

<mosaic_0001>
module attributes {stable_mosaic.version = 11 : i64} {
  func.func @_resblock_in_kernel(%arg0: i32, %arg1: memref<1x4x362xf32, #tpu.memory_space<vmem>>, %arg2: memref<9x4x4xf32, #tpu.memory_space<vmem>>, %arg3: memref<4x1xf32, #tpu.memory_space<vmem>>, %arg4: memref<9x4x4xf32, #tpu.memory_space<vmem>>, %arg5: memref<1x324xf32, #tpu.memory_space<vmem>>, %arg6: memref<1x4x324xf32, #tpu.memory_space<vmem>>, %arg7: memref<4x362xf32, #tpu.memory_space<vmem>>) attributes {dimension_semantics = [#tpu.dimension_semantics<parallel>], iteration_bounds = array<i64: 2>, scalar_prefetch = 0 : i64, scratch_operands = 1 : i64, tpu.core_type = #tpu.core_type<tc>, window_params = [{transform_indices = @transform_0, window_bounds = array<i64: 1, 4, 362>}, {pipeline_mode = #tpu.pipeline_mode<synchronous>, transform_indices = @transform_1, window_bounds = array<i64: 9, 4, 4>}, {pipeline_mode = #tpu.pipeline_mode<synchronous>, transform_indices = @transform_2, window_bounds = array<i64: 4, 1>}, {pipeline_mode = #tpu.pipeline_mode<synchronous>, transform_indices = @transform_3, window_bounds = array<i64: 9, 4, 4>}, {pipeline_mode = #tpu.pipeline_mode<synchronous>, transform_indices = @transform_4, window_bounds = array<i64: 1, 324>}, {transform_indices = @transform_5, window_bounds = array<i64: 1, 4, 324>}]} {
    %c0 = arith.constant 0 : index
    %c0_0 = arith.constant 0 : index
    %0 = vector.load %arg5[%c0, %c0_0] : memref<1x324xf32, #tpu.memory_space<vmem>>, vector<1x324xf32>
    %c0_1 = arith.constant 0 : index
    %c0_2 = arith.constant 0 : index
    %1 = vector.load %arg3[%c0_1, %c0_2] : memref<4x1xf32, #tpu.memory_space<vmem>>, vector<4x1xf32>
    %c0_3 = arith.constant 0 : index
    %c0_4 = arith.constant 0 : index
    %c0_5 = arith.constant 0 : index
    %2 = vector.load %arg1[%c0_3, %c0_4, %c0_5] : memref<1x4x362xf32, #tpu.memory_space<vmem>>, vector<1x4x324xf32>
    %3 = vector.shape_cast %2 : vector<1x4x324xf32> to vector<4x324xf32>
    %c0_6 = arith.constant 0 : index
    %c0_7 = arith.constant 0 : index
    %c0_8 = arith.constant 0 : index
    %4 = vector.load %arg2[%c0_6, %c0_7, %c0_8] : memref<9x4x4xf32, #tpu.memory_space<vmem>>, vector<1x4x4xf32>
    %5 = vector.shape_cast %4 : vector<1x4x4xf32> to vector<4x4xf32>
    %cst = arith.constant dense<0.000000e+00> : vector<4x324xf32>
    %6 = tpu.matmul %5, %3, %cst {dimension_numbers = #tpu.dot_dimension_numbers<[1], [0], [0], [1], [0, 0, 1, 1], [], []>} : vector<4x4xf32>, vector<4x324xf32>, vector<4x324xf32> -> vector<4x324xf32>
    %c0_9 = arith.constant 0 : index
    %c0_10 = arith.constant 0 : index
    %c1 = arith.constant 1 : index
    %7 = vector.load %arg1[%c0_9, %c0_10, %c1] : memref<1x4x362xf32, #tpu.memory_space<vmem>>, vector<1x4x324xf32>
    %8 = vector.shape_cast %7 : vector<1x4x324xf32> to vector<4x324xf32>
    %c1_11 = arith.constant 1 : index
    %c0_12 = arith.constant 0 : index
    %c0_13 = arith.constant 0 : index
    %9 = vector.load %arg2[%c1_11, %c0_12, %c0_13] : memref<9x4x4xf32, #tpu.memory_space<vmem>>, vector<1x4x4xf32>
    %10 = vector.shape_cast %9 : vector<1x4x4xf32> to vector<4x4xf32>
    %cst_14 = arith.constant dense<0.000000e+00> : vector<4x324xf32>
    %11 = tpu.matmul %10, %8, %cst_14 {dimension_numbers = #tpu.dot_dimension_numbers<[1], [0], [0], [1], [0, 0, 1, 1], [], []>} : vector<4x4xf32>, vector<4x324xf32>, vector<4x324xf32> -> vector<4x324xf32>
    %12 = arith.addf %6, %11 : vector<4x324xf32>
    %c0_15 = arith.constant 0 : index
    %c0_16 = arith.constant 0 : index
    %c2 = arith.constant 2 : index
    %13 = vector.load %arg1[%c0_15, %c0_16, %c2] : memref<1x4x362xf32, #tpu.memory_space<vmem>>, vector<1x4x324xf32>
    %14 = vector.shape_cast %13 : vector<1x4x324xf32> to vector<4x324xf32>
    %c2_17 = arith.constant 2 : index
    %c0_18 = arith.constant 0 : index
    %c0_19 = arith.constant 0 : index
    %15 = vector.load %arg2[%c2_17, %c0_18, %c0_19] : memref<9x4x4xf32, #tpu.memory_space<vmem>>, vector<1x4x4xf32>
    %16 = vector.shape_cast %15 : vector<1x4x4xf32> to vector<4x4xf32>
    %cst_20 = arith.constant dense<0.000000e+00> : vector<4x324xf32>
    %17 = tpu.matmul %16, %14, %cst_20 {dimension_numbers = #tpu.dot_dimension_numbers<[1], [0], [0], [1], [0, 0, 1, 1], [], []>} : vector<4x4xf32>, vector<4x324xf32>, vector<4x324xf32> -> vector<4x324xf32>
    %18 = arith.addf %12, %17 : vector<4x324xf32>
    %c0_21 = arith.constant 0 : index
    %c0_22 = arith.constant 0 : index
    %c18 = arith.constant 18 : index
    %19 = vector.load %arg1[%c0_21, %c0_22, %c18] : memref<1x4x362xf32, #tpu.memory_space<vmem>>, vector<1x4x324xf32>
    %20 = vector.shape_cast %19 : vector<1x4x324xf32> to vector<4x324xf32>
    %c3 = arith.constant 3 : index
    %c0_23 = arith.constant 0 : index
    %c0_24 = arith.constant 0 : index
    %21 = vector.load %arg2[%c3, %c0_23, %c0_24] : memref<9x4x4xf32, #tpu.memory_space<vmem>>, vector<1x4x4xf32>
    %22 = vector.shape_cast %21 : vector<1x4x4xf32> to vector<4x4xf32>
    %cst_25 = arith.constant dense<0.000000e+00> : vector<4x324xf32>
    %23 = tpu.matmul %22, %20, %cst_25 {dimension_numbers = #tpu.dot_dimension_numbers<[1], [0], [0], [1], [0, 0, 1, 1], [], []>} : vector<4x4xf32>, vector<4x324xf32>, vector<4x324xf32> -> vector<4x324xf32>
    %24 = arith.addf %18, %23 : vector<4x324xf32>
    %c0_26 = arith.constant 0 : index
    %c0_27 = arith.constant 0 : index
    %c19 = arith.constant 19 : index
    %25 = vector.load %arg1[%c0_26, %c0_27, %c19] : memref<1x4x362xf32, #tpu.memory_space<vmem>>, vector<1x4x324xf32>
    %26 = vector.shape_cast %25 : vector<1x4x324xf32> to vector<4x324xf32>
    %c4 = arith.constant 4 : index
    %c0_28 = arith.constant 0 : index
    %c0_29 = arith.constant 0 : index
    %27 = vector.load %arg2[%c4, %c0_28, %c0_29] : memref<9x4x4xf32, #tpu.memory_space<vmem>>, vector<1x4x4xf32>
    %28 = vector.shape_cast %27 : vector<1x4x4xf32> to vector<4x4xf32>
    %cst_30 = arith.constant dense<0.000000e+00> : vector<4x324xf32>
    %29 = tpu.matmul %28, %26, %cst_30 {dimension_numbers = #tpu.dot_dimension_numbers<[1], [0], [0], [1], [0, 0, 1, 1], [], []>} : vector<4x4xf32>, vector<4x324xf32>, vector<4x324xf32> -> vector<4x324xf32>
    %30 = arith.addf %24, %29 : vector<4x324xf32>
    %c0_31 = arith.constant 0 : index
    %c0_32 = arith.constant 0 : index
    %c20 = arith.constant 20 : index
    %31 = vector.load %arg1[%c0_31, %c0_32, %c20] : memref<1x4x362xf32, #tpu.memory_space<vmem>>, vector<1x4x324xf32>
    %32 = vector.shape_cast %31 : vector<1x4x324xf32> to vector<4x324xf32>
    %c5 = arith.constant 5 : index
    %c0_33 = arith.constant 0 : index
    %c0_34 = arith.constant 0 : index
    %33 = vector.load %arg2[%c5, %c0_33, %c0_34] : memref<9x4x4xf32, #tpu.memory_space<vmem>>, vector<1x4x4xf32>
    %34 = vector.shape_cast %33 : vector<1x4x4xf32> to vector<4x4xf32>
    %cst_35 = arith.constant dense<0.000000e+00> : vector<4x324xf32>
    %35 = tpu.matmul %34, %32, %cst_35 {dimension_numbers = #tpu.dot_dimension_numbers<[1], [0], [0], [1], [0, 0, 1, 1], [], []>} : vector<4x4xf32>, vector<4x324xf32>, vector<4x324xf32> -> vector<4x324xf32>
    %36 = arith.addf %30, %35 : vector<4x324xf32>
    %c0_36 = arith.constant 0 : index
    %c0_37 = arith.constant 0 : index
    %c36 = arith.constant 36 : index
    %37 = vector.load %arg1[%c0_36, %c0_37, %c36] : memref<1x4x362xf32, #tpu.memory_space<vmem>>, vector<1x4x324xf32>
    %38 = vector.shape_cast %37 : vector<1x4x324xf32> to vector<4x324xf32>
    %c6 = arith.constant 6 : index
    %c0_38 = arith.constant 0 : index
    %c0_39 = arith.constant 0 : index
    %39 = vector.load %arg2[%c6, %c0_38, %c0_39] : memref<9x4x4xf32, #tpu.memory_space<vmem>>, vector<1x4x4xf32>
    %40 = vector.shape_cast %39 : vector<1x4x4xf32> to vector<4x4xf32>
    %cst_40 = arith.constant dense<0.000000e+00> : vector<4x324xf32>
    %41 = tpu.matmul %40, %38, %cst_40 {dimension_numbers = #tpu.dot_dimension_numbers<[1], [0], [0], [1], [0, 0, 1, 1], [], []>} : vector<4x4xf32>, vector<4x324xf32>, vector<4x324xf32> -> vector<4x324xf32>
    %42 = arith.addf %36, %41 : vector<4x324xf32>
    %c0_41 = arith.constant 0 : index
    %c0_42 = arith.constant 0 : index
    %c37 = arith.constant 37 : index
    %43 = vector.load %arg1[%c0_41, %c0_42, %c37] : memref<1x4x362xf32, #tpu.memory_space<vmem>>, vector<1x4x324xf32>
    %44 = vector.shape_cast %43 : vector<1x4x324xf32> to vector<4x324xf32>
    %c7 = arith.constant 7 : index
    %c0_43 = arith.constant 0 : index
    %c0_44 = arith.constant 0 : index
    %45 = vector.load %arg2[%c7, %c0_43, %c0_44] : memref<9x4x4xf32, #tpu.memory_space<vmem>>, vector<1x4x4xf32>
    %46 = vector.shape_cast %45 : vector<1x4x4xf32> to vector<4x4xf32>
    %cst_45 = arith.constant dense<0.000000e+00> : vector<4x324xf32>
    %47 = tpu.matmul %46, %44, %cst_45 {dimension_numbers = #tpu.dot_dimension_numbers<[1], [0], [0], [1], [0, 0, 1, 1], [], []>} : vector<4x4xf32>, vector<4x324xf32>, vector<4x324xf32> -> vector<4x324xf32>
    %48 = arith.addf %42, %47 : vector<4x324xf32>
    %c0_46 = arith.constant 0 : index
    %c0_47 = arith.constant 0 : index
    %c38 = arith.constant 38 : index
    %49 = vector.load %arg1[%c0_46, %c0_47, %c38] : memref<1x4x362xf32, #tpu.memory_space<vmem>>, vector<1x4x324xf32>
    %50 = vector.shape_cast %49 : vector<1x4x324xf32> to vector<4x324xf32>
    %c8 = arith.constant 8 : index
    %c0_48 = arith.constant 0 : index
    %c0_49 = arith.constant 0 : index
    %51 = vector.load %arg2[%c8, %c0_48, %c0_49] : memref<9x4x4xf32, #tpu.memory_space<vmem>>, vector<1x4x4xf32>
    %52 = vector.shape_cast %51 : vector<1x4x4xf32> to vector<4x4xf32>
    %cst_50 = arith.constant dense<0.000000e+00> : vector<4x324xf32>
    %53 = tpu.matmul %52, %50, %cst_50 {dimension_numbers = #tpu.dot_dimension_numbers<[1], [0], [0], [1], [0, 0, 1, 1], [], []>} : vector<4x4xf32>, vector<4x324xf32>, vector<4x324xf32> -> vector<4x324xf32>
    %54 = arith.addf %48, %53 : vector<4x324xf32>
    %55 = vector.broadcast %1 : vector<4x1xf32> to vector<4x324xf32>
    %56 = arith.addf %54, %55 : vector<4x324xf32>
    %cst_51 = arith.constant 0.000000e+00 : f32
    %57 = vector.broadcast %cst_51 : f32 to vector<4x324xf32>
    %58 = arith.maximumf %56, %57 : vector<4x324xf32>
    %59 = vector.broadcast %0 : vector<1x324xf32> to vector<4x324xf32>
    %60 = arith.mulf %58, %59 : vector<4x324xf32>
    %cst_52 = arith.constant dense<0.000000e+00> : vector<4xf32>
    %61 = vector.multi_reduction <add>, %60, %cst_52 [1] : vector<4x324xf32> to vector<4xf32>
    %62 = vector.shape_cast %61 : vector<4xf32> to vector<4x1xf32>
    %cst_53 = arith.constant 3.906250e-03 : f32
    %63 = vector.broadcast %cst_53 : f32 to vector<4x1xf32>
    %64 = arith.mulf %62, %63 : vector<4x1xf32>
    %65 = arith.mulf %58, %58 : vector<4x324xf32>
    %66 = vector.broadcast %0 : vector<1x324xf32> to vector<4x324xf32>
    %67 = arith.mulf %65, %66 : vector<4x324xf32>
    %cst_54 = arith.constant dense<0.000000e+00> : vector<4xf32>
    %68 = vector.multi_reduction <add>, %67, %cst_54 [1] : vector<4x324xf32> to vector<4xf32>
    %69 = vector.shape_cast %68 : vector<4xf32> to vector<4x1xf32>
    %cst_55 = arith.constant 3.906250e-03 : f32
    %70 = vector.broadcast %cst_55 : f32 to vector<4x1xf32>
    %71 = arith.mulf %69, %70 : vector<4x1xf32>
    %72 = arith.mulf %64, %64 : vector<4x1xf32>
    %73 = arith.subf %71, %72 : vector<4x1xf32>
    %cst_56 = arith.constant 0.000000e+00 : f32
    %74 = vector.broadcast %cst_56 : f32 to vector<4x1xf32>
    %75 = arith.maximumf %73, %74 : vector<4x1xf32>
    %76 = vector.broadcast %64 : vector<4x1xf32> to vector<4x324xf32>
    %77 = arith.subf %58, %76 : vector<4x324xf32>
    %cst_57 = arith.constant 9.99999974E-6 : f32
    %78 = vector.broadcast %cst_57 : f32 to vector<4x1xf32>
    %79 = arith.addf %75, %78 : vector<4x1xf32>
    %80 = math.rsqrt %79 : vector<4x1xf32>
    %81 = vector.broadcast %80 : vector<4x1xf32> to vector<4x324xf32>
    %82 = arith.mulf %77, %81 : vector<4x324xf32>
    %83 = vector.broadcast %0 : vector<1x324xf32> to vector<4x324xf32>
    %84 = arith.mulf %82, %83 : vector<4x324xf32>
    %cst_58 = arith.constant 0.000000e+00 : f32
    %85 = vector.broadcast %cst_58 : f32 to vector<4x19xf32>
    %c0_59 = arith.constant 0 : index
    %c0_60 = arith.constant 0 : index
    %86 = vector.load %arg7[%c0_59, %c0_60] : memref<4x362xf32, #tpu.memory_space<vmem>>, vector<4x19xf32>
    tpu.vector_store %arg7[%c0_59, %c0_60], %85 {strides = array<i32>} : memref<4x362xf32, #tpu.memory_space<vmem>>, vector<4x19xf32>,
    %c0_61 = arith.constant 0 : index
    %c343 = arith.constant 343 : index
    %87 = vector.load %arg7[%c0_61, %c343] : memref<4x362xf32, #tpu.memory_space<vmem>>, vector<4x19xf32>
    tpu.vector_store %arg7[%c0_61, %c343], %85 {strides = array<i32>} : memref<4x362xf32, #tpu.memory_space<vmem>>, vector<4x19xf32>,
    %c0_62 = arith.constant 0 : index
    %c19_63 = arith.constant 19 : index
    %88 = vector.load %arg7[%c0_62, %c19_63] : memref<4x362xf32, #tpu.memory_space<vmem>>, vector<4x324xf32>
    tpu.vector_store %arg7[%c0_62, %c19_63], %84 {strides = array<i32>} : memref<4x362xf32, #tpu.memory_space<vmem>>, vector<4x324xf32>,
    %c0_64 = arith.constant 0 : index
    %c0_65 = arith.constant 0 : index
    %89 = vector.load %arg7[%c0_64, %c0_65] : memref<4x362xf32, #tpu.memory_space<vmem>>, vector<4x324xf32>
    %c0_66 = arith.constant 0 : index
    %c0_67 = arith.constant 0 : index
    %c0_68 = arith.constant 0 : index
    %90 = vector.load %arg4[%c0_66, %c0_67, %c0_68] : memref<9x4x4xf32, #tpu.memory_space<vmem>>, vector<1x4x4xf32>
    %91 = vector.shape_cast %90 : vector<1x4x4xf32> to vector<4x4xf32>
    %cst_69 = arith.constant dense<0.000000e+00> : vector<4x324xf32>
    %92 = tpu.matmul %91, %89, %cst_69 {dimension_numbers = #tpu.dot_dimension_numbers<[1], [0], [0], [1], [0, 0, 1, 1], [], []>} : vector<4x4xf32>, vector<4x324xf32>, vector<4x324xf32> -> vector<4x324xf32>
    %c0_70 = arith.constant 0 : index
    %c1_71 = arith.constant 1 : index
    %93 = vector.load %arg7[%c0_70, %c1_71] : memref<4x362xf32, #tpu.memory_space<vmem>>, vector<4x324xf32>
    %c1_72 = arith.constant 1 : index
    %c0_73 = arith.constant 0 : index
    %c0_74 = arith.constant 0 : index
    %94 = vector.load %arg4[%c1_72, %c0_73, %c0_74] : memref<9x4x4xf32, #tpu.memory_space<vmem>>, vector<1x4x4xf32>
    %95 = vector.shape_cast %94 : vector<1x4x4xf32> to vector<4x4xf32>
    %cst_75 = arith.constant dense<0.000000e+00> : vector<4x324xf32>
    %96 = tpu.matmul %95, %93, %cst_75 {dimension_numbers = #tpu.dot_dimension_numbers<[1], [0], [0], [1], [0, 0, 1, 1], [], []>} : vector<4x4xf32>, vector<4x324xf32>, vector<4x324xf32> -> vector<4x324xf32>
    %97 = arith.addf %92, %96 : vector<4x324xf32>
    %c0_76 = arith.constant 0 : index
    %c2_77 = arith.constant 2 : index
    %98 = vector.load %arg7[%c0_76, %c2_77] : memref<4x362xf32, #tpu.memory_space<vmem>>, vector<4x324xf32>
    %c2_78 = arith.constant 2 : index
    %c0_79 = arith.constant 0 : index
    %c0_80 = arith.constant 0 : index
    %99 = vector.load %arg4[%c2_78, %c0_79, %c0_80] : memref<9x4x4xf32, #tpu.memory_space<vmem>>, vector<1x4x4xf32>
    %100 = vector.shape_cast %99 : vector<1x4x4xf32> to vector<4x4xf32>
    %cst_81 = arith.constant dense<0.000000e+00> : vector<4x324xf32>
    %101 = tpu.matmul %100, %98, %cst_81 {dimension_numbers = #tpu.dot_dimension_numbers<[1], [0], [0], [1], [0, 0, 1, 1], [], []>} : vector<4x4xf32>, vector<4x324xf32>, vector<4x324xf32> -> vector<4x324xf32>
    %102 = arith.addf %97, %101 : vector<4x324xf32>
    %c0_82 = arith.constant 0 : index
    %c18_83 = arith.constant 18 : index
    %103 = vector.load %arg7[%c0_82, %c18_83] : memref<4x362xf32, #tpu.memory_space<vmem>>, vector<4x324xf32>
    %c3_84 = arith.constant 3 : index
    %c0_85 = arith.constant 0 : index
    %c0_86 = arith.constant 0 : index
    %104 = vector.load %arg4[%c3_84, %c0_85, %c0_86] : memref<9x4x4xf32, #tpu.memory_space<vmem>>, vector<1x4x4xf32>
    %105 = vector.shape_cast %104 : vector<1x4x4xf32> to vector<4x4xf32>
    %cst_87 = arith.constant dense<0.000000e+00> : vector<4x324xf32>
    %106 = tpu.matmul %105, %103, %cst_87 {dimension_numbers = #tpu.dot_dimension_numbers<[1], [0], [0], [1], [0, 0, 1, 1], [], []>} : vector<4x4xf32>, vector<4x324xf32>, vector<4x324xf32> -> vector<4x324xf32>
    %107 = arith.addf %102, %106 : vector<4x324xf32>
    %c0_88 = arith.constant 0 : index
    %c19_89 = arith.constant 19 : index
    %108 = vector.load %arg7[%c0_88, %c19_89] : memref<4x362xf32, #tpu.memory_space<vmem>>, vector<4x324xf32>
    %c4_90 = arith.constant 4 : index
    %c0_91 = arith.constant 0 : index
    %c0_92 = arith.constant 0 : index
    %109 = vector.load %arg4[%c4_90, %c0_91, %c0_92] : memref<9x4x4xf32, #tpu.memory_space<vmem>>, vector<1x4x4xf32>
    %110 = vector.shape_cast %109 : vector<1x4x4xf32> to vector<4x4xf32>
    %cst_93 = arith.constant dense<0.000000e+00> : vector<4x324xf32>
    %111 = tpu.matmul %110, %108, %cst_93 {dimension_numbers = #tpu.dot_dimension_numbers<[1], [0], [0], [1], [0, 0, 1, 1], [], []>} : vector<4x4xf32>, vector<4x324xf32>, vector<4x324xf32> -> vector<4x324xf32>
    %112 = arith.addf %107, %111 : vector<4x324xf32>
    %c0_94 = arith.constant 0 : index
    %c20_95 = arith.constant 20 : index
    %113 = vector.load %arg7[%c0_94, %c20_95] : memref<4x362xf32, #tpu.memory_space<vmem>>, vector<4x324xf32>
    %c5_96 = arith.constant 5 : index
    %c0_97 = arith.constant 0 : index
    %c0_98 = arith.constant 0 : index
    %114 = vector.load %arg4[%c5_96, %c0_97, %c0_98] : memref<9x4x4xf32, #tpu.memory_space<vmem>>, vector<1x4x4xf32>
    %115 = vector.shape_cast %114 : vector<1x4x4xf32> to vector<4x4xf32>
    %cst_99 = arith.constant dense<0.000000e+00> : vector<4x324xf32>
    %116 = tpu.matmul %115, %113, %cst_99 {dimension_numbers = #tpu.dot_dimension_numbers<[1], [0], [0], [1], [0, 0, 1, 1], [], []>} : vector<4x4xf32>, vector<4x324xf32>, vector<4x324xf32> -> vector<4x324xf32>
    %117 = arith.addf %112, %116 : vector<4x324xf32>
    %c0_100 = arith.constant 0 : index
    %c36_101 = arith.constant 36 : index
    %118 = vector.load %arg7[%c0_100, %c36_101] : memref<4x362xf32, #tpu.memory_space<vmem>>, vector<4x324xf32>
    %c6_102 = arith.constant 6 : index
    %c0_103 = arith.constant 0 : index
    %c0_104 = arith.constant 0 : index
    %119 = vector.load %arg4[%c6_102, %c0_103, %c0_104] : memref<9x4x4xf32, #tpu.memory_space<vmem>>, vector<1x4x4xf32>
    %120 = vector.shape_cast %119 : vector<1x4x4xf32> to vector<4x4xf32>
    %cst_105 = arith.constant dense<0.000000e+00> : vector<4x324xf32>
    %121 = tpu.matmul %120, %118, %cst_105 {dimension_numbers = #tpu.dot_dimension_numbers<[1], [0], [0], [1], [0, 0, 1, 1], [], []>} : vector<4x4xf32>, vector<4x324xf32>, vector<4x324xf32> -> vector<4x324xf32>
    %122 = arith.addf %117, %121 : vector<4x324xf32>
    %c0_106 = arith.constant 0 : index
    %c37_107 = arith.constant 37 : index
    %123 = vector.load %arg7[%c0_106, %c37_107] : memref<4x362xf32, #tpu.memory_space<vmem>>, vector<4x324xf32>
    %c7_108 = arith.constant 7 : index
    %c0_109 = arith.constant 0 : index
    %c0_110 = arith.constant 0 : index
    %124 = vector.load %arg4[%c7_108, %c0_109, %c0_110] : memref<9x4x4xf32, #tpu.memory_space<vmem>>, vector<1x4x4xf32>
    %125 = vector.shape_cast %124 : vector<1x4x4xf32> to vector<4x4xf32>
    %cst_111 = arith.constant dense<0.000000e+00> : vector<4x324xf32>
    %126 = tpu.matmul %125, %123, %cst_111 {dimension_numbers = #tpu.dot_dimension_numbers<[1], [0], [0], [1], [0, 0, 1, 1], [], []>} : vector<4x4xf32>, vector<4x324xf32>, vector<4x324xf32> -> vector<4x324xf32>
    %127 = arith.addf %122, %126 : vector<4x324xf32>
    %c0_112 = arith.constant 0 : index
    %c38_113 = arith.constant 38 : index
    %128 = vector.load %arg7[%c0_112, %c38_113] : memref<4x362xf32, #tpu.memory_space<vmem>>, vector<4x324xf32>
    %c8_114 = arith.constant 8 : index
    %c0_115 = arith.constant 0 : index
    %c0_116 = arith.constant 0 : index
    %129 = vector.load %arg4[%c8_114, %c0_115, %c0_116] : memref<9x4x4xf32, #tpu.memory_space<vmem>>, vector<1x4x4xf32>
    %130 = vector.shape_cast %129 : vector<1x4x4xf32> to vector<4x4xf32>
    %cst_117 = arith.constant dense<0.000000e+00> : vector<4x324xf32>
    %131 = tpu.matmul %130, %128, %cst_117 {dimension_numbers = #tpu.dot_dimension_numbers<[1], [0], [0], [1], [0, 0, 1, 1], [], []>} : vector<4x4xf32>, vector<4x324xf32>, vector<4x324xf32> -> vector<4x324xf32>
    %132 = arith.addf %127, %131 : vector<4x324xf32>
    %133 = vector.broadcast %0 : vector<1x324xf32> to vector<4x324xf32>
    %134 = arith.mulf %132, %133 : vector<4x324xf32>
    %cst_118 = arith.constant dense<0.000000e+00> : vector<4xf32>
    %135 = vector.multi_reduction <add>, %134, %cst_118 [1] : vector<4x324xf32> to vector<4xf32>
    %136 = vector.shape_cast %135 : vector<4xf32> to vector<4x1xf32>
    %cst_119 = arith.constant 3.906250e-03 : f32
    %137 = vector.broadcast %cst_119 : f32 to vector<4x1xf32>
    %138 = arith.mulf %136, %137 : vector<4x1xf32>
    %139 = arith.mulf %132, %132 : vector<4x324xf32>
    %140 = vector.broadcast %0 : vector<1x324xf32> to vector<4x324xf32>
    %141 = arith.mulf %139, %140 : vector<4x324xf32>
    %cst_120 = arith.constant dense<0.000000e+00> : vector<4xf32>
    %142 = vector.multi_reduction <add>, %141, %cst_120 [1] : vector<4x324xf32> to vector<4xf32>
    %143 = vector.shape_cast %142 : vector<4xf32> to vector<4x1xf32>
    %cst_121 = arith.constant 3.906250e-03 : f32
    %144 = vector.broadcast %cst_121 : f32 to vector<4x1xf32>
    %145 = arith.mulf %143, %144 : vector<4x1xf32>
    %146 = arith.mulf %138, %138 : vector<4x1xf32>
    %147 = arith.subf %145, %146 : vector<4x1xf32>
    %cst_122 = arith.constant 0.000000e+00 : f32
    %148 = vector.broadcast %cst_122 : f32 to vector<4x1xf32>
    %149 = arith.maximumf %147, %148 : vector<4x1xf32>
    %150 = vector.broadcast %138 : vector<4x1xf32> to vector<4x324xf32>
    %151 = arith.subf %132, %150 : vector<4x324xf32>
    %cst_123 = arith.constant 9.99999974E-6 : f32
    %152 = vector.broadcast %cst_123 : f32 to vector<4x1xf32>
    %153 = arith.addf %149, %152 : vector<4x1xf32>
    %154 = math.rsqrt %153 : vector<4x1xf32>
    %155 = vector.broadcast %154 : vector<4x1xf32> to vector<4x324xf32>
    %156 = arith.mulf %151, %155 : vector<4x324xf32>
    %c0_124 = arith.constant 0 : index
    %c0_125 = arith.constant 0 : index
    %c19_126 = arith.constant 19 : index
    %157 = vector.load %arg1[%c0_124, %c0_125, %c19_126] : memref<1x4x362xf32, #tpu.memory_space<vmem>>, vector<1x4x324xf32>
    %158 = vector.shape_cast %157 : vector<1x4x324xf32> to vector<4x324xf32>
    %159 = arith.addf %158, %156 : vector<4x324xf32>
    %c0_127 = arith.constant 0 : index
    %c0_128 = arith.constant 0 : index
    %c0_129 = arith.constant 0 : index
    %160 = vector.load %arg6[%c0_127, %c0_128, %c0_129] : memref<1x4x324xf32, #tpu.memory_space<vmem>>, vector<1x4x324xf32>
    %161 = vector.shape_cast %160 : vector<1x4x324xf32> to vector<4x324xf32>
    %162 = vector.shape_cast %159 : vector<4x324xf32> to vector<1x4x324xf32>
    tpu.vector_store %arg6[%c0_127, %c0_128, %c0_129], %162 {strides = array<i32>} : memref<1x4x324xf32, #tpu.memory_space<vmem>>, vector<1x4x324xf32>,
    return
  }
  func.func @transform_0(%arg0: i32) -> (i32, i32, i32) {
    %c0_i32 = arith.constant 0 : i32
    %c0_i32_0 = arith.constant 0 : i32
    %c0_i32_1 = arith.constant 0 : i32
    return %arg0, %c0_i32, %c0_i32_0 : i32, i32, i32
  }
  func.func @transform_1(%arg0: i32) -> (i32, i32, i32) {
    %c0_i32 = arith.constant 0 : i32
    %c0_i32_0 = arith.constant 0 : i32
    %c0_i32_1 = arith.constant 0 : i32
    %c0_i32_2 = arith.constant 0 : i32
    return %c0_i32, %c0_i32_0, %c0_i32_1 : i32, i32, i32
  }
  func.func @transform_2(%arg0: i32) -> (i32, i32) {
    %c0_i32 = arith.constant 0 : i32
    %c0_i32_0 = arith.constant 0 : i32
    %c0_i32_1 = arith.constant 0 : i32
    return %c0_i32, %c0_i32_0 : i32, i32
  }
  func.func @transform_3(%arg0: i32) -> (i32, i32, i32) {
    %c0_i32 = arith.constant 0 : i32
    %c0_i32_0 = arith.constant 0 : i32
    %c0_i32_1 = arith.constant 0 : i32
    %c0_i32_2 = arith.constant 0 : i32
    return %c0_i32, %c0_i32_0, %c0_i32_1 : i32, i32, i32
  }
  func.func @transform_4(%arg0: i32) -> (i32, i32) {
    %c0_i32 = arith.constant 0 : i32
    %c0_i32_0 = arith.constant 0 : i32
    %c0_i32_1 = arith.constant 0 : i32
    return %c0_i32, %c0_i32_0 : i32, i32
  }
  func.func @transform_5(%arg0: i32) -> (i32, i32, i32) {
    %c0_i32 = arith.constant 0 : i32
    %c0_i32_0 = arith.constant 0 : i32
    %c0_i32_1 = arith.constant 0 : i32
    return %arg0, %c0_i32, %c0_i32_0 : i32, i32, i32
  }
}

</mosaic_0001>

<llo_original>
// kernel: tpu_custom_call.1
$region0: #{tpu_custom_call.1}
  #allocation0 [shape = 'u32[]', space=smem, size = 0x4, offset = 0x4, fixed_abs, tag = 'smem constant byte address 0x4 - core index']
  #allocation1 [shape = 'u32[144,128]{1,0:T(1,128)}', space=vmem, size = 0x12000, scoped, tag = 'internal scratch']
  #allocation2 [shape = 'f32[4,362]{1,0:T(4,128)}', space=vmem, size = 0x1800, scoped, tag = 'scratch operand']
  %s0 = inlined_call_operand.vmem [shape: f32[2,4,362], index: 0, kind: input, shape index: {}]
  %s1 = inlined_call_operand.vmem [shape: f32[9,4,4], index: 1, kind: input, shape index: {}]
  %s2 = inlined_call_operand.vmem [shape: f32[4,1], index: 2, kind: input, shape index: {}]
  %s3 = inlined_call_operand.vmem [shape: f32[9,4,4], index: 3, kind: input, shape index: {}]
  %s4 = inlined_call_operand.vmem [shape: f32[1,324], index: 4, kind: input, shape index: {}]
  %s5 = inlined_call_operand.hbm [shape: f32[2,4,324], index: 5, kind: output, shape index: {}]
  %s6 = sld [smem:[#allocation0]]
  $region53: #{tpu_custom_call.1} parent=0
    _
  %s8 = ssub.s32 1, %s6
  %s9 = scalar_select 0, %s8, %s6
  $region1: #{tpu_custom_call.1} parent=0
    #allocation3 [shape = 'u8[12288]{0}', space=vmem, size = 0x3000, scoped, tag = 'output window, operand 0']
    #allocation4 [shape = 's32[2]{0}', space=sflag, size = 0x8, scoped, tag = 'scoped memory for tpu_custom_call.1']
    %10 = vsyncpa [#allocation4], 0
    %s11 = scalar_lea.sflag [#allocation4], 1
    %12 = vsyncpa %s11, 0
    loop: start=0, step=1, limit=4
    $region2: #{tpu_custom_call.1} parent=1 // loop_pre_header
      _
    $region3: #{tpu_custom_call.1} parent=1 // loop_header
      %s14 = sphi 0, %s18
      %p15 = scmp.ge.s32.totalorder %s14, 4
      %s24 = sphi 0, %s26
      %s27 = sphi 0, %s24
      %s28 = sphi 0, %s27
      %s44 = sphi 0, %s28
      %s48 = sphi 0, %s48
      %s50 = sphi 0, %s48
      %s51 = sphi 0, %s50
      %s65 = sphi 0, %s51
      %s69 = sphi 0, %s69
      %s71 = sphi 0, %s69
      %s72 = sphi 0, %s71
      %s86 = sphi 0, %s72
      %s90 = sphi 0, %s90
      %s92 = sphi 0, %s90
      %s93 = sphi 0, %s92
      %s107 = sphi 0, %s93
      %s111 = sphi 0, %s111
      %s113 = sphi 0, %s111
      %s114 = sphi 0, %s113
      %s128 = sphi 0, %s114
      %s134 = sphi 0, %s136
      %s137 = sphi 0, %s134
      %s138 = sphi 0, %s137
      %s154 = sphi 0, %s138
    $region4: #{tpu_custom_call.1} parent=1 // loop_header_branch
      %17 = sbr.rel (%p15) target = $region8
    $region5: #{tpu_custom_call.1} parent=1 // loop_body
      %s19 = ssub.s32 %s14, 1
      %s20 = ssub.s32 %s14, 2
      %s21 = sadd.s32 %s14, 1
      %s22 = ssub.s32 %s14, %s21
      %p23 = scmp.eq.s32.totalorder %s22, 0
      %s25 = sadd.s32 %s24, 1
      %s26 = scalar_select %p23, %s24, %s25
      %p29 = pneg %p23
      %p30 = scmp.eq.s32.totalorder %s14, 1
      %p31 = por %p29, %p30
      %p32 = scmp.ne.s32.totalorder %s24, %s27
      %p33 = scmp.eq.s32.totalorder %s14, 0
      %p34 = por %p32, %p33
      %p35 = scmp.ne.s32.totalorder %s24, %s27
      %p36 = scmp.eq.s32.totalorder %s19, 1
      %p37 = por %p35, %p36
      %p38 = scmp.ne.s32.totalorder %s27, %s28
      %p39 = scmp.eq.s32.totalorder %s19, 0
      %p40 = por %p38, %p39
      %p41 = scmp.ne.s32.totalorder %s27, %s28
      %p42 = scmp.eq.s32.totalorder %s20, 1
      %p43 = por %p41, %p42
      %p45 = scmp.ne.s32.totalorder %s28, %s44
      %p46 = scmp.eq.s32.totalorder %s20, 0
      %p47 = por %p45, %p46
      %s49 = sadd.s32 %s48, 1
      %p52 = scmp.eq.s32.totalorder %s14, 1
      %p53 = scmp.ne.s32.totalorder %s48, %s50
      %p54 = scmp.eq.s32.totalorder %s14, 0
      %p55 = por %p53, %p54
      %p56 = scmp.ne.s32.totalorder %s48, %s50
      %p57 = scmp.eq.s32.totalorder %s19, 1
      %p58 = por %p56, %p57
      %p59 = scmp.ne.s32.totalorder %s50, %s51
      %p60 = scmp.eq.s32.totalorder %s19, 0
      %p61 = por %p59, %p60
      %p62 = scmp.ne.s32.totalorder %s50, %s51
      %p63 = scmp.eq.s32.totalorder %s20, 1
      %p64 = por %p62, %p63
      %p66 = scmp.ne.s32.totalorder %s51, %s65
      %p67 = scmp.eq.s32.totalorder %s20, 0
      %p68 = por %p66, %p67
      %s70 = sadd.s32 %s69, 1
      %p73 = scmp.eq.s32.totalorder %s14, 1
      %p74 = scmp.ne.s32.totalorder %s69, %s71
      %p75 = scmp.eq.s32.totalorder %s14, 0
      %p76 = por %p74, %p75
      %p77 = scmp.ne.s32.totalorder %s69, %s71
      %p78 = scmp.eq.s32.totalorder %s19, 1
      %p79 = por %p77, %p78
      %p80 = scmp.ne.s32.totalorder %s71, %s72
      %p81 = scmp.eq.s32.totalorder %s19, 0
      %p82 = por %p80, %p81
      %p83 = scmp.ne.s32.totalorder %s71, %s72
      %p84 = scmp.eq.s32.totalorder %s20, 1
      %p85 = por %p83, %p84
      %p87 = scmp.ne.s32.totalorder %s72, %s86
      %p88 = scmp.eq.s32.totalorder %s20, 0
      %p89 = por %p87, %p88
      %s91 = sadd.s32 %s90, 1
      %p94 = scmp.eq.s32.totalorder %s14, 1
      %p95 = scmp.ne.s32.totalorder %s90, %s92
      %p96 = scmp.eq.s32.totalorder %s14, 0
      %p97 = por %p95, %p96
      %p98 = scmp.ne.s32.totalorder %s90, %s92
      %p99 = scmp.eq.s32.totalorder %s19, 1
      %p100 = por %p98, %p99
      %p101 = scmp.ne.s32.totalorder %s92, %s93
      %p102 = scmp.eq.s32.totalorder %s19, 0
      %p103 = por %p101, %p102
      %p104 = scmp.ne.s32.totalorder %s92, %s93
      %p105 = scmp.eq.s32.totalorder %s20, 1
      %p106 = por %p104, %p105
      %p108 = scmp.ne.s32.totalorder %s93, %s107
      %p109 = scmp.eq.s32.totalorder %s20, 0
      %p110 = por %p108, %p109
      %s112 = sadd.s32 %s111, 1
      %p115 = scmp.eq.s32.totalorder %s14, 1
      %p116 = scmp.ne.s32.totalorder %s111, %s113
      %p117 = scmp.eq.s32.totalorder %s14, 0
      %p118 = por %p116, %p117
      %p119 = scmp.ne.s32.totalorder %s111, %s113
      %p120 = scmp.eq.s32.totalorder %s19, 1
      %p121 = por %p119, %p120
      %p122 = scmp.ne.s32.totalorder %s113, %s114
      %p123 = scmp.eq.s32.totalorder %s19, 0
      %p124 = por %p122, %p123
      %p125 = scmp.ne.s32.totalorder %s113, %s114
      %p126 = scmp.eq.s32.totalorder %s20, 1
      %p127 = por %p125, %p126
      %p129 = scmp.ne.s32.totalorder %s114, %s128
      %p130 = scmp.eq.s32.totalorder %s20, 0
      %p131 = por %p129, %p130
      %s132 = ssub.s32 %s14, %s21
      %p133 = scmp.eq.s32.totalorder %s132, 0
      %s135 = sadd.s32 %s134, 1
      %s136 = scalar_select %p133, %s134, %s135
      %p139 = pneg %p133
      %p140 = scmp.eq.s32.totalorder %s14, 1
      %p141 = por %p139, %p140
      %p142 = scmp.ne.s32.totalorder %s134, %s137
      %p143 = scmp.eq.s32.totalorder %s14, 0
      %p144 = por %p142, %p143
      %p145 = scmp.ne.s32.totalorder %s134, %s137
      %p146 = scmp.eq.s32.totalorder %s19, 1
      %p147 = por %p145, %p146
      %p148 = scmp.ne.s32.totalorder %s137, %s138
      %p149 = scmp.eq.s32.totalorder %s19, 0
      %p150 = por %p148, %p149
      %p151 = scmp.ne.s32.totalorder %s137, %s138
      %p152 = scmp.eq.s32.totalorder %s20, 1
      %p153 = por %p151, %p152
      %p155 = scmp.ne.s32.totalorder %s138, %s154
      %p156 = scmp.eq.s32.totalorder %s20, 0
      %p157 = por %p155, %p156
      %p158 = scmp.le.s32.totalorder 1, %s14
      %p159 = scmp.lt.s32.totalorder %s14, 3
      %p160 = pnand %p158, %p159
      %p161 = pneg %p160
      // Predicated region
      $region9: #{tpu_custom_call.1} parent=5 // pred_check
        _
      $region10: #{tpu_custom_call.1} parent=5 // pred_check_branch
        %163 = sbr.rel (%p160) target = $region12
      $region11: #{tpu_custom_call.1} parent=5 // pred_region
        %s164 = ssub.s32 %s14, 1
        // Predicated region
        $region13: #{tpu_custom_call.1} parent=11 // pred_check
          %p165 = pneg %p61
        $region14: #{tpu_custom_call.1} parent=11 // pred_check_branch
          %167 = sbr.rel (%p165) target = $region16
        $region15: #{tpu_custom_call.1} parent=11 // pred_region
          _
        $region16: #{tpu_custom_call.1} parent=11 // pred_fallthru
          _
        // Predicated region
        $region17: #{tpu_custom_call.1} parent=11 // pred_check
          %p168 = pneg %p82
        $region18: #{tpu_custom_call.1} parent=11 // pred_check_branch
          %170 = sbr.rel (%p168) target = $region20
        $region19: #{tpu_custom_call.1} parent=11 // pred_region
          _
        $region20: #{tpu_custom_call.1} parent=11 // pred_fallthru
          _
        // Predicated region
        $region21: #{tpu_custom_call.1} parent=11 // pred_check
          %p171 = pneg %p103
        $region22: #{tpu_custom_call.1} parent=11 // pred_check_branch
          %173 = sbr.rel (%p171) target = $region24
        $region23: #{tpu_custom_call.1} parent=11 // pred_region
          _
        $region24: #{tpu_custom_call.1} parent=11 // pred_fallthru
          _
        // Predicated region
        $region25: #{tpu_custom_call.1} parent=11 // pred_check
          %p174 = pneg %p124
        $region26: #{tpu_custom_call.1} parent=11 // pred_check_branch
          %176 = sbr.rel (%p174) target = $region28
        $region27: #{tpu_custom_call.1} parent=11 // pred_region
          _
        $region28: #{tpu_custom_call.1} parent=11 // pred_fallthru
          _
      $region12: #{tpu_custom_call.1} parent=5 // pred_fallthru
        _
      %p177 = scmp.lt.s32.totalorder %s14, 2
      // Predicated region
      $region29: #{tpu_custom_call.1} parent=5 // pred_check
        %p178 = pneg %p177
      $region30: #{tpu_custom_call.1} parent=5 // pred_check_branch
        %180 = sbr.rel (%p178) target = $region32
      $region31: #{tpu_custom_call.1} parent=5 // pred_region
        // Predicated region
        $region33: #{tpu_custom_call.1} parent=31 // pred_check
          %p181 = pneg %p34
        $region34: #{tpu_custom_call.1} parent=31 // pred_check_branch
          %183 = sbr.rel (%p181) target = $region36
        $region35: #{tpu_custom_call.1} parent=31 // pred_region
          %p184 = scmp.lt.s32.totalorder %s14, 1
          %s185 = scalar_select %p184, %s14, 1
          %s186 = smul.addr %s185, 3
          %s187 = smul.addr %s186, 4
          %s188 = scalar_lea.vmem %s0, %s187
        $region36: #{tpu_custom_call.1} parent=31 // pred_fallthru
          _
      $region32: #{tpu_custom_call.1} parent=5 // pred_fallthru
        _
      %p189 = scmp.le.s32.totalorder 1, %s14
      %p190 = scmp.lt.s32.totalorder %s14, 3
      %p191 = pnand %p189, %p190
      %p192 = pneg %p191
      // Predicated region
      $region37: #{tpu_custom_call.1} parent=5 // pred_check
        _
      $region38: #{tpu_custom_call.1} parent=5 // pred_check_branch
        %194 = sbr.rel (%p191) target = $region40
      $region39: #{tpu_custom_call.1} parent=5 // pred_region
        %s195 = ssub.s32 %s14, 1
        %p196 = scmp.lt.s32.totalorder %s19, 1
        %s197 = scalar_select %p196, %s19, 1
        %s198 = smul.addr %s197, 3
        %s199 = smul.addr %s198, 4
        %s200 = scalar_lea.vmem %s0, %s199
        %p201 = pneg %p40
        %p202 = pneg %p37
        %p203 = pneg %p61
        %p204 = pneg %p58
        %p205 = pneg %p82
        %p206 = pneg %p79
        %p207 = pneg %p103
        %p208 = pneg %p100
        %p209 = pneg %p124
        %p210 = pneg %p121
        %p211 = pneg %p150
        %p212 = pneg %p147
        %s213 = sand.u32 %s137, 1
        %s214 = scalar_lea.sflag [#allocation4], %s213
        %s215 = sand.u32 %s137, 1
        %s216 = smul.addr %s215, 12
        %s217 = scalar_lea.vmem [#allocation3], %s216
        %p218 = scmp.lt.s32.totalorder %s19, 1
        %s219 = scalar_select %p218, %s19, 1
        %s220 = smul.addr %s219, 3
        %s221 = smul.addr %s220, 4
        %s222 = scalar_lea.vmem %s0, %s221
        %v223 = vld [vmem:[%s4] sm:$0x7]
        %v224 = vld [vmem:[%s2] sm:$0xf]
        %v225 = vld [vmem:[%s222] sm:$0xff]
        %v226 = vld [vmem:[%s222 + $0x8] sm:$0xf]
        %v227 = vld [vmem:[%s1] sm:$0xf]
        %s228 = scalar_lea.vmem %s1, 4
        %v229 = vld [vmem:[%s228] sm:$0xf]
        %v232 = vcombine.high %v225, %v225
        %233 = vrot.lane.b32.xlu0 %v225, 127
        %v234 = vpop.permute.xlu0 %233
        %235 = vrot.lane.b32.xlu0 %v232, 127
        %v236 = vpop.permute.xlu0 %235
        %237 = vrot.lane.b32.xlu0 %v226, 127
        %v238 = vpop.permute.xlu0 %237
        %vm239 = vcmask 1039360
        %v240 = vsel %vm239, %v234, %v236
        %v241 = vsel %vm239, %v236, %v238
        %vm242 = vcmask 31744
        %v244 = vsel %vm242, %v229, 0
        %vm246 = vcmask 1043456
        %v247 = vsel %vm246, %v240, 0
        %v249 = vsel %vm246, %v241, 0
        %v251 = vsel %vm246, %v238, 0
        %253 = vmatprep.subr.mxu0 0.0
        %254 = vmatpush1.msra.mxu0 0.0
        %255 = vmatprep.subr.mxu0 0.0
        %256 = vmatpush1.msra.mxu0 0.0
        %257 = vmatprep.subr.mxu0 0.0
        %258 = vmatpush1.msra.mxu0 0.0
        %259 = vmatprep.subr.mxu0 0.0
        %260 = vmatpush1.msra.mxu0 0.0
        %261 = vmatprep.subr.mxu0 0.0
        %262 = vmatpush1.msra.mxu0 0.0
        %263 = vmatprep.subr.mxu0 0.0
        %264 = vmatpush1.msra.mxu0 0.0
        %265 = vmatprep.subr.mxu0 0.0
        %266 = vmatpush1.msra.mxu0 0.0
        %267 = vmatprep.subr.mxu0 0.0
        %268 = vmatpush1.msra.mxu0 0.0
        %269 = vmatprep.subr.mxu0 0.0
        %270 = vmatpush1.msra.mxu0 0.0
        %271 = vmatprep.subr.mxu0 0.0
        %272 = vmatpush1.msra.mxu0 0.0
        %273 = vmatprep.subr.mxu0 0.0
        %274 = vmatpush1.msra.mxu0 0.0
        %275 = vmatprep.subr.mxu0 0.0
        %276 = vmatpush1.msra.mxu0 0.0
        %277 = vmatprep.subr.mxu0 0.0
        %278 = vmatpush1.msra.mxu0 0.0
        %279 = vmatprep.subr.mxu0 0.0
        %280 = vmatpush1.msra.mxu0 0.0
        %281 = vmatprep.subr.mxu0 0.0
        %282 = vmatpush1.msra.mxu0 0.0
        %283 = vmatprep.subr.mxu0 %v249
        %284 = vmatpush1.msra.mxu0 %v247
        %285 = vmatprep.subr.mxu0 0.0
        %286 = vmatpush2.msra.mxu0 0.0
        %287 = vmatprep.subr.mxu0 0.0
        %288 = vmatpush2.msra.mxu0 0.0
        %289 = vmatprep.subr.mxu0 0.0
        %290 = vmatpush2.msra.mxu0 0.0
        %291 = vmatprep.subr.mxu0 0.0
        %292 = vmatpush2.msra.mxu0 0.0
        %293 = vmatprep.subr.mxu0 0.0
        %294 = vmatpush2.msra.mxu0 0.0
        %295 = vmatprep.subr.mxu0 0.0
        %296 = vmatpush2.msra.mxu0 0.0
        %297 = vmatprep.subr.mxu0 0.0
        %298 = vmatpush2.msra.mxu0 0.0
        %299 = vmatprep.subr.mxu0 0.0
        %300 = vmatpush2.msra.mxu0 0.0
        %301 = vmatprep.subr.mxu0 0.0
        %302 = vmatpush2.msra.mxu0 0.0
        %303 = vmatprep.subr.mxu0 0.0
        %304 = vmatpush2.msra.mxu0 0.0
        %305 = vmatprep.subr.mxu0 0.0
        %306 = vmatpush2.msra.mxu0 0.0
        %307 = vmatprep.subr.mxu0 0.0
        %308 = vmatpush2.msra.mxu0 0.0
        %309 = vmatprep.subr.mxu0 0.0
        %310 = vmatpush2.msra.mxu0 0.0
        %311 = vmatprep.subr.mxu0 0.0
        %312 = vmatpush2.msra.mxu0 0.0
        %313 = vmatprep.subr.mxu0 0.0
        %314 = vmatpush2.msra.mxu0 0.0
        %315 = vmatprep.subr.mxu0 0.0
        %316 = vmatpush2.msra.mxu0 0.0
        %317 = vmatprep.mubr.f32.mxu0 0.0
        %318 = vmatmul.mubr.f32.gmra.mxu0 %v244
        %v319 = vpop.f32.mrf.mxu0
        %v320 = vadd.f32 0.0, %v319
        %v321 = vpop.f32.mrf.mxu0
        %v322 = vadd.f32 0.0, %v321
        %323 = vdwg.mxu0
        %324 = vmatprep.subr.mxu0 0.0
        %325 = vmatpush1.msra.mxu0 0.0
        %326 = vmatprep.subr.mxu0 0.0
        %327 = vmatpush1.msra.mxu0 0.0
        %328 = vmatprep.subr.mxu0 0.0
        %329 = vmatpush1.msra.mxu0 0.0
        %330 = vmatprep.subr.mxu0 0.0
        %331 = vmatpush1.msra.mxu0 0.0
        %332 = vmatprep.subr.mxu0 0.0
        %333 = vmatpush1.msra.mxu0 0.0
        %334 = vmatprep.subr.mxu0 0.0
        %335 = vmatpush1.msra.mxu0 0.0
        %336 = vmatprep.subr.mxu0 0.0
        %337 = vmatpush1.msra.mxu0 0.0
        %338 = vmatprep.subr.mxu0 0.0
        %339 = vmatpush1.msra.mxu0 0.0
        %340 = vmatprep.subr.mxu0 0.0
        %341 = vmatpush1.msra.mxu0 0.0
        %342 = vmatprep.subr.mxu0 0.0
        %343 = vmatpush1.msra.mxu0 0.0
        %344 = vmatprep.subr.mxu0 0.0
        %345 = vmatpush1.msra.mxu0 0.0
        %346 = vmatprep.subr.mxu0 0.0
        %347 = vmatpush1.msra.mxu0 0.0
        %348 = vmatprep.subr.mxu0 0.0
        %349 = vmatpush1.msra.mxu0 0.0
        %350 = vmatprep.subr.mxu0 0.0
        %351 = vmatpush1.msra.mxu0 0.0
        %352 = vmatprep.subr.mxu0 0.0
        %353 = vmatpush1.msra.mxu0 0.0
        %354 = vmatprep.subr.mxu0 0.0
        %355 = vmatpush1.msra.mxu0 %v251
        %356 = vmatprep.subr.mxu0 0.0
        %357 = vmatpush2.msra.mxu0 0.0
        %358 = vmatprep.subr.mxu0 0.0
        %359 = vmatpush2.msra.mxu0 0.0
        %360 = vmatprep.subr.mxu0 0.0
        %361 = vmatpush2.msra.mxu0 0.0
        %362 = vmatprep.subr.mxu0 0.0
        %363 = vmatpush2.msra.mxu0 0.0
        %364 = vmatprep.subr.mxu0 0.0
        %365 = vmatpush2.msra.mxu0 0.0
        %366 = vmatprep.subr.mxu0 0.0
        %367 = vmatpush2.msra.mxu0 0.0
        %368 = vmatprep.subr.mxu0 0.0
        %369 = vmatpush2.msra.mxu0 0.0
        %370 = vmatprep.subr.mxu0 0.0
        %371 = vmatpush2.msra.mxu0 0.0
        %372 = vmatprep.subr.mxu0 0.0
        %373 = vmatpush2.msra.mxu0 0.0
        %374 = vmatprep.subr.mxu0 0.0
        %375 = vmatpush2.msra.mxu0 0.0
        %376 = vmatprep.subr.mxu0 0.0
        %377 = vmatpush2.msra.mxu0 0.0
        %378 = vmatprep.subr.mxu0 0.0
        %379 = vmatpush2.msra.mxu0 0.0
        %380 = vmatprep.subr.mxu0 0.0
        %381 = vmatpush2.msra.mxu0 0.0
        %382 = vmatprep.subr.mxu0 0.0
        %383 = vmatpush2.msra.mxu0 0.0
        %384 = vmatprep.subr.mxu0 0.0
        %385 = vmatpush2.msra.mxu0 0.0
        %386 = vmatprep.subr.mxu0 0.0
        %387 = vmatpush2.msra.mxu0 0.0
        %388 = vmatprep.mubr.f32.mxu0 0.0
        %389 = vmatmul.mubr.f32.gmra.mxu0 %v244
        %v390 = vpop.f32.mrf.mxu0
        %v391 = vadd.f32 0.0, %v390
        %v392 = vpop.f32.mrf.mxu0
        %393 = vdwg.mxu0
        %v395 = vsel %vm242, %v227, 0
        %v397 = vsel %vm246, %v225, 0
        %v399 = vsel %vm246, %v232, 0
        %v401 = vsel %vm246, %v226, 0
        %403 = vmatprep.subr.mxu0 0.0
        %404 = vmatpush1.msra.mxu0 0.0
        %405 = vmatprep.subr.mxu0 0.0
        %406 = vmatpush1.msra.mxu0 0.0
        %407 = vmatprep.subr.mxu0 0.0
        %408 = vmatpush1.msra.mxu0 0.0
        %409 = vmatprep.subr.mxu0 0.0
        %410 = vmatpush1.msra.mxu0 0.0
        %411 = vmatprep.subr.mxu0 0.0
        %412 = vmatpush1.msra.mxu0 0.0
        %413 = vmatprep.subr.mxu0 0.0
        %414 = vmatpush1.msra.mxu0 0.0
        %415 = vmatprep.subr.mxu0 0.0
        %416 = vmatpush1.msra.mxu0 0.0
        %417 = vmatprep.subr.mxu0 0.0
        %418 = vmatpush1.msra.mxu0 0.0
        %419 = vmatprep.subr.mxu0 0.0
        %420 = vmatpush1.msra.mxu0 0.0
        %421 = vmatprep.subr.mxu0 0.0
        %422 = vmatpush1.msra.mxu0 0.0
        %423 = vmatprep.subr.mxu0 0.0
        %424 = vmatpush1.msra.mxu0 0.0
        %425 = vmatprep.subr.mxu0 0.0
        %426 = vmatpush1.msra.mxu0 0.0
        %427 = vmatprep.subr.mxu0 0.0
        %428 = vmatpush1.msra.mxu0 0.0
        %429 = vmatprep.subr.mxu0 0.0
        %430 = vmatpush1.msra.mxu0 0.0
        %431 = vmatprep.subr.mxu0 0.0
        %432 = vmatpush1.msra.mxu0 0.0
        %433 = vmatprep.subr.mxu0 %v399
        %434 = vmatpush1.msra.mxu0 %v397
        %435 = vmatprep.subr.mxu0 0.0
        %436 = vmatpush2.msra.mxu0 0.0
        %437 = vmatprep.subr.mxu0 0.0
        %438 = vmatpush2.msra.mxu0 0.0
        %439 = vmatprep.subr.mxu0 0.0
        %440 = vmatpush2.msra.mxu0 0.0
        %441 = vmatprep.subr.mxu0 0.0
        %442 = vmatpush2.msra.mxu0 0.0
        %443 = vmatprep.subr.mxu0 0.0
        %444 = vmatpush2.msra.mxu0 0.0
        %445 = vmatprep.subr.mxu0 0.0
        %446 = vmatpush2.msra.mxu0 0.0
        %447 = vmatprep.subr.mxu0 0.0
        %448 = vmatpush2.msra.mxu0 0.0
        %449 = vmatprep.subr.mxu0 0.0
        %450 = vmatpush2.msra.mxu0 0.0
        %451 = vmatprep.subr.mxu0 0.0
        %452 = vmatpush2.msra.mxu0 0.0
        %453 = vmatprep.subr.mxu0 0.0
        %454 = vmatpush2.msra.mxu0 0.0
        %455 = vmatprep.subr.mxu0 0.0
        %456 = vmatpush2.msra.mxu0 0.0
        %457 = vmatprep.subr.mxu0 0.0
        %458 = vmatpush2.msra.mxu0 0.0
        %459 = vmatprep.subr.mxu0 0.0
        %460 = vmatpush2.msra.mxu0 0.0
        %461 = vmatprep.subr.mxu0 0.0
        %462 = vmatpush2.msra.mxu0 0.0
        %463 = vmatprep.subr.mxu0 0.0
        %464 = vmatpush2.msra.mxu0 0.0
        %465 = vmatprep.subr.mxu0 0.0
        %466 = vmatpush2.msra.mxu0 0.0
        %467 = vmatprep.mubr.f32.mxu0 0.0
        %468 = vmatmul.mubr.f32.gmra.mxu0 %v395
        %v469 = vpop.f32.mrf.mxu0
        %v470 = vadd.f32 %v320, %v469
        %v471 = vpop.f32.mrf.mxu0
        %v472 = vadd.f32 %v322, %v471
        %473 = vdwg.mxu0
        %474 = vmatprep.subr.mxu0 0.0
        %475 = vmatpush1.msra.mxu0 0.0
        %476 = vmatprep.subr.mxu0 0.0
        %477 = vmatpush1.msra.mxu0 0.0
        %478 = vmatprep.subr.mxu0 0.0
        %479 = vmatpush1.msra.mxu0 0.0
        %480 = vmatprep.subr.mxu0 0.0
        %481 = vmatpush1.msra.mxu0 0.0
        %482 = vmatprep.subr.mxu0 0.0
        %483 = vmatpush1.msra.mxu0 0.0
        %484 = vmatprep.subr.mxu0 0.0
        %485 = vmatpush1.msra.mxu0 0.0
        %486 = vmatprep.subr.mxu0 0.0
        %487 = vmatpush1.msra.mxu0 0.0
        %488 = vmatprep.subr.mxu0 0.0
        %489 = vmatpush1.msra.mxu0 0.0
        %490 = vmatprep.subr.mxu0 0.0
        %491 = vmatpush1.msra.mxu0 0.0
        %492 = vmatprep.subr.mxu0 0.0
        %493 = vmatpush1.msra.mxu0 0.0
        %494 = vmatprep.subr.mxu0 0.0
        %495 = vmatpush1.msra.mxu0 0.0
        %496 = vmatprep.subr.mxu0 0.0
        %497 = vmatpush1.msra.mxu0 0.0
        %498 = vmatprep.subr.mxu0 0.0
        %499 = vmatpush1.msra.mxu0 0.0
        %500 = vmatprep.subr.mxu0 0.0
        %501 = vmatpush1.msra.mxu0 0.0
        %502 = vmatprep.subr.mxu0 0.0
        %503 = vmatpush1.msra.mxu0 0.0
        %504 = vmatprep.subr.mxu0 0.0
        %505 = vmatpush1.msra.mxu0 %v401
        %506 = vmatprep.subr.mxu0 0.0
        %507 = vmatpush2.msra.mxu0 0.0
        %508 = vmatprep.subr.mxu0 0.0
        %509 = vmatpush2.msra.mxu0 0.0
        %510 = vmatprep.subr.mxu0 0.0
        %511 = vmatpush2.msra.mxu0 0.0
        %512 = vmatprep.subr.mxu0 0.0
        %513 = vmatpush2.msra.mxu0 0.0
        %514 = vmatprep.subr.mxu0 0.0
        %515 = vmatpush2.msra.mxu0 0.0
        %516 = vmatprep.subr.mxu0 0.0
        %517 = vmatpush2.msra.mxu0 0.0
        %518 = vmatprep.subr.mxu0 0.0
        %519 = vmatpush2.msra.mxu0 0.0
        %520 = vmatprep.subr.mxu0 0.0
        %521 = vmatpush2.msra.mxu0 0.0
        %522 = vmatprep.subr.mxu0 0.0
        %523 = vmatpush2.msra.mxu0 0.0
        %524 = vmatprep.subr.mxu0 0.0
        %525 = vmatpush2.msra.mxu0 0.0
        %526 = vmatprep.subr.mxu0 0.0
        %527 = vmatpush2.msra.mxu0 0.0
        %528 = vmatprep.subr.mxu0 0.0
        %529 = vmatpush2.msra.mxu0 0.0
        %530 = vmatprep.subr.mxu0 0.0
        %531 = vmatpush2.msra.mxu0 0.0
        %532 = vmatprep.subr.mxu0 0.0
        %533 = vmatpush2.msra.mxu0 0.0
        %534 = vmatprep.subr.mxu0 0.0
        %535 = vmatpush2.msra.mxu0 0.0
        %536 = vmatprep.subr.mxu0 0.0
        %537 = vmatpush2.msra.mxu0 0.0
        %538 = vmatprep.mubr.f32.mxu0 0.0
        %539 = vmatmul.mubr.f32.gmra.mxu0 %v395
        %v540 = vpop.f32.mrf.mxu0
        %v541 = vadd.f32 %v391, %v540
        %v542 = vpop.f32.mrf.mxu0
        %543 = vdwg.mxu0
        %v544 = vld [vmem:[%s222] sm:$0xff]
        %v545 = vld [vmem:[%s222 + $0x8] sm:$0xf]
        %s546 = scalar_lea.vmem %s1, 8
        %v547 = vld [vmem:[%s546] sm:$0xf]
        %v550 = vcombine.high %v544, %v544
        %551 = vrot.lane.b32.xlu0 %v544, 126
        %v552 = vpop.permute.xlu0 %551
        %553 = vrot.lane.b32.xlu0 %v550, 126
        %v554 = vpop.permute.xlu0 %553
        %555 = vrot.lane.b32.xlu0 %v545, 126
        %v556 = vpop.permute.xlu0 %555
        %vm557 = vcmask 1031168
        %v558 = vsel %vm557, %v552, %v554
        %v559 = vsel %vm557, %v554, %v556
        %v561 = vsel %vm242, %v547, 0
        %v563 = vsel %vm246, %v558, 0
        %v565 = vsel %vm246, %v559, 0
        %v567 = vsel %vm246, %v556, 0
        %569 = vmatprep.subr.mxu0 0.0
        %570 = vmatpush1.msra.mxu0 0.0
        %571 = vmatprep.subr.mxu0 0.0
        %572 = vmatpush1.msra.mxu0 0.0
        %573 = vmatprep.subr.mxu0 0.0
        %574 = vmatpush1.msra.mxu0 0.0
        %575 = vmatprep.subr.mxu0 0.0
        %576 = vmatpush1.msra.mxu0 0.0
        %577 = vmatprep.subr.mxu0 0.0
        %578 = vmatpush1.msra.mxu0 0.0
        %579 = vmatprep.subr.mxu0 0.0
        %580 = vmatpush1.msra.mxu0 0.0
        %581 = vmatprep.subr.mxu0 0.0
        %582 = vmatpush1.msra.mxu0 0.0
        %583 = vmatprep.subr.mxu0 0.0
        %584 = vmatpush1.msra.mxu0 0.0
        %585 = vmatprep.subr.mxu0 0.0
        %586 = vmatpush1.msra.mxu0 0.0
        %587 = vmatprep.subr.mxu0 0.0
        %588 = vmatpush1.msra.mxu0 0.0
        %589 = vmatprep.subr.mxu0 0.0
        %590 = vmatpush1.msra.mxu0 0.0
        %591 = vmatprep.subr.mxu0 0.0
        %592 = vmatpush1.msra.mxu0 0.0
        %593 = vmatprep.subr.mxu0 0.0
        %594 = vmatpush1.msra.mxu0 0.0
        %595 = vmatprep.subr.mxu0 0.0
        %596 = vmatpush1.msra.mxu0 0.0
        %597 = vmatprep.subr.mxu0 0.0
        %598 = vmatpush1.msra.mxu0 0.0
        %599 = vmatprep.subr.mxu0 %v565
        %600 = vmatpush1.msra.mxu0 %v563
        %601 = vmatprep.subr.mxu0 0.0
        %602 = vmatpush2.msra.mxu0 0.0
        %603 = vmatprep.subr.mxu0 0.0
        %604 = vmatpush2.msra.mxu0 0.0
        %605 = vmatprep.subr.mxu0 0.0
        %606 = vmatpush2.msra.mxu0 0.0
        %607 = vmatprep.subr.mxu0 0.0
        %608 = vmatpush2.msra.mxu0 0.0
        %609 = vmatprep.subr.mxu0 0.0
        %610 = vmatpush2.msra.mxu0 0.0
        %611 = vmatprep.subr.mxu0 0.0
        %612 = vmatpush2.msra.mxu0 0.0
        %613 = vmatprep.subr.mxu0 0.0
        %614 = vmatpush2.msra.mxu0 0.0
        %615 = vmatprep.subr.mxu0 0.0
        %616 = vmatpush2.msra.mxu0 0.0
        %617 = vmatprep.subr.mxu0 0.0
        %618 = vmatpush2.msra.mxu0 0.0
        %619 = vmatprep.subr.mxu0 0.0
        %620 = vmatpush2.msra.mxu0 0.0
        %621 = vmatprep.subr.mxu0 0.0
        %622 = vmatpush2.msra.mxu0 0.0
        %623 = vmatprep.subr.mxu0 0.0
        %624 = vmatpush2.msra.mxu0 0.0
        %625 = vmatprep.subr.mxu0 0.0
        %626 = vmatpush2.msra.mxu0 0.0
        %627 = vmatprep.subr.mxu0 0.0
        %628 = vmatpush2.msra.mxu0 0.0
        %629 = vmatprep.subr.mxu0 0.0
        %630 = vmatpush2.msra.mxu0 0.0
        %631 = vmatprep.subr.mxu0 0.0
        %632 = vmatpush2.msra.mxu0 0.0
        %633 = vmatprep.mubr.f32.mxu0 0.0
        %634 = vmatmul.mubr.f32.gmra.mxu0 %v561
        %v635 = vpop.f32.mrf.mxu0
        %v636 = vadd.f32 0.0, %v635
        %v637 = vpop.f32.mrf.mxu0
        %v638 = vadd.f32 0.0, %v637
        %639 = vdwg.mxu0
        %640 = vmatprep.subr.mxu0 0.0
        %641 = vmatpush1.msra.mxu0 0.0
        %642 = vmatprep.subr.mxu0 0.0
        %643 = vmatpush1.msra.mxu0 0.0
        %644 = vmatprep.subr.mxu0 0.0
        %645 = vmatpush1.msra.mxu0 0.0
        %646 = vmatprep.subr.mxu0 0.0
        %647 = vmatpush1.msra.mxu0 0.0
        %648 = vmatprep.subr.mxu0 0.0
        %649 = vmatpush1.msra.mxu0 0.0
        %650 = vmatprep.subr.mxu0 0.0
        %651 = vmatpush1.msra.mxu0 0.0
        %652 = vmatprep.subr.mxu0 0.0
        %653 = vmatpush1.msra.mxu0 0.0
        %654 = vmatprep.subr.mxu0 0.0
        %655 = vmatpush1.msra.mxu0 0.0
        %656 = vmatprep.subr.mxu0 0.0
        %657 = vmatpush1.msra.mxu0 0.0
        %658 = vmatprep.subr.mxu0 0.0
        %659 = vmatpush1.msra.mxu0 0.0
        %660 = vmatprep.subr.mxu0 0.0
        %661 = vmatpush1.msra.mxu0 0.0
        %662 = vmatprep.subr.mxu0 0.0
        %663 = vmatpush1.msra.mxu0 0.0
        %664 = vmatprep.subr.mxu0 0.0
        %665 = vmatpush1.msra.mxu0 0.0
        %666 = vmatprep.subr.mxu0 0.0
        %667 = vmatpush1.msra.mxu0 0.0
        %668 = vmatprep.subr.mxu0 0.0
        %669 = vmatpush1.msra.mxu0 0.0
        %670 = vmatprep.subr.mxu0 0.0
        %671 = vmatpush1.msra.mxu0 %v567
        %672 = vmatprep.subr.mxu0 0.0
        %673 = vmatpush2.msra.mxu0 0.0
        %674 = vmatprep.subr.mxu0 0.0
        %675 = vmatpush2.msra.mxu0 0.0
        %676 = vmatprep.subr.mxu0 0.0
        %677 = vmatpush2.msra.mxu0 0.0
        %678 = vmatprep.subr.mxu0 0.0
        %679 = vmatpush2.msra.mxu0 0.0
        %680 = vmatprep.subr.mxu0 0.0
        %681 = vmatpush2.msra.mxu0 0.0
        %682 = vmatprep.subr.mxu0 0.0
        %683 = vmatpush2.msra.mxu0 0.0
        %684 = vmatprep.subr.mxu0 0.0
        %685 = vmatpush2.msra.mxu0 0.0
        %686 = vmatprep.subr.mxu0 0.0
        %687 = vmatpush2.msra.mxu0 0.0
        %688 = vmatprep.subr.mxu0 0.0
        %689 = vmatpush2.msra.mxu0 0.0
        %690 = vmatprep.subr.mxu0 0.0
        %691 = vmatpush2.msra.mxu0 0.0
        %692 = vmatprep.subr.mxu0 0.0
        %693 = vmatpush2.msra.mxu0 0.0
        %694 = vmatprep.subr.mxu0 0.0
        %695 = vmatpush2.msra.mxu0 0.0
        %696 = vmatprep.subr.mxu0 0.0
        %697 = vmatpush2.msra.mxu0 0.0
        %698 = vmatprep.subr.mxu0 0.0
        %699 = vmatpush2.msra.mxu0 0.0
        %700 = vmatprep.subr.mxu0 0.0
        %701 = vmatpush2.msra.mxu0 0.0
        %702 = vmatprep.subr.mxu0 0.0
        %703 = vmatpush2.msra.mxu0 0.0
        %704 = vmatprep.mubr.f32.mxu0 0.0
        %705 = vmatmul.mubr.f32.gmra.mxu0 %v561
        %v706 = vpop.f32.mrf.mxu0
        %v707 = vadd.f32 0.0, %v706
        %v708 = vpop.f32.mrf.mxu0
        %709 = vdwg.mxu0
        %v710 = vadd.f32 %v470, %v636
        %v711 = vadd.f32 %v472, %v638
        %v712 = vadd.f32 %v541, %v707
        %v713 = vld [vmem:[%s222] sm:$0xff]
        %v714 = vld [vmem:[%s222 + $0x8] sm:$0xf]
        %s715 = scalar_lea.vmem %s1, 12
        %v716 = vld [vmem:[%s715] sm:$0xf]
        %v719 = vcombine.high %v713, %v713
        %720 = vrot.lane.b32.xlu0 %v713, 110
        %v721 = vpop.permute.xlu0 %720
        %722 = vrot.lane.b32.xlu0 %v719, 110
        %v723 = vpop.permute.xlu0 %722
        %724 = vrot.lane.b32.xlu0 %v714, 110
        %v725 = vpop.permute.xlu0 %724
        %vm726 = vcmask 900096
        %v727 = vsel %vm726, %v721, %v723
        %v728 = vsel %vm726, %v723, %v725
        %v730 = vsel %vm242, %v716, 0
        %v732 = vsel %vm246, %v727, 0
        %v734 = vsel %vm246, %v728, 0
        %v736 = vsel %vm246, %v725, 0
        %738 = vmatprep.subr.mxu0 0.0
        %739 = vmatpush1.msra.mxu0 0.0
        %740 = vmatprep.subr.mxu0 0.0
        %741 = vmatpush1.msra.mxu0 0.0
        %742 = vmatprep.subr.mxu0 0.0
        %743 = vmatpush1.msra.mxu0 0.0
        %744 = vmatprep.subr.mxu0 0.0
        %745 = vmatpush1.msra.mxu0 0.0
        %746 = vmatprep.subr.mxu0 0.0
        %747 = vmatpush1.msra.mxu0 0.0
        %748 = vmatprep.subr.mxu0 0.0
        %749 = vmatpush1.msra.mxu0 0.0
        %750 = vmatprep.subr.mxu0 0.0
        %751 = vmatpush1.msra.mxu0 0.0
        %752 = vmatprep.subr.mxu0 0.0
        %753 = vmatpush1.msra.mxu0 0.0
        %754 = vmatprep.subr.mxu0 0.0
        %755 = vmatpush1.msra.mxu0 0.0
        %756 = vmatprep.subr.mxu0 0.0
        %757 = vmatpush1.msra.mxu0 0.0
        %758 = vmatprep.subr.mxu0 0.0
        %759 = vmatpush1.msra.mxu0 0.0
        %760 = vmatprep.subr.mxu0 0.0
        %761 = vmatpush1.msra.mxu0 0.0
        %762 = vmatprep.subr.mxu0 0.0
        %763 = vmatpush1.msra.mxu0 0.0
        %764 = vmatprep.subr.mxu0 0.0
        %765 = vmatpush1.msra.mxu0 0.0
        %766 = vmatprep.subr.mxu0 0.0
        %767 = vmatpush1.msra.mxu0 0.0
        %768 = vmatprep.subr.mxu0 %v734
        %769 = vmatpush1.msra.mxu0 %v732
        %770 = vmatprep.subr.mxu0 0.0
        %771 = vmatpush2.msra.mxu0 0.0
        %772 = vmatprep.subr.mxu0 0.0
        %773 = vmatpush2.msra.mxu0 0.0
        %774 = vmatprep.subr.mxu0 0.0
        %775 = vmatpush2.msra.mxu0 0.0
        %776 = vmatprep.subr.mxu0 0.0
        %777 = vmatpush2.msra.mxu0 0.0
        %778 = vmatprep.subr.mxu0 0.0
        %779 = vmatpush2.msra.mxu0 0.0
        %780 = vmatprep.subr.mxu0 0.0
        %781 = vmatpush2.msra.mxu0 0.0
        %782 = vmatprep.subr.mxu0 0.0
        %783 = vmatpush2.msra.mxu0 0.0
        %784 = vmatprep.subr.mxu0 0.0
        %785 = vmatpush2.msra.mxu0 0.0
        %786 = vmatprep.subr.mxu0 0.0
        %787 = vmatpush2.msra.mxu0 0.0
        %788 = vmatprep.subr.mxu0 0.0
        %789 = vmatpush2.msra.mxu0 0.0
        %790 = vmatprep.subr.mxu0 0.0
        %791 = vmatpush2.msra.mxu0 0.0
        %792 = vmatprep.subr.mxu0 0.0
        %793 = vmatpush2.msra.mxu0 0.0
        %794 = vmatprep.subr.mxu0 0.0
        %795 = vmatpush2.msra.mxu0 0.0
        %796 = vmatprep.subr.mxu0 0.0
        %797 = vmatpush2.msra.mxu0 0.0
        %798 = vmatprep.subr.mxu0 0.0
        %799 = vmatpush2.msra.mxu0 0.0
        %800 = vmatprep.subr.mxu0 0.0
        %801 = vmatpush2.msra.mxu0 0.0
        %802 = vmatprep.mubr.f32.mxu0 0.0
        %803 = vmatmul.mubr.f32.gmra.mxu0 %v730
        %v804 = vpop.f32.mrf.mxu0
        %v805 = vadd.f32 0.0, %v804
        %v806 = vpop.f32.mrf.mxu0
        %v807 = vadd.f32 0.0, %v806
        %808 = vdwg.mxu0
        %809 = vmatprep.subr.mxu0 0.0
        %810 = vmatpush1.msra.mxu0 0.0
        %811 = vmatprep.subr.mxu0 0.0
        %812 = vmatpush1.msra.mxu0 0.0
        %813 = vmatprep.subr.mxu0 0.0
        %814 = vmatpush1.msra.mxu0 0.0
        %815 = vmatprep.subr.mxu0 0.0
        %816 = vmatpush1.msra.mxu0 0.0
        %817 = vmatprep.subr.mxu0 0.0
        %818 = vmatpush1.msra.mxu0 0.0
        %819 = vmatprep.subr.mxu0 0.0
        %820 = vmatpush1.msra.mxu0 0.0
        %821 = vmatprep.subr.mxu0 0.0
        %822 = vmatpush1.msra.mxu0 0.0
        %823 = vmatprep.subr.mxu0 0.0
        %824 = vmatpush1.msra.mxu0 0.0
        %825 = vmatprep.subr.mxu0 0.0
        %826 = vmatpush1.msra.mxu0 0.0
        %827 = vmatprep.subr.mxu0 0.0
        %828 = vmatpush1.msra.mxu0 0.0
        %829 = vmatprep.subr.mxu0 0.0
        %830 = vmatpush1.msra.mxu0 0.0
        %831 = vmatprep.subr.mxu0 0.0
        %832 = vmatpush1.msra.mxu0 0.0
        %833 = vmatprep.subr.mxu0 0.0
        %834 = vmatpush1.msra.mxu0 0.0
        %835 = vmatprep.subr.mxu0 0.0
        %836 = vmatpush1.msra.mxu0 0.0
        %837 = vmatprep.subr.mxu0 0.0
        %838 = vmatpush1.msra.mxu0 0.0
        %839 = vmatprep.subr.mxu0 0.0
        %840 = vmatpush1.msra.mxu0 %v736
        %841 = vmatprep.subr.mxu0 0.0
        %842 = vmatpush2.msra.mxu0 0.0
        %843 = vmatprep.subr.mxu0 0.0
        %844 = vmatpush2.msra.mxu0 0.0
        %845 = vmatprep.subr.mxu0 0.0
        %846 = vmatpush2.msra.mxu0 0.0
        %847 = vmatprep.subr.mxu0 0.0
        %848 = vmatpush2.msra.mxu0 0.0
        %849 = vmatprep.subr.mxu0 0.0
        %850 = vmatpush2.msra.mxu0 0.0
        %851 = vmatprep.subr.mxu0 0.0
        %852 = vmatpush2.msra.mxu0 0.0
        %853 = vmatprep.subr.mxu0 0.0
        %854 = vmatpush2.msra.mxu0 0.0
        %855 = vmatprep.subr.mxu0 0.0
        %856 = vmatpush2.msra.mxu0 0.0
        %857 = vmatprep.subr.mxu0 0.0
        %858 = vmatpush2.msra.mxu0 0.0
        %859 = vmatprep.subr.mxu0 0.0
        %860 = vmatpush2.msra.mxu0 0.0
        %861 = vmatprep.subr.mxu0 0.0
        %862 = vmatpush2.msra.mxu0 0.0
        %863 = vmatprep.subr.mxu0 0.0
        %864 = vmatpush2.msra.mxu0 0.0
        %865 = vmatprep.subr.mxu0 0.0
        %866 = vmatpush2.msra.mxu0 0.0
        %867 = vmatprep.subr.mxu0 0.0
        %868 = vmatpush2.msra.mxu0 0.0
        %869 = vmatprep.subr.mxu0 0.0
        %870 = vmatpush2.msra.mxu0 0.0
        %871 = vmatprep.subr.mxu0 0.0
        %872 = vmatpush2.msra.mxu0 0.0
        %873 = vmatprep.mubr.f32.mxu0 0.0
        %874 = vmatmul.mubr.f32.gmra.mxu0 %v730
        %v875 = vpop.f32.mrf.mxu0
        %v876 = vadd.f32 0.0, %v875
        %v877 = vpop.f32.mrf.mxu0
        %878 = vdwg.mxu0
        %v879 = vadd.f32 %v710, %v805
        %v880 = vadd.f32 %v711, %v807
        %v881 = vadd.f32 %v712, %v876
        %v882 = vld [vmem:[%s222] sm:$0xff]
        %v883 = vld [vmem:[%s222 + $0x8] sm:$0xf]
        %s884 = scalar_lea.vmem %s1, 16
        %v885 = vld [vmem:[%s884] sm:$0xf]
        %v888 = vcombine.high %v882, %v882
        %889 = vrot.lane.b32.xlu0 %v882, 109
        %v890 = vpop.permute.xlu0 %889
        %891 = vrot.lane.b32.xlu0 %v888, 109
        %v892 = vpop.permute.xlu0 %891
        %893 = vrot.lane.b32.xlu0 %v883, 109
        %v894 = vpop.permute.xlu0 %893
        %vm895 = vcmask 891904
        %v896 = vsel %vm895, %v890, %v892
        %v897 = vsel %vm895, %v892, %v894
        %v899 = vsel %vm242, %v885, 0
        %v901 = vsel %vm246, %v896, 0
        %v903 = vsel %vm246, %v897, 0
        %v905 = vsel %vm246, %v894, 0
        %907 = vmatprep.subr.mxu0 0.0
        %908 = vmatpush1.msra.mxu0 0.0
        %909 = vmatprep.subr.mxu0 0.0
        %910 = vmatpush1.msra.mxu0 0.0
        %911 = vmatprep.subr.mxu0 0.0
        %912 = vmatpush1.msra.mxu0 0.0
        %913 = vmatprep.subr.mxu0 0.0
        %914 = vmatpush1.msra.mxu0 0.0
        %915 = vmatprep.subr.mxu0 0.0
        %916 = vmatpush1.msra.mxu0 0.0
        %917 = vmatprep.subr.mxu0 0.0
        %918 = vmatpush1.msra.mxu0 0.0
        %919 = vmatprep.subr.mxu0 0.0
        %920 = vmatpush1.msra.mxu0 0.0
        %921 = vmatprep.subr.mxu0 0.0
        %922 = vmatpush1.msra.mxu0 0.0
        %923 = vmatprep.subr.mxu0 0.0
        %924 = vmatpush1.msra.mxu0 0.0
        %925 = vmatprep.subr.mxu0 0.0
        %926 = vmatpush1.msra.mxu0 0.0
        %927 = vmatprep.subr.mxu0 0.0
        %928 = vmatpush1.msra.mxu0 0.0
        %929 = vmatprep.subr.mxu0 0.0
        %930 = vmatpush1.msra.mxu0 0.0
        %931 = vmatprep.subr.mxu0 0.0
        %932 = vmatpush1.msra.mxu0 0.0
        %933 = vmatprep.subr.mxu0 0.0
        %934 = vmatpush1.msra.mxu0 0.0
        %935 = vmatprep.subr.mxu0 0.0
        %936 = vmatpush1.msra.mxu0 0.0
        %937 = vmatprep.subr.mxu0 %v903
        %938 = vmatpush1.msra.mxu0 %v901
        %939 = vmatprep.subr.mxu0 0.0
        %940 = vmatpush2.msra.mxu0 0.0
        %941 = vmatprep.subr.mxu0 0.0
        %942 = vmatpush2.msra.mxu0 0.0
        %943 = vmatprep.subr.mxu0 0.0
        %944 = vmatpush2.msra.mxu0 0.0
        %945 = vmatprep.subr.mxu0 0.0
        %946 = vmatpush2.msra.mxu0 0.0
        %947 = vmatprep.subr.mxu0 0.0
        %948 = vmatpush2.msra.mxu0 0.0
        %949 = vmatprep.subr.mxu0 0.0
        %950 = vmatpush2.msra.mxu0 0.0
        %951 = vmatprep.subr.mxu0 0.0
        %952 = vmatpush2.msra.mxu0 0.0
        %953 = vmatprep.subr.mxu0 0.0
        %954 = vmatpush2.msra.mxu0 0.0
        %955 = vmatprep.subr.mxu0 0.0
        %956 = vmatpush2.msra.mxu0 0.0
        %957 = vmatprep.subr.mxu0 0.0
        %958 = vmatpush2.msra.mxu0 0.0
        %959 = vmatprep.subr.mxu0 0.0
        %960 = vmatpush2.msra.mxu0 0.0
        %961 = vmatprep.subr.mxu0 0.0
        %962 = vmatpush2.msra.mxu0 0.0
        %963 = vmatprep.subr.mxu0 0.0
        %964 = vmatpush2.msra.mxu0 0.0
        %965 = vmatprep.subr.mxu0 0.0
        %966 = vmatpush2.msra.mxu0 0.0
        %967 = vmatprep.subr.mxu0 0.0
        %968 = vmatpush2.msra.mxu0 0.0
        %969 = vmatprep.subr.mxu0 0.0
        %970 = vmatpush2.msra.mxu0 0.0
        %971 = vmatprep.mubr.f32.mxu0 0.0
        %972 = vmatmul.mubr.f32.gmra.mxu0 %v899
        %v973 = vpop.f32.mrf.mxu0
        %v974 = vadd.f32 0.0, %v973
        %v975 = vpop.f32.mrf.mxu0
        %v976 = vadd.f32 0.0, %v975
        %977 = vdwg.mxu0
        %978 = vmatprep.subr.mxu0 0.0
        %979 = vmatpush1.msra.mxu0 0.0
        %980 = vmatprep.subr.mxu0 0.0
        %981 = vmatpush1.msra.mxu0 0.0
        %982 = vmatprep.subr.mxu0 0.0
        %983 = vmatpush1.msra.mxu0 0.0
        %984 = vmatprep.subr.mxu0 0.0
        %985 = vmatpush1.msra.mxu0 0.0
        %986 = vmatprep.subr.mxu0 0.0
        %987 = vmatpush1.msra.mxu0 0.0
        %988 = vmatprep.subr.mxu0 0.0
        %989 = vmatpush1.msra.mxu0 0.0
        %990 = vmatprep.subr.mxu0 0.0
        %991 = vmatpush1.msra.mxu0 0.0
        %992 = vmatprep.subr.mxu0 0.0
        %993 = vmatpush1.msra.mxu0 0.0
        %994 = vmatprep.subr.mxu0 0.0
        %995 = vmatpush1.msra.mxu0 0.0
        %996 = vmatprep.subr.mxu0 0.0
        %997 = vmatpush1.msra.mxu0 0.0
        %998 = vmatprep.subr.mxu0 0.0
        %999 = vmatpush1.msra.mxu0 0.0
        %1000 = vmatprep.subr.mxu0 0.0
        %1001 = vmatpush1.msra.mxu0 0.0
        %1002 = vmatprep.subr.mxu0 0.0
        %1003 = vmatpush1.msra.mxu0 0.0
        %1004 = vmatprep.subr.mxu0 0.0
        %1005 = vmatpush1.msra.mxu0 0.0
        %1006 = vmatprep.subr.mxu0 0.0
        %1007 = vmatpush1.msra.mxu0 0.0
        %1008 = vmatprep.subr.mxu0 0.0
        %1009 = vmatpush1.msra.mxu0 %v905
        %1010 = vmatprep.subr.mxu0 0.0
        %1011 = vmatpush2.msra.mxu0 0.0
        %1012 = vmatprep.subr.mxu0 0.0
        %1013 = vmatpush2.msra.mxu0 0.0
        %1014 = vmatprep.subr.mxu0 0.0
        %1015 = vmatpush2.msra.mxu0 0.0
        %1016 = vmatprep.subr.mxu0 0.0
        %1017 = vmatpush2.msra.mxu0 0.0
        %1018 = vmatprep.subr.mxu0 0.0
        %1019 = vmatpush2.msra.mxu0 0.0
        %1020 = vmatprep.subr.mxu0 0.0
        %1021 = vmatpush2.msra.mxu0 0.0
        %1022 = vmatprep.subr.mxu0 0.0
        %1023 = vmatpush2.msra.mxu0 0.0
        %1024 = vmatprep.subr.mxu0 0.0
        %1025 = vmatpush2.msra.mxu0 0.0
        %1026 = vmatprep.subr.mxu0 0.0
        %1027 = vmatpush2.msra.mxu0 0.0
        %1028 = vmatprep.subr.mxu0 0.0
        %1029 = vmatpush2.msra.mxu0 0.0
        %1030 = vmatprep.subr.mxu0 0.0
        %1031 = vmatpush2.msra.mxu0 0.0
        %1032 = vmatprep.subr.mxu0 0.0
        %1033 = vmatpush2.msra.mxu0 0.0
        %1034 = vmatprep.subr.mxu0 0.0
        %1035 = vmatpush2.msra.mxu0 0.0
        %1036 = vmatprep.subr.mxu0 0.0
        %1037 = vmatpush2.msra.mxu0 0.0
        %1038 = vmatprep.subr.mxu0 0.0
        %1039 = vmatpush2.msra.mxu0 0.0
        %1040 = vmatprep.subr.mxu0 0.0
        %1041 = vmatpush2.msra.mxu0 0.0
        %1042 = vmatprep.mubr.f32.mxu0 0.0
        %1043 = vmatmul.mubr.f32.gmra.mxu0 %v899
        %v1044 = vpop.f32.mrf.mxu0
        %v1045 = vadd.f32 0.0, %v1044
        %v1046 = vpop.f32.mrf.mxu0
        %1047 = vdwg.mxu0
        %v1048 = vadd.f32 %v879, %v974
        %v1049 = vadd.f32 %v880, %v976
        %v1050 = vadd.f32 %v881, %v1045
        %v1051 = vld [vmem:[%s222] sm:$0xff]
        %v1052 = vld [vmem:[%s222 + $0x8] sm:$0xf]
        %s1053 = scalar_lea.vmem %s1, 20
        %v1054 = vld [vmem:[%s1053] sm:$0xf]
        %v1057 = vcombine.high %v1051, %v1051
        %1058 = vrot.lane.b32.xlu0 %v1051, 108
        %v1059 = vpop.permute.xlu0 %1058
        %1060 = vrot.lane.b32.xlu0 %v1057, 108
        %v1061 = vpop.permute.xlu0 %1060
        %1062 = vrot.lane.b32.xlu0 %v1052, 108
        %v1063 = vpop.permute.xlu0 %1062
        %vm1064 = vcmask 883712
        %v1065 = vsel %vm1064, %v1059, %v1061
        %v1066 = vsel %vm1064, %v1061, %v1063
        %v1068 = vsel %vm242, %v1054, 0
        %v1070 = vsel %vm246, %v1065, 0
        %v1072 = vsel %vm246, %v1066, 0
        %v1074 = vsel %vm246, %v1063, 0
        %1076 = vmatprep.subr.mxu0 0.0
        %1077 = vmatpush1.msra.mxu0 0.0
        %1078 = vmatprep.subr.mxu0 0.0
        %1079 = vmatpush1.msra.mxu0 0.0
        %1080 = vmatprep.subr.mxu0 0.0
        %1081 = vmatpush1.msra.mxu0 0.0
        %1082 = vmatprep.subr.mxu0 0.0
        %1083 = vmatpush1.msra.mxu0 0.0
        %1084 = vmatprep.subr.mxu0 0.0
        %1085 = vmatpush1.msra.mxu0 0.0
        %1086 = vmatprep.subr.mxu0 0.0
        %1087 = vmatpush1.msra.mxu0 0.0
        %1088 = vmatprep.subr.mxu0 0.0
        %1089 = vmatpush1.msra.mxu0 0.0
        %1090 = vmatprep.subr.mxu0 0.0
        %1091 = vmatpush1.msra.mxu0 0.0
        %1092 = vmatprep.subr.mxu0 0.0
        %1093 = vmatpush1.msra.mxu0 0.0
        %1094 = vmatprep.subr.mxu0 0.0
        %1095 = vmatpush1.msra.mxu0 0.0
        %1096 = vmatprep.subr.mxu0 0.0
        %1097 = vmatpush1.msra.mxu0 0.0
        %1098 = vmatprep.subr.mxu0 0.0
        %1099 = vmatpush1.msra.mxu0 0.0
        %1100 = vmatprep.subr.mxu0 0.0
        %1101 = vmatpush1.msra.mxu0 0.0
        %1102 = vmatprep.subr.mxu0 0.0
        %1103 = vmatpush1.msra.mxu0 0.0
        %1104 = vmatprep.subr.mxu0 0.0
        %1105 = vmatpush1.msra.mxu0 0.0
        %1106 = vmatprep.subr.mxu0 %v1072
        %1107 = vmatpush1.msra.mxu0 %v1070
        %1108 = vmatprep.subr.mxu0 0.0
        %1109 = vmatpush2.msra.mxu0 0.0
        %1110 = vmatprep.subr.mxu0 0.0
        %1111 = vmatpush2.msra.mxu0 0.0
        %1112 = vmatprep.subr.mxu0 0.0
        %1113 = vmatpush2.msra.mxu0 0.0
        %1114 = vmatprep.subr.mxu0 0.0
        %1115 = vmatpush2.msra.mxu0 0.0
        %1116 = vmatprep.subr.mxu0 0.0
        %1117 = vmatpush2.msra.mxu0 0.0
        %1118 = vmatprep.subr.mxu0 0.0
        %1119 = vmatpush2.msra.mxu0 0.0
        %1120 = vmatprep.subr.mxu0 0.0
        %1121 = vmatpush2.msra.mxu0 0.0
        %1122 = vmatprep.subr.mxu0 0.0
        %1123 = vmatpush2.msra.mxu0 0.0
        %1124 = vmatprep.subr.mxu0 0.0
        %1125 = vmatpush2.msra.mxu0 0.0
        %1126 = vmatprep.subr.mxu0 0.0
        %1127 = vmatpush2.msra.mxu0 0.0
        %1128 = vmatprep.subr.mxu0 0.0
        %1129 = vmatpush2.msra.mxu0 0.0
        %1130 = vmatprep.subr.mxu0 0.0
        %1131 = vmatpush2.msra.mxu0 0.0
        %1132 = vmatprep.subr.mxu0 0.0
        %1133 = vmatpush2.msra.mxu0 0.0
        %1134 = vmatprep.subr.mxu0 0.0
        %1135 = vmatpush2.msra.mxu0 0.0
        %1136 = vmatprep.subr.mxu0 0.0
        %1137 = vmatpush2.msra.mxu0 0.0
        %1138 = vmatprep.subr.mxu0 0.0
        %1139 = vmatpush2.msra.mxu0 0.0
        %1140 = vmatprep.mubr.f32.mxu0 0.0
        %1141 = vmatmul.mubr.f32.gmra.mxu0 %v1068
        %v1142 = vpop.f32.mrf.mxu0
        %v1143 = vadd.f32 0.0, %v1142
        %v1144 = vpop.f32.mrf.mxu0
        %v1145 = vadd.f32 0.0, %v1144
        %1146 = vdwg.mxu0
        %1147 = vmatprep.subr.mxu0 0.0
        %1148 = vmatpush1.msra.mxu0 0.0
        %1149 = vmatprep.subr.mxu0 0.0
        %1150 = vmatpush1.msra.mxu0 0.0
        %1151 = vmatprep.subr.mxu0 0.0
        %1152 = vmatpush1.msra.mxu0 0.0
        %1153 = vmatprep.subr.mxu0 0.0
        %1154 = vmatpush1.msra.mxu0 0.0
        %1155 = vmatprep.subr.mxu0 0.0
        %1156 = vmatpush1.msra.mxu0 0.0
        %1157 = vmatprep.subr.mxu0 0.0
        %1158 = vmatpush1.msra.mxu0 0.0
        %1159 = vmatprep.subr.mxu0 0.0
        %1160 = vmatpush1.msra.mxu0 0.0
        %1161 = vmatprep.subr.mxu0 0.0
        %1162 = vmatpush1.msra.mxu0 0.0
        %1163 = vmatprep.subr.mxu0 0.0
        %1164 = vmatpush1.msra.mxu0 0.0
        %1165 = vmatprep.subr.mxu0 0.0
        %1166 = vmatpush1.msra.mxu0 0.0
        %1167 = vmatprep.subr.mxu0 0.0
        %1168 = vmatpush1.msra.mxu0 0.0
        %1169 = vmatprep.subr.mxu0 0.0
        %1170 = vmatpush1.msra.mxu0 0.0
        %1171 = vmatprep.subr.mxu0 0.0
        %1172 = vmatpush1.msra.mxu0 0.0
        %1173 = vmatprep.subr.mxu0 0.0
        %1174 = vmatpush1.msra.mxu0 0.0
        %1175 = vmatprep.subr.mxu0 0.0
        %1176 = vmatpush1.msra.mxu0 0.0
        %1177 = vmatprep.subr.mxu0 0.0
        %1178 = vmatpush1.msra.mxu0 %v1074
        %1179 = vmatprep.subr.mxu0 0.0
        %1180 = vmatpush2.msra.mxu0 0.0
        %1181 = vmatprep.subr.mxu0 0.0
        %1182 = vmatpush2.msra.mxu0 0.0
        %1183 = vmatprep.subr.mxu0 0.0
        %1184 = vmatpush2.msra.mxu0 0.0
        %1185 = vmatprep.subr.mxu0 0.0
        %1186 = vmatpush2.msra.mxu0 0.0
        %1187 = vmatprep.subr.mxu0 0.0
        %1188 = vmatpush2.msra.mxu0 0.0
        %1189 = vmatprep.subr.mxu0 0.0
        %1190 = vmatpush2.msra.mxu0 0.0
        %1191 = vmatprep.subr.mxu0 0.0
        %1192 = vmatpush2.msra.mxu0 0.0
        %1193 = vmatprep.subr.mxu0 0.0
        %1194 = vmatpush2.msra.mxu0 0.0
        %1195 = vmatprep.subr.mxu0 0.0
        %1196 = vmatpush2.msra.mxu0 0.0
        %1197 = vmatprep.subr.mxu0 0.0
        %1198 = vmatpush2.msra.mxu0 0.0
        %1199 = vmatprep.subr.mxu0 0.0
        %1200 = vmatpush2.msra.mxu0 0.0
        %1201 = vmatprep.subr.mxu0 0.0
        %1202 = vmatpush2.msra.mxu0 0.0
        %1203 = vmatprep.subr.mxu0 0.0
        %1204 = vmatpush2.msra.mxu0 0.0
        %1205 = vmatprep.subr.mxu0 0.0
        %1206 = vmatpush2.msra.mxu0 0.0
        %1207 = vmatprep.subr.mxu0 0.0
        %1208 = vmatpush2.msra.mxu0 0.0
        %1209 = vmatprep.subr.mxu0 0.0
        %1210 = vmatpush2.msra.mxu0 0.0
        %1211 = vmatprep.mubr.f32.mxu0 0.0
        %1212 = vmatmul.mubr.f32.gmra.mxu0 %v1068
        %v1213 = vpop.f32.mrf.mxu0
        %v1214 = vadd.f32 0.0, %v1213
        %v1215 = vpop.f32.mrf.mxu0
        %1216 = vdwg.mxu0
        %v1217 = vadd.f32 %v1048, %v1143
        %v1218 = vadd.f32 %v1049, %v1145
        %v1219 = vadd.f32 %v1050, %v1214
        %v1220 = vld [vmem:[%s222] sm:$0xff]
        %v1221 = vld [vmem:[%s222 + $0x8] sm:$0xf]
        %s1222 = scalar_lea.vmem %s1, 24
        %v1223 = vld [vmem:[%s1222] sm:$0xf]
        %v1226 = vcombine.high %v1220, %v1220
        %1227 = vrot.lane.b32.xlu0 %v1220, 92
        %v1228 = vpop.permute.xlu0 %1227
        %1229 = vrot.lane.b32.xlu0 %v1226, 92
        %v1230 = vpop.permute.xlu0 %1229
        %1231 = vrot.lane.b32.xlu0 %v1221, 92
        %v1232 = vpop.permute.xlu0 %1231
        %vm1233 = vcmask 752640
        %v1234 = vsel %vm1233, %v1228, %v1230
        %v1235 = vsel %vm1233, %v1230, %v1232
        %v1237 = vsel %vm242, %v1223, 0
        %v1239 = vsel %vm246, %v1234, 0
        %v1241 = vsel %vm246, %v1235, 0
        %v1243 = vsel %vm246, %v1232, 0
        %1245 = vmatprep.subr.mxu0 0.0
        %1246 = vmatpush1.msra.mxu0 0.0
        %1247 = vmatprep.subr.mxu0 0.0
        %1248 = vmatpush1.msra.mxu0 0.0
        %1249 = vmatprep.subr.mxu0 0.0
        %1250 = vmatpush1.msra.mxu0 0.0
        %1251 = vmatprep.subr.mxu0 0.0
        %1252 = vmatpush1.msra.mxu0 0.0
        %1253 = vmatprep.subr.mxu0 0.0
        %1254 = vmatpush1.msra.mxu0 0.0
        %1255 = vmatprep.subr.mxu0 0.0
        %1256 = vmatpush1.msra.mxu0 0.0
        %1257 = vmatprep.subr.mxu0 0.0
        %1258 = vmatpush1.msra.mxu0 0.0
        %1259 = vmatprep.subr.mxu0 0.0
        %1260 = vmatpush1.msra.mxu0 0.0
        %1261 = vmatprep.subr.mxu0 0.0
        %1262 = vmatpush1.msra.mxu0 0.0
        %1263 = vmatprep.subr.mxu0 0.0
        %1264 = vmatpush1.msra.mxu0 0.0
        %1265 = vmatprep.subr.mxu0 0.0
        %1266 = vmatpush1.msra.mxu0 0.0
        %1267 = vmatprep.subr.mxu0 0.0
        %1268 = vmatpush1.msra.mxu0 0.0
        %1269 = vmatprep.subr.mxu0 0.0
        %1270 = vmatpush1.msra.mxu0 0.0
        %1271 = vmatprep.subr.mxu0 0.0
        %1272 = vmatpush1.msra.mxu0 0.0
        %1273 = vmatprep.subr.mxu0 0.0
        %1274 = vmatpush1.msra.mxu0 0.0
        %1275 = vmatprep.subr.mxu0 %v1241
        %1276 = vmatpush1.msra.mxu0 %v1239
        %1277 = vmatprep.subr.mxu0 0.0
        %1278 = vmatpush2.msra.mxu0 0.0
        %1279 = vmatprep.subr.mxu0 0.0
        %1280 = vmatpush2.msra.mxu0 0.0
        %1281 = vmatprep.subr.mxu0 0.0
        %1282 = vmatpush2.msra.mxu0 0.0
        %1283 = vmatprep.subr.mxu0 0.0
        %1284 = vmatpush2.msra.mxu0 0.0
        %1285 = vmatprep.subr.mxu0 0.0
        %1286 = vmatpush2.msra.mxu0 0.0
        %1287 = vmatprep.subr.mxu0 0.0
        %1288 = vmatpush2.msra.mxu0 0.0
        %1289 = vmatprep.subr.mxu0 0.0
        %1290 = vmatpush2.msra.mxu0 0.0
        %1291 = vmatprep.subr.mxu0 0.0
        %1292 = vmatpush2.msra.mxu0 0.0
        %1293 = vmatprep.subr.mxu0 0.0
        %1294 = vmatpush2.msra.mxu0 0.0
        %1295 = vmatprep.subr.mxu0 0.0
        %1296 = vmatpush2.msra.mxu0 0.0
        %1297 = vmatprep.subr.mxu0 0.0
        %1298 = vmatpush2.msra.mxu0 0.0
        %1299 = vmatprep.subr.mxu0 0.0
        %1300 = vmatpush2.msra.mxu0 0.0
        %1301 = vmatprep.subr.mxu0 0.0
        %1302 = vmatpush2.msra.mxu0 0.0
        %1303 = vmatprep.subr.mxu0 0.0
        %1304 = vmatpush2.msra.mxu0 0.0
        %1305 = vmatprep.subr.mxu0 0.0
        %1306 = vmatpush2.msra.mxu0 0.0
        %1307 = vmatprep.subr.mxu0 0.0
        %1308 = vmatpush2.msra.mxu0 0.0
        %1309 = vmatprep.mubr.f32.mxu0 0.0
        %1310 = vmatmul.mubr.f32.gmra.mxu0 %v1237
        %v1311 = vpop.f32.mrf.mxu0
        %v1312 = vadd.f32 0.0, %v1311
        %v1313 = vpop.f32.mrf.mxu0
        %v1314 = vadd.f32 0.0, %v1313
        %1315 = vdwg.mxu0
        %1316 = vmatprep.subr.mxu0 0.0
        %1317 = vmatpush1.msra.mxu0 0.0
        %1318 = vmatprep.subr.mxu0 0.0
        %1319 = vmatpush1.msra.mxu0 0.0
        %1320 = vmatprep.subr.mxu0 0.0
        %1321 = vmatpush1.msra.mxu0 0.0
        %1322 = vmatprep.subr.mxu0 0.0
        %1323 = vmatpush1.msra.mxu0 0.0
        %1324 = vmatprep.subr.mxu0 0.0
        %1325 = vmatpush1.msra.mxu0 0.0
        %1326 = vmatprep.subr.mxu0 0.0
        %1327 = vmatpush1.msra.mxu0 0.0
        %1328 = vmatprep.subr.mxu0 0.0
        %1329 = vmatpush1.msra.mxu0 0.0
        %1330 = vmatprep.subr.mxu0 0.0
        %1331 = vmatpush1.msra.mxu0 0.0
        %1332 = vmatprep.subr.mxu0 0.0
        %1333 = vmatpush1.msra.mxu0 0.0
        %1334 = vmatprep.subr.mxu0 0.0
        %1335 = vmatpush1.msra.mxu0 0.0
        %1336 = vmatprep.subr.mxu0 0.0
        %1337 = vmatpush1.msra.mxu0 0.0
        %1338 = vmatprep.subr.mxu0 0.0
        %1339 = vmatpush1.msra.mxu0 0.0
        %1340 = vmatprep.subr.mxu0 0.0
        %1341 = vmatpush1.msra.mxu0 0.0
        %1342 = vmatprep.subr.mxu0 0.0
        %1343 = vmatpush1.msra.mxu0 0.0
        %1344 = vmatprep.subr.mxu0 0.0
        %1345 = vmatpush1.msra.mxu0 0.0
        %1346 = vmatprep.subr.mxu0 0.0
        %1347 = vmatpush1.msra.mxu0 %v1243
        %1348 = vmatprep.subr.mxu0 0.0
        %1349 = vmatpush2.msra.mxu0 0.0
        %1350 = vmatprep.subr.mxu0 0.0
        %1351 = vmatpush2.msra.mxu0 0.0
        %1352 = vmatprep.subr.mxu0 0.0
        %1353 = vmatpush2.msra.mxu0 0.0
        %1354 = vmatprep.subr.mxu0 0.0
        %1355 = vmatpush2.msra.mxu0 0.0
        %1356 = vmatprep.subr.mxu0 0.0
        %1357 = vmatpush2.msra.mxu0 0.0
        %1358 = vmatprep.subr.mxu0 0.0
        %1359 = vmatpush2.msra.mxu0 0.0
        %1360 = vmatprep.subr.mxu0 0.0
        %1361 = vmatpush2.msra.mxu0 0.0
        %1362 = vmatprep.subr.mxu0 0.0
        %1363 = vmatpush2.msra.mxu0 0.0
        %1364 = vmatprep.subr.mxu0 0.0
        %1365 = vmatpush2.msra.mxu0 0.0
        %1366 = vmatprep.subr.mxu0 0.0
        %1367 = vmatpush2.msra.mxu0 0.0
        %1368 = vmatprep.subr.mxu0 0.0
        %1369 = vmatpush2.msra.mxu0 0.0
        %1370 = vmatprep.subr.mxu0 0.0
        %1371 = vmatpush2.msra.mxu0 0.0
        %1372 = vmatprep.subr.mxu0 0.0
        %1373 = vmatpush2.msra.mxu0 0.0
        %1374 = vmatprep.subr.mxu0 0.0
        %1375 = vmatpush2.msra.mxu0 0.0
        %1376 = vmatprep.subr.mxu0 0.0
        %1377 = vmatpush2.msra.mxu0 0.0
        %1378 = vmatprep.subr.mxu0 0.0
        %1379 = vmatpush2.msra.mxu0 0.0
        %1380 = vmatprep.mubr.f32.mxu0 0.0
        %1381 = vmatmul.mubr.f32.gmra.mxu0 %v1237
        %v1382 = vpop.f32.mrf.mxu0
        %v1383 = vadd.f32 0.0, %v1382
        %v1384 = vpop.f32.mrf.mxu0
        %1385 = vdwg.mxu0
        %v1386 = vadd.f32 %v1217, %v1312
        %v1387 = vadd.f32 %v1218, %v1314
        %v1388 = vadd.f32 %v1219, %v1383
        %v1389 = vld [vmem:[%s222] sm:$0xff]
        %v1390 = vld [vmem:[%s222 + $0x8] sm:$0xf]
        %s1391 = scalar_lea.vmem %s1, 28
        %v1392 = vld [vmem:[%s1391] sm:$0xf]
        %v1395 = vcombine.high %v1389, %v1389
        %1396 = vrot.lane.b32.xlu0 %v1389, 91
        %v1397 = vpop.permute.xlu0 %1396
        %1398 = vrot.lane.b32.xlu0 %v1395, 91
        %v1399 = vpop.permute.xlu0 %1398
        %1400 = vrot.lane.b32.xlu0 %v1390, 91
        %v1401 = vpop.permute.xlu0 %1400
        %vm1402 = vcmask 744448
        %v1403 = vsel %vm1402, %v1397, %v1399
        %v1404 = vsel %vm1402, %v1399, %v1401
        %v1406 = vsel %vm242, %v1392, 0
        %v1408 = vsel %vm246, %v1403, 0
        %v1410 = vsel %vm246, %v1404, 0
        %v1412 = vsel %vm246, %v1401, 0
        %1414 = vmatprep.subr.mxu0 0.0
        %1415 = vmatpush1.msra.mxu0 0.0
        %1416 = vmatprep.subr.mxu0 0.0
        %1417 = vmatpush1.msra.mxu0 0.0
        %1418 = vmatprep.subr.mxu0 0.0
        %1419 = vmatpush1.msra.mxu0 0.0
        %1420 = vmatprep.subr.mxu0 0.0
        %1421 = vmatpush1.msra.mxu0 0.0
        %1422 = vmatprep.subr.mxu0 0.0
        %1423 = vmatpush1.msra.mxu0 0.0
        %1424 = vmatprep.subr.mxu0 0.0
        %1425 = vmatpush1.msra.mxu0 0.0
        %1426 = vmatprep.subr.mxu0 0.0
        %1427 = vmatpush1.msra.mxu0 0.0
        %1428 = vmatprep.subr.mxu0 0.0
        %1429 = vmatpush1.msra.mxu0 0.0
        %1430 = vmatprep.subr.mxu0 0.0
        %1431 = vmatpush1.msra.mxu0 0.0
        %1432 = vmatprep.subr.mxu0 0.0
        %1433 = vmatpush1.msra.mxu0 0.0
        %1434 = vmatprep.subr.mxu0 0.0
        %1435 = vmatpush1.msra.mxu0 0.0
        %1436 = vmatprep.subr.mxu0 0.0
        %1437 = vmatpush1.msra.mxu0 0.0
        %1438 = vmatprep.subr.mxu0 0.0
        %1439 = vmatpush1.msra.mxu0 0.0
        %1440 = vmatprep.subr.mxu0 0.0
        %1441 = vmatpush1.msra.mxu0 0.0
        %1442 = vmatprep.subr.mxu0 0.0
        %1443 = vmatpush1.msra.mxu0 0.0
        %1444 = vmatprep.subr.mxu0 %v1410
        %1445 = vmatpush1.msra.mxu0 %v1408
        %1446 = vmatprep.subr.mxu0 0.0
        %1447 = vmatpush2.msra.mxu0 0.0
        %1448 = vmatprep.subr.mxu0 0.0
        %1449 = vmatpush2.msra.mxu0 0.0
        %1450 = vmatprep.subr.mxu0 0.0
        %1451 = vmatpush2.msra.mxu0 0.0
        %1452 = vmatprep.subr.mxu0 0.0
        %1453 = vmatpush2.msra.mxu0 0.0
        %1454 = vmatprep.subr.mxu0 0.0
        %1455 = vmatpush2.msra.mxu0 0.0
        %1456 = vmatprep.subr.mxu0 0.0
        %1457 = vmatpush2.msra.mxu0 0.0
        %1458 = vmatprep.subr.mxu0 0.0
        %1459 = vmatpush2.msra.mxu0 0.0
        %1460 = vmatprep.subr.mxu0 0.0
        %1461 = vmatpush2.msra.mxu0 0.0
        %1462 = vmatprep.subr.mxu0 0.0
        %1463 = vmatpush2.msra.mxu0 0.0
        %1464 = vmatprep.subr.mxu0 0.0
        %1465 = vmatpush2.msra.mxu0 0.0
        %1466 = vmatprep.subr.mxu0 0.0
        %1467 = vmatpush2.msra.mxu0 0.0
        %1468 = vmatprep.subr.mxu0 0.0
        %1469 = vmatpush2.msra.mxu0 0.0
        %1470 = vmatprep.subr.mxu0 0.0
        %1471 = vmatpush2.msra.mxu0 0.0
        %1472 = vmatprep.subr.mxu0 0.0
        %1473 = vmatpush2.msra.mxu0 0.0
        %1474 = vmatprep.subr.mxu0 0.0
        %1475 = vmatpush2.msra.mxu0 0.0
        %1476 = vmatprep.subr.mxu0 0.0
        %1477 = vmatpush2.msra.mxu0 0.0
        %1478 = vmatprep.mubr.f32.mxu0 0.0
        %1479 = vmatmul.mubr.f32.gmra.mxu0 %v1406
        %v1480 = vpop.f32.mrf.mxu0
        %v1481 = vadd.f32 0.0, %v1480
        %v1482 = vpop.f32.mrf.mxu0
        %v1483 = vadd.f32 0.0, %v1482
        %1484 = vdwg.mxu0
        %1485 = vmatprep.subr.mxu0 0.0
        %1486 = vmatpush1.msra.mxu0 0.0
        %1487 = vmatprep.subr.mxu0 0.0
        %1488 = vmatpush1.msra.mxu0 0.0
        %1489 = vmatprep.subr.mxu0 0.0
        %1490 = vmatpush1.msra.mxu0 0.0
        %1491 = vmatprep.subr.mxu0 0.0
        %1492 = vmatpush1.msra.mxu0 0.0
        %1493 = vmatprep.subr.mxu0 0.0
        %1494 = vmatpush1.msra.mxu0 0.0
        %1495 = vmatprep.subr.mxu0 0.0
        %1496 = vmatpush1.msra.mxu0 0.0
        %1497 = vmatprep.subr.mxu0 0.0
        %1498 = vmatpush1.msra.mxu0 0.0
        %1499 = vmatprep.subr.mxu0 0.0
        %1500 = vmatpush1.msra.mxu0 0.0
        %1501 = vmatprep.subr.mxu0 0.0
        %1502 = vmatpush1.msra.mxu0 0.0
        %1503 = vmatprep.subr.mxu0 0.0
        %1504 = vmatpush1.msra.mxu0 0.0
        %1505 = vmatprep.subr.mxu0 0.0
        %1506 = vmatpush1.msra.mxu0 0.0
        %1507 = vmatprep.subr.mxu0 0.0
        %1508 = vmatpush1.msra.mxu0 0.0
        %1509 = vmatprep.subr.mxu0 0.0
        %1510 = vmatpush1.msra.mxu0 0.0
        %1511 = vmatprep.subr.mxu0 0.0
        %1512 = vmatpush1.msra.mxu0 0.0
        %1513 = vmatprep.subr.mxu0 0.0
        %1514 = vmatpush1.msra.mxu0 0.0
        %1515 = vmatprep.subr.mxu0 0.0
        %1516 = vmatpush1.msra.mxu0 %v1412
        %1517 = vmatprep.subr.mxu0 0.0
        %1518 = vmatpush2.msra.mxu0 0.0
        %1519 = vmatprep.subr.mxu0 0.0
        %1520 = vmatpush2.msra.mxu0 0.0
        %1521 = vmatprep.subr.mxu0 0.0
        %1522 = vmatpush2.msra.mxu0 0.0
        %1523 = vmatprep.subr.mxu0 0.0
        %1524 = vmatpush2.msra.mxu0 0.0
        %1525 = vmatprep.subr.mxu0 0.0
        %1526 = vmatpush2.msra.mxu0 0.0
        %1527 = vmatprep.subr.mxu0 0.0
        %1528 = vmatpush2.msra.mxu0 0.0
        %1529 = vmatprep.subr.mxu0 0.0
        %1530 = vmatpush2.msra.mxu0 0.0
        %1531 = vmatprep.subr.mxu0 0.0
        %1532 = vmatpush2.msra.mxu0 0.0
        %1533 = vmatprep.subr.mxu0 0.0
        %1534 = vmatpush2.msra.mxu0 0.0
        %1535 = vmatprep.subr.mxu0 0.0
        %1536 = vmatpush2.msra.mxu0 0.0
        %1537 = vmatprep.subr.mxu0 0.0
        %1538 = vmatpush2.msra.mxu0 0.0
        %1539 = vmatprep.subr.mxu0 0.0
        %1540 = vmatpush2.msra.mxu0 0.0
        %1541 = vmatprep.subr.mxu0 0.0
        %1542 = vmatpush2.msra.mxu0 0.0
        %1543 = vmatprep.subr.mxu0 0.0
        %1544 = vmatpush2.msra.mxu0 0.0
        %1545 = vmatprep.subr.mxu0 0.0
        %1546 = vmatpush2.msra.mxu0 0.0
        %1547 = vmatprep.subr.mxu0 0.0
        %1548 = vmatpush2.msra.mxu0 0.0
        %1549 = vmatprep.mubr.f32.mxu0 0.0
        %1550 = vmatmul.mubr.f32.gmra.mxu0 %v1406
        %v1551 = vpop.f32.mrf.mxu0
        %v1552 = vadd.f32 0.0, %v1551
        %v1553 = vpop.f32.mrf.mxu0
        %1554 = vdwg.mxu0
        %v1555 = vadd.f32 %v1386, %v1481
        %v1556 = vadd.f32 %v1387, %v1483
        %v1557 = vadd.f32 %v1388, %v1552
        %v1558 = vld [vmem:[%s222] sm:$0xff]
        %v1559 = vld [vmem:[%s222 + $0x8] sm:$0xf]
        %s1560 = scalar_lea.vmem %s1, 32
        %v1561 = vld [vmem:[%s1560] sm:$0xf]
        %v1564 = vcombine.high %v1558, %v1558
        %1565 = vrot.lane.b32.xlu0 %v1558, 90
        %v1566 = vpop.permute.xlu0 %1565
        %1567 = vrot.lane.b32.xlu0 %v1564, 90
        %v1568 = vpop.permute.xlu0 %1567
        %1569 = vrot.lane.b32.xlu0 %v1559, 90
        %v1570 = vpop.permute.xlu0 %1569
        %vm1571 = vcmask 736256
        %v1572 = vsel %vm1571, %v1566, %v1568
        %v1573 = vsel %vm1571, %v1568, %v1570
        %v1575 = vsel %vm242, %v1561, 0
        %v1577 = vsel %vm246, %v1572, 0
        %v1579 = vsel %vm246, %v1573, 0
        %v1581 = vsel %vm246, %v1570, 0
        %1583 = vmatprep.subr.mxu0 0.0
        %1584 = vmatpush1.msra.mxu0 0.0
        %1585 = vmatprep.subr.mxu0 0.0
        %1586 = vmatpush1.msra.mxu0 0.0
        %1587 = vmatprep.subr.mxu0 0.0
        %1588 = vmatpush1.msra.mxu0 0.0
        %1589 = vmatprep.subr.mxu0 0.0
        %1590 = vmatpush1.msra.mxu0 0.0
        %1591 = vmatprep.subr.mxu0 0.0
        %1592 = vmatpush1.msra.mxu0 0.0
        %1593 = vmatprep.subr.mxu0 0.0
        %1594 = vmatpush1.msra.mxu0 0.0
        %1595 = vmatprep.subr.mxu0 0.0
        %1596 = vmatpush1.msra.mxu0 0.0
        %1597 = vmatprep.subr.mxu0 0.0
        %1598 = vmatpush1.msra.mxu0 0.0
        %1599 = vmatprep.subr.mxu0 0.0
        %1600 = vmatpush1.msra.mxu0 0.0
        %1601 = vmatprep.subr.mxu0 0.0
        %1602 = vmatpush1.msra.mxu0 0.0
        %1603 = vmatprep.subr.mxu0 0.0
        %1604 = vmatpush1.msra.mxu0 0.0
        %1605 = vmatprep.subr.mxu0 0.0
        %1606 = vmatpush1.msra.mxu0 0.0
        %1607 = vmatprep.subr.mxu0 0.0
        %1608 = vmatpush1.msra.mxu0 0.0
        %1609 = vmatprep.subr.mxu0 0.0
        %1610 = vmatpush1.msra.mxu0 0.0
        %1611 = vmatprep.subr.mxu0 0.0
        %1612 = vmatpush1.msra.mxu0 0.0
        %1613 = vmatprep.subr.mxu0 %v1579
        %1614 = vmatpush1.msra.mxu0 %v1577
        %1615 = vmatprep.subr.mxu0 0.0
        %1616 = vmatpush2.msra.mxu0 0.0
        %1617 = vmatprep.subr.mxu0 0.0
        %1618 = vmatpush2.msra.mxu0 0.0
        %1619 = vmatprep.subr.mxu0 0.0
        %1620 = vmatpush2.msra.mxu0 0.0
        %1621 = vmatprep.subr.mxu0 0.0
        %1622 = vmatpush2.msra.mxu0 0.0
        %1623 = vmatprep.subr.mxu0 0.0
        %1624 = vmatpush2.msra.mxu0 0.0
        %1625 = vmatprep.subr.mxu0 0.0
        %1626 = vmatpush2.msra.mxu0 0.0
        %1627 = vmatprep.subr.mxu0 0.0
        %1628 = vmatpush2.msra.mxu0 0.0
        %1629 = vmatprep.subr.mxu0 0.0
        %1630 = vmatpush2.msra.mxu0 0.0
        %1631 = vmatprep.subr.mxu0 0.0
        %1632 = vmatpush2.msra.mxu0 0.0
        %1633 = vmatprep.subr.mxu0 0.0
        %1634 = vmatpush2.msra.mxu0 0.0
        %1635 = vmatprep.subr.mxu0 0.0
        %1636 = vmatpush2.msra.mxu0 0.0
        %1637 = vmatprep.subr.mxu0 0.0
        %1638 = vmatpush2.msra.mxu0 0.0
        %1639 = vmatprep.subr.mxu0 0.0
        %1640 = vmatpush2.msra.mxu0 0.0
        %1641 = vmatprep.subr.mxu0 0.0
        %1642 = vmatpush2.msra.mxu0 0.0
        %1643 = vmatprep.subr.mxu0 0.0
        %1644 = vmatpush2.msra.mxu0 0.0
        %1645 = vmatprep.subr.mxu0 0.0
        %1646 = vmatpush2.msra.mxu0 0.0
        %1647 = vmatprep.mubr.f32.mxu0 0.0
        %1648 = vmatmul.mubr.f32.gmra.mxu0 %v1575
        %v1649 = vpop.f32.mrf.mxu0
        %v1650 = vadd.f32 0.0, %v1649
        %v1651 = vpop.f32.mrf.mxu0
        %v1652 = vadd.f32 0.0, %v1651
        %1653 = vdwg.mxu0
        %1654 = vmatprep.subr.mxu0 0.0
        %1655 = vmatpush1.msra.mxu0 0.0
        %1656 = vmatprep.subr.mxu0 0.0
        %1657 = vmatpush1.msra.mxu0 0.0
        %1658 = vmatprep.subr.mxu0 0.0
        %1659 = vmatpush1.msra.mxu0 0.0
        %1660 = vmatprep.subr.mxu0 0.0
        %1661 = vmatpush1.msra.mxu0 0.0
        %1662 = vmatprep.subr.mxu0 0.0
        %1663 = vmatpush1.msra.mxu0 0.0
        %1664 = vmatprep.subr.mxu0 0.0
        %1665 = vmatpush1.msra.mxu0 0.0
        %1666 = vmatprep.subr.mxu0 0.0
        %1667 = vmatpush1.msra.mxu0 0.0
        %1668 = vmatprep.subr.mxu0 0.0
        %1669 = vmatpush1.msra.mxu0 0.0
        %1670 = vmatprep.subr.mxu0 0.0
        %1671 = vmatpush1.msra.mxu0 0.0
        %1672 = vmatprep.subr.mxu0 0.0
        %1673 = vmatpush1.msra.mxu0 0.0
        %1674 = vmatprep.subr.mxu0 0.0
        %1675 = vmatpush1.msra.mxu0 0.0
        %1676 = vmatprep.subr.mxu0 0.0
        %1677 = vmatpush1.msra.mxu0 0.0
        %1678 = vmatprep.subr.mxu0 0.0
        %1679 = vmatpush1.msra.mxu0 0.0
        %1680 = vmatprep.subr.mxu0 0.0
        %1681 = vmatpush1.msra.mxu0 0.0
        %1682 = vmatprep.subr.mxu0 0.0
        %1683 = vmatpush1.msra.mxu0 0.0
        %1684 = vmatprep.subr.mxu0 0.0
        %1685 = vmatpush1.msra.mxu0 %v1581
        %1686 = vmatprep.subr.mxu0 0.0
        %1687 = vmatpush2.msra.mxu0 0.0
        %1688 = vmatprep.subr.mxu0 0.0
        %1689 = vmatpush2.msra.mxu0 0.0
        %1690 = vmatprep.subr.mxu0 0.0
        %1691 = vmatpush2.msra.mxu0 0.0
        %1692 = vmatprep.subr.mxu0 0.0
        %1693 = vmatpush2.msra.mxu0 0.0
        %1694 = vmatprep.subr.mxu0 0.0
        %1695 = vmatpush2.msra.mxu0 0.0
        %1696 = vmatprep.subr.mxu0 0.0
        %1697 = vmatpush2.msra.mxu0 0.0
        %1698 = vmatprep.subr.mxu0 0.0
        %1699 = vmatpush2.msra.mxu0 0.0
        %1700 = vmatprep.subr.mxu0 0.0
        %1701 = vmatpush2.msra.mxu0 0.0
        %1702 = vmatprep.subr.mxu0 0.0
        %1703 = vmatpush2.msra.mxu0 0.0
        %1704 = vmatprep.subr.mxu0 0.0
        %1705 = vmatpush2.msra.mxu0 0.0
        %1706 = vmatprep.subr.mxu0 0.0
        %1707 = vmatpush2.msra.mxu0 0.0
        %1708 = vmatprep.subr.mxu0 0.0
        %1709 = vmatpush2.msra.mxu0 0.0
        %1710 = vmatprep.subr.mxu0 0.0
        %1711 = vmatpush2.msra.mxu0 0.0
        %1712 = vmatprep.subr.mxu0 0.0
        %1713 = vmatpush2.msra.mxu0 0.0
        %1714 = vmatprep.subr.mxu0 0.0
        %1715 = vmatpush2.msra.mxu0 0.0
        %1716 = vmatprep.subr.mxu0 0.0
        %1717 = vmatpush2.msra.mxu0 0.0
        %1718 = vmatprep.mubr.f32.mxu0 0.0
        %1719 = vmatmul.mubr.f32.gmra.mxu0 %v1575
        %v1720 = vpop.f32.mrf.mxu0
        %v1721 = vadd.f32 0.0, %v1720
        %v1722 = vpop.f32.mrf.mxu0
        %1723 = vdwg.mxu0
        %v1724 = vadd.f32 %v1555, %v1650
        %v1725 = vadd.f32 %v1556, %v1652
        %v1726 = vadd.f32 %v1557, %v1721
        %1728 = vset.pattern.permute.xlu0 0
        %1729 = vperm.xlu0 %1728, %v224
        %v1730 = vpop.permute.xlu0 %1729
        %v1732 = vadd.f32 %v1724, %v1730
        %v1733 = vadd.f32 %v1725, %v1730
        %v1734 = vadd.f32 %v1726, %v1730
        %v1735 = vmax.f32 %v1732, 0.0
        %v1736 = vmax.f32 %v1733, 0.0
        %v1737 = vmax.f32 %v1734, 0.0
        %v1739 = vlaneseq
        %v1740 = vshrl.u32 %v1739, 7
        %v1741 = vsub.s32 0, %v1740
        %v1742 = vrot.slane %v223, %v1741
        %v1743 = vlaneseq
        %v1744 = vshrl.u32 %v1743, 7
        %v1745 = vsub.s32 1, %v1744
        %v1746 = vrot.slane %v223, %v1745
        %v1747 = vlaneseq
        %v1748 = vshrl.u32 %v1747, 7
        %v1749 = vsub.s32 2, %v1748
        %v1750 = vrot.slane %v223, %v1749
        %v1754 = vmul.f32 %v1735, %v1742
        %v1755 = vmul.f32 %v1736, %v1746
        %v1756 = vmul.f32 %v1737, %v1750
        %v1757 = vsel %vm246, %v1754, 0.0
        %v1758 = vsel %vm246, %v1755, 0.0
        %v1759 = vadd.f32 %v1757, %v1758
        %vm1760 = vcmask 551936
        %v1761 = vsel %vm1760, %v1756, 0.0
        %v1762 = vadd.f32 %v1759, %v1761
        %1763 = vadd.xlane.f32.xlu0 %v1762
        %v1764 = vpop.xlane.xlu0 %1763
        %v1765 = vmul.f32 %v1764, 0.00390625
        %v1766 = vmul.f32 %v1735, %v1735
        %v1767 = vmul.f32 %v1736, %v1736
        %v1768 = vmul.f32 %v1737, %v1737
        %v1769 = vmul.f32 %v1766, %v1742
        %v1770 = vmul.f32 %v1767, %v1746
        %v1771 = vmul.f32 %v1768, %v1750
        %v1772 = vsel %vm246, %v1769, 0.0
        %v1773 = vsel %vm246, %v1770, 0.0
        %v1774 = vadd.f32 %v1772, %v1773
        %v1775 = vsel %vm1760, %v1771, 0.0
        %v1776 = vadd.f32 %v1774, %v1775
        %1777 = vadd.xlane.f32.xlu0 %v1776
        %v1778 = vpop.xlane.xlu0 %1777
        %v1779 = vmul.f32 %v1778, 0.00390625
        %v1780 = vmul.f32 %v1765, %v1765
        %v1781 = vsub.f32 %v1779, %v1780
        %v1782 = vmax.f32 %v1781, 0.0
        %v1783 = vsub.f32 %v1735, %v1765
        %v1784 = vsub.f32 %v1736, %v1765
        %v1785 = vsub.f32 %v1737, %v1765
        %v1786 = vadd.f32 %v1782, 1e-05
        %v1787 = vrsqrt.pop %v1786
        %v1788 = vmul.f32 %v1783, %v1787
        %v1789 = vmul.f32 %v1784, %v1787
        %v1790 = vmul.f32 %v1785, %v1787
        %v1791 = vmul.f32 %v1788, %v1742
        %v1792 = vmul.f32 %v1789, %v1746
        %v1793 = vmul.f32 %v1790, %v1750
        %vm1794 = vcmask 150528
        %1795 = vst.msk [vmem:[#allocation2] sm:$0xf] %vm1794, 0.0
        %vm1796 = vcmask 863928
        %1797 = vst.msk [vmem:[#allocation2 + $0x8] sm:$0xf] %vm1796, 0.0
        %v1801 = vcombine.low %v1791, %v1792
        %1802 = vrot.lane.b32.xlu0 %v1801, 19
        %v1803 = vpop.permute.xlu0 %1802
        %1804 = vrot.lane.b32.xlu0 %v1793, 19
        %v1805 = vpop.permute.xlu0 %1804
        %v1806 = vrot.slane %v1803, 4
        %vm1807 = vcmask 154624
        %v1808 = vsel %vm1807, %v1806, %v1803
        %v1809 = vsel %vm1807, %v1806, %v1805
        %vm1812 = vcmask 1043608
        %vm1813 = vcmask 1047556
        %vm1814 = vmor %vm1813, %vm1812
        %1815 = vst.msk [vmem:[#allocation2] sm:$0xff] %vm1814, %v1808
        %vm1816 = vcmask 707584
        %1817 = vst.msk [vmem:[#allocation2 + $0x8] sm:$0xf] %vm1816, %v1809
        %v1818 = vld [vmem:[#allocation2] sm:$0xff]
        %v1819 = vld [vmem:[#allocation2 + $0x8] sm:$0xf]
        %v1820 = vld [vmem:[%s3] sm:$0xf]
        %s1821 = scalar_lea.vmem %s3, 4
        %v1822 = vld [vmem:[%s1821] sm:$0xf]
        %v1825 = vcombine.high %v1818, %v1818
        %1826 = vrot.lane.b32.xlu0 %v1818, 127
        %v1827 = vpop.permute.xlu0 %1826
        %1828 = vrot.lane.b32.xlu0 %v1825, 127
        %v1829 = vpop.permute.xlu0 %1828
        %1830 = vrot.lane.b32.xlu0 %v1819, 127
        %v1831 = vpop.permute.xlu0 %1830
        %v1832 = vsel %vm239, %v1827, %v1829
        %v1833 = vsel %vm239, %v1829, %v1831
        %v1835 = vsel %vm242, %v1822, 0
        %v1837 = vsel %vm246, %v1832, 0
        %v1839 = vsel %vm246, %v1833, 0
        %v1841 = vsel %vm246, %v1831, 0
        %1843 = vmatprep.subr.mxu0 0.0
        %1844 = vmatpush1.msra.mxu0 0.0
        %1845 = vmatprep.subr.mxu0 0.0
        %1846 = vmatpush1.msra.mxu0 0.0
        %1847 = vmatprep.subr.mxu0 0.0
        %1848 = vmatpush1.msra.mxu0 0.0
        %1849 = vmatprep.subr.mxu0 0.0
        %1850 = vmatpush1.msra.mxu0 0.0
        %1851 = vmatprep.subr.mxu0 0.0
        %1852 = vmatpush1.msra.mxu0 0.0
        %1853 = vmatprep.subr.mxu0 0.0
        %1854 = vmatpush1.msra.mxu0 0.0
        %1855 = vmatprep.subr.mxu0 0.0
        %1856 = vmatpush1.msra.mxu0 0.0
        %1857 = vmatprep.subr.mxu0 0.0
        %1858 = vmatpush1.msra.mxu0 0.0
        %1859 = vmatprep.subr.mxu0 0.0
        %1860 = vmatpush1.msra.mxu0 0.0
        %1861 = vmatprep.subr.mxu0 0.0
        %1862 = vmatpush1.msra.mxu0 0.0
        %1863 = vmatprep.subr.mxu0 0.0
        %1864 = vmatpush1.msra.mxu0 0.0
        %1865 = vmatprep.subr.mxu0 0.0
        %1866 = vmatpush1.msra.mxu0 0.0
        %1867 = vmatprep.subr.mxu0 0.0
        %1868 = vmatpush1.msra.mxu0 0.0
        %1869 = vmatprep.subr.mxu0 0.0
        %1870 = vmatpush1.msra.mxu0 0.0
        %1871 = vmatprep.subr.mxu0 0.0
        %1872 = vmatpush1.msra.mxu0 0.0
        %1873 = vmatprep.subr.mxu0 %v1839
        %1874 = vmatpush1.msra.mxu0 %v1837
        %1875 = vmatprep.subr.mxu0 0.0
        %1876 = vmatpush2.msra.mxu0 0.0
        %1877 = vmatprep.subr.mxu0 0.0
        %1878 = vmatpush2.msra.mxu0 0.0
        %1879 = vmatprep.subr.mxu0 0.0
        %1880 = vmatpush2.msra.mxu0 0.0
        %1881 = vmatprep.subr.mxu0 0.0
        %1882 = vmatpush2.msra.mxu0 0.0
        %1883 = vmatprep.subr.mxu0 0.0
        %1884 = vmatpush2.msra.mxu0 0.0
        %1885 = vmatprep.subr.mxu0 0.0
        %1886 = vmatpush2.msra.mxu0 0.0
        %1887 = vmatprep.subr.mxu0 0.0
        %1888 = vmatpush2.msra.mxu0 0.0
        %1889 = vmatprep.subr.mxu0 0.0
        %1890 = vmatpush2.msra.mxu0 0.0
        %1891 = vmatprep.subr.mxu0 0.0
        %1892 = vmatpush2.msra.mxu0 0.0
        %1893 = vmatprep.subr.mxu0 0.0
        %1894 = vmatpush2.msra.mxu0 0.0
        %1895 = vmatprep.subr.mxu0 0.0
        %1896 = vmatpush2.msra.mxu0 0.0
        %1897 = vmatprep.subr.mxu0 0.0
        %1898 = vmatpush2.msra.mxu0 0.0
        %1899 = vmatprep.subr.mxu0 0.0
        %1900 = vmatpush2.msra.mxu0 0.0
        %1901 = vmatprep.subr.mxu0 0.0
        %1902 = vmatpush2.msra.mxu0 0.0
        %1903 = vmatprep.subr.mxu0 0.0
        %1904 = vmatpush2.msra.mxu0 0.0
        %1905 = vmatprep.subr.mxu0 0.0
        %1906 = vmatpush2.msra.mxu0 0.0
        %1907 = vmatprep.mubr.f32.mxu0 0.0
        %1908 = vmatmul.mubr.f32.gmra.mxu0 %v1835
        %v1909 = vpop.f32.mrf.mxu0
        %v1910 = vadd.f32 0.0, %v1909
        %v1911 = vpop.f32.mrf.mxu0
        %v1912 = vadd.f32 0.0, %v1911
        %1913 = vdwg.mxu0
        %1914 = vmatprep.subr.mxu0 0.0
        %1915 = vmatpush1.msra.mxu0 0.0
        %1916 = vmatprep.subr.mxu0 0.0
        %1917 = vmatpush1.msra.mxu0 0.0
        %1918 = vmatprep.subr.mxu0 0.0
        %1919 = vmatpush1.msra.mxu0 0.0
        %1920 = vmatprep.subr.mxu0 0.0
        %1921 = vmatpush1.msra.mxu0 0.0
        %1922 = vmatprep.subr.mxu0 0.0
        %1923 = vmatpush1.msra.mxu0 0.0
        %1924 = vmatprep.subr.mxu0 0.0
        %1925 = vmatpush1.msra.mxu0 0.0
        %1926 = vmatprep.subr.mxu0 0.0
        %1927 = vmatpush1.msra.mxu0 0.0
        %1928 = vmatprep.subr.mxu0 0.0
        %1929 = vmatpush1.msra.mxu0 0.0
        %1930 = vmatprep.subr.mxu0 0.0
        %1931 = vmatpush1.msra.mxu0 0.0
        %1932 = vmatprep.subr.mxu0 0.0
        %1933 = vmatpush1.msra.mxu0 0.0
        %1934 = vmatprep.subr.mxu0 0.0
        %1935 = vmatpush1.msra.mxu0 0.0
        %1936 = vmatprep.subr.mxu0 0.0
        %1937 = vmatpush1.msra.mxu0 0.0
        %1938 = vmatprep.subr.mxu0 0.0
        %1939 = vmatpush1.msra.mxu0 0.0
        %1940 = vmatprep.subr.mxu0 0.0
        %1941 = vmatpush1.msra.mxu0 0.0
        %1942 = vmatprep.subr.mxu0 0.0
        %1943 = vmatpush1.msra.mxu0 0.0
        %1944 = vmatprep.subr.mxu0 0.0
        %1945 = vmatpush1.msra.mxu0 %v1841
        %1946 = vmatprep.subr.mxu0 0.0
        %1947 = vmatpush2.msra.mxu0 0.0
        %1948 = vmatprep.subr.mxu0 0.0
        %1949 = vmatpush2.msra.mxu0 0.0
        %1950 = vmatprep.subr.mxu0 0.0
        %1951 = vmatpush2.msra.mxu0 0.0
        %1952 = vmatprep.subr.mxu0 0.0
        %1953 = vmatpush2.msra.mxu0 0.0
        %1954 = vmatprep.subr.mxu0 0.0
        %1955 = vmatpush2.msra.mxu0 0.0
        %1956 = vmatprep.subr.mxu0 0.0
        %1957 = vmatpush2.msra.mxu0 0.0
        %1958 = vmatprep.subr.mxu0 0.0
        %1959 = vmatpush2.msra.mxu0 0.0
        %1960 = vmatprep.subr.mxu0 0.0
        %1961 = vmatpush2.msra.mxu0 0.0
        %1962 = vmatprep.subr.mxu0 0.0
        %1963 = vmatpush2.msra.mxu0 0.0
        %1964 = vmatprep.subr.mxu0 0.0
        %1965 = vmatpush2.msra.mxu0 0.0
        %1966 = vmatprep.subr.mxu0 0.0
        %1967 = vmatpush2.msra.mxu0 0.0
        %1968 = vmatprep.subr.mxu0 0.0
        %1969 = vmatpush2.msra.mxu0 0.0
        %1970 = vmatprep.subr.mxu0 0.0
        %1971 = vmatpush2.msra.mxu0 0.0
        %1972 = vmatprep.subr.mxu0 0.0
        %1973 = vmatpush2.msra.mxu0 0.0
        %1974 = vmatprep.subr.mxu0 0.0
        %1975 = vmatpush2.msra.mxu0 0.0
        %1976 = vmatprep.subr.mxu0 0.0
        %1977 = vmatpush2.msra.mxu0 0.0
        %1978 = vmatprep.mubr.f32.mxu0 0.0
        %1979 = vmatmul.mubr.f32.gmra.mxu0 %v1835
        %v1980 = vpop.f32.mrf.mxu0
        %v1981 = vadd.f32 0.0, %v1980
        %v1982 = vpop.f32.mrf.mxu0
        %1983 = vdwg.mxu0
        %v1985 = vsel %vm242, %v1820, 0
        %v1987 = vsel %vm246, %v1818, 0
        %v1989 = vsel %vm246, %v1825, 0
        %v1991 = vsel %vm246, %v1819, 0
        %1993 = vmatprep.subr.mxu0 0.0
        %1994 = vmatpush1.msra.mxu0 0.0
        %1995 = vmatprep.subr.mxu0 0.0
        %1996 = vmatpush1.msra.mxu0 0.0
        %1997 = vmatprep.subr.mxu0 0.0
        %1998 = vmatpush1.msra.mxu0 0.0
        %1999 = vmatprep.subr.mxu0 0.0
        %2000 = vmatpush1.msra.mxu0 0.0
        %2001 = vmatprep.subr.mxu0 0.0
        %2002 = vmatpush1.msra.mxu0 0.0
        %2003 = vmatprep.subr.mxu0 0.0
        %2004 = vmatpush1.msra.mxu0 0.0
        %2005 = vmatprep.subr.mxu0 0.0
        %2006 = vmatpush1.msra.mxu0 0.0
        %2007 = vmatprep.subr.mxu0 0.0
        %2008 = vmatpush1.msra.mxu0 0.0
        %2009 = vmatprep.subr.mxu0 0.0
        %2010 = vmatpush1.msra.mxu0 0.0
        %2011 = vmatprep.subr.mxu0 0.0
        %2012 = vmatpush1.msra.mxu0 0.0
        %2013 = vmatprep.subr.mxu0 0.0
        %2014 = vmatpush1.msra.mxu0 0.0
        %2015 = vmatprep.subr.mxu0 0.0
        %2016 = vmatpush1.msra.mxu0 0.0
        %2017 = vmatprep.subr.mxu0 0.0
        %2018 = vmatpush1.msra.mxu0 0.0
        %2019 = vmatprep.subr.mxu0 0.0
        %2020 = vmatpush1.msra.mxu0 0.0
        %2021 = vmatprep.subr.mxu0 0.0
        %2022 = vmatpush1.msra.mxu0 0.0
        %2023 = vmatprep.subr.mxu0 %v1989
        %2024 = vmatpush1.msra.mxu0 %v1987
        %2025 = vmatprep.subr.mxu0 0.0
        %2026 = vmatpush2.msra.mxu0 0.0
        %2027 = vmatprep.subr.mxu0 0.0
        %2028 = vmatpush2.msra.mxu0 0.0
        %2029 = vmatprep.subr.mxu0 0.0
        %2030 = vmatpush2.msra.mxu0 0.0
        %2031 = vmatprep.subr.mxu0 0.0
        %2032 = vmatpush2.msra.mxu0 0.0
        %2033 = vmatprep.subr.mxu0 0.0
        %2034 = vmatpush2.msra.mxu0 0.0
        %2035 = vmatprep.subr.mxu0 0.0
        %2036 = vmatpush2.msra.mxu0 0.0
        %2037 = vmatprep.subr.mxu0 0.0
        %2038 = vmatpush2.msra.mxu0 0.0
        %2039 = vmatprep.subr.mxu0 0.0
        %2040 = vmatpush2.msra.mxu0 0.0
        %2041 = vmatprep.subr.mxu0 0.0
        %2042 = vmatpush2.msra.mxu0 0.0
        %2043 = vmatprep.subr.mxu0 0.0
        %2044 = vmatpush2.msra.mxu0 0.0
        %2045 = vmatprep.subr.mxu0 0.0
        %2046 = vmatpush2.msra.mxu0 0.0
        %2047 = vmatprep.subr.mxu0 0.0
        %2048 = vmatpush2.msra.mxu0 0.0
        %2049 = vmatprep.subr.mxu0 0.0
        %2050 = vmatpush2.msra.mxu0 0.0
        %2051 = vmatprep.subr.mxu0 0.0
        %2052 = vmatpush2.msra.mxu0 0.0
        %2053 = vmatprep.subr.mxu0 0.0
        %2054 = vmatpush2.msra.mxu0 0.0
        %2055 = vmatprep.subr.mxu0 0.0
        %2056 = vmatpush2.msra.mxu0 0.0
        %2057 = vmatprep.mubr.f32.mxu0 0.0
        %2058 = vmatmul.mubr.f32.gmra.mxu0 %v1985
        %v2059 = vpop.f32.mrf.mxu0
        %v2060 = vadd.f32 %v1910, %v2059
        %v2061 = vpop.f32.mrf.mxu0
        %v2062 = vadd.f32 %v1912, %v2061
        %2063 = vdwg.mxu0
        %2064 = vmatprep.subr.mxu0 0.0
        %2065 = vmatpush1.msra.mxu0 0.0
        %2066 = vmatprep.subr.mxu0 0.0
        %2067 = vmatpush1.msra.mxu0 0.0
        %2068 = vmatprep.subr.mxu0 0.0
        %2069 = vmatpush1.msra.mxu0 0.0
        %2070 = vmatprep.subr.mxu0 0.0
        %2071 = vmatpush1.msra.mxu0 0.0
        %2072 = vmatprep.subr.mxu0 0.0
        %2073 = vmatpush1.msra.mxu0 0.0
        %2074 = vmatprep.subr.mxu0 0.0
        %2075 = vmatpush1.msra.mxu0 0.0
        %2076 = vmatprep.subr.mxu0 0.0
        %2077 = vmatpush1.msra.mxu0 0.0
        %2078 = vmatprep.subr.mxu0 0.0
        %2079 = vmatpush1.msra.mxu0 0.0
        %2080 = vmatprep.subr.mxu0 0.0
        %2081 = vmatpush1.msra.mxu0 0.0
        %2082 = vmatprep.subr.mxu0 0.0
        %2083 = vmatpush1.msra.mxu0 0.0
        %2084 = vmatprep.subr.mxu0 0.0
        %2085 = vmatpush1.msra.mxu0 0.0
        %2086 = vmatprep.subr.mxu0 0.0
        %2087 = vmatpush1.msra.mxu0 0.0
        %2088 = vmatprep.subr.mxu0 0.0
        %2089 = vmatpush1.msra.mxu0 0.0
        %2090 = vmatprep.subr.mxu0 0.0
        %2091 = vmatpush1.msra.mxu0 0.0
        %2092 = vmatprep.subr.mxu0 0.0
        %2093 = vmatpush1.msra.mxu0 0.0
        %2094 = vmatprep.subr.mxu0 0.0
        %2095 = vmatpush1.msra.mxu0 %v1991
        %2096 = vmatprep.subr.mxu0 0.0
        %2097 = vmatpush2.msra.mxu0 0.0
        %2098 = vmatprep.subr.mxu0 0.0
        %2099 = vmatpush2.msra.mxu0 0.0
        %2100 = vmatprep.subr.mxu0 0.0
        %2101 = vmatpush2.msra.mxu0 0.0
        %2102 = vmatprep.subr.mxu0 0.0
        %2103 = vmatpush2.msra.mxu0 0.0
        %2104 = vmatprep.subr.mxu0 0.0
        %2105 = vmatpush2.msra.mxu0 0.0
        %2106 = vmatprep.subr.mxu0 0.0
        %2107 = vmatpush2.msra.mxu0 0.0
        %2108 = vmatprep.subr.mxu0 0.0
        %2109 = vmatpush2.msra.mxu0 0.0
        %2110 = vmatprep.subr.mxu0 0.0
        %2111 = vmatpush2.msra.mxu0 0.0
        %2112 = vmatprep.subr.mxu0 0.0
        %2113 = vmatpush2.msra.mxu0 0.0
        %2114 = vmatprep.subr.mxu0 0.0
        %2115 = vmatpush2.msra.mxu0 0.0
        %2116 = vmatprep.subr.mxu0 0.0
        %2117 = vmatpush2.msra.mxu0 0.0
        %2118 = vmatprep.subr.mxu0 0.0
        %2119 = vmatpush2.msra.mxu0 0.0
        %2120 = vmatprep.subr.mxu0 0.0
        %2121 = vmatpush2.msra.mxu0 0.0
        %2122 = vmatprep.subr.mxu0 0.0
        %2123 = vmatpush2.msra.mxu0 0.0
        %2124 = vmatprep.subr.mxu0 0.0
        %2125 = vmatpush2.msra.mxu0 0.0
        %2126 = vmatprep.subr.mxu0 0.0
        %2127 = vmatpush2.msra.mxu0 0.0
        %2128 = vmatprep.mubr.f32.mxu0 0.0
        %2129 = vmatmul.mubr.f32.gmra.mxu0 %v1985
        %v2130 = vpop.f32.mrf.mxu0
        %v2131 = vadd.f32 %v1981, %v2130
        %v2132 = vpop.f32.mrf.mxu0
        %2133 = vdwg.mxu0
        %v2134 = vld [vmem:[#allocation2] sm:$0xff]
        %v2135 = vld [vmem:[#allocation2 + $0x8] sm:$0xf]
        %s2136 = scalar_lea.vmem %s3, 8
        %v2137 = vld [vmem:[%s2136] sm:$0xf]
        %v2140 = vcombine.high %v2134, %v2134
        %2141 = vrot.lane.b32.xlu0 %v2134, 126
        %v2142 = vpop.permute.xlu0 %2141
        %2143 = vrot.lane.b32.xlu0 %v2140, 126
        %v2144 = vpop.permute.xlu0 %2143
        %2145 = vrot.lane.b32.xlu0 %v2135, 126
        %v2146 = vpop.permute.xlu0 %2145
        %v2147 = vsel %vm557, %v2142, %v2144
        %v2148 = vsel %vm557, %v2144, %v2146
        %v2150 = vsel %vm242, %v2137, 0
        %v2152 = vsel %vm246, %v2147, 0
        %v2154 = vsel %vm246, %v2148, 0
        %v2156 = vsel %vm246, %v2146, 0
        %2158 = vmatprep.subr.mxu0 0.0
        %2159 = vmatpush1.msra.mxu0 0.0
        %2160 = vmatprep.subr.mxu0 0.0
        %2161 = vmatpush1.msra.mxu0 0.0
        %2162 = vmatprep.subr.mxu0 0.0
        %2163 = vmatpush1.msra.mxu0 0.0
        %2164 = vmatprep.subr.mxu0 0.0
        %2165 = vmatpush1.msra.mxu0 0.0
        %2166 = vmatprep.subr.mxu0 0.0
        %2167 = vmatpush1.msra.mxu0 0.0
        %2168 = vmatprep.subr.mxu0 0.0
        %2169 = vmatpush1.msra.mxu0 0.0
        %2170 = vmatprep.subr.mxu0 0.0
        %2171 = vmatpush1.msra.mxu0 0.0
        %2172 = vmatprep.subr.mxu0 0.0
        %2173 = vmatpush1.msra.mxu0 0.0
        %2174 = vmatprep.subr.mxu0 0.0
        %2175 = vmatpush1.msra.mxu0 0.0
        %2176 = vmatprep.subr.mxu0 0.0
        %2177 = vmatpush1.msra.mxu0 0.0
        %2178 = vmatprep.subr.mxu0 0.0
        %2179 = vmatpush1.msra.mxu0 0.0
        %2180 = vmatprep.subr.mxu0 0.0
        %2181 = vmatpush1.msra.mxu0 0.0
        %2182 = vmatprep.subr.mxu0 0.0
        %2183 = vmatpush1.msra.mxu0 0.0
        %2184 = vmatprep.subr.mxu0 0.0
        %2185 = vmatpush1.msra.mxu0 0.0
        %2186 = vmatprep.subr.mxu0 0.0
        %2187 = vmatpush1.msra.mxu0 0.0
        %2188 = vmatprep.subr.mxu0 %v2154
        %2189 = vmatpush1.msra.mxu0 %v2152
        %2190 = vmatprep.subr.mxu0 0.0
        %2191 = vmatpush2.msra.mxu0 0.0
        %2192 = vmatprep.subr.mxu0 0.0
        %2193 = vmatpush2.msra.mxu0 0.0
        %2194 = vmatprep.subr.mxu0 0.0
        %2195 = vmatpush2.msra.mxu0 0.0
        %2196 = vmatprep.subr.mxu0 0.0
        %2197 = vmatpush2.msra.mxu0 0.0
        %2198 = vmatprep.subr.mxu0 0.0
        %2199 = vmatpush2.msra.mxu0 0.0
        %2200 = vmatprep.subr.mxu0 0.0
        %2201 = vmatpush2.msra.mxu0 0.0
        %2202 = vmatprep.subr.mxu0 0.0
        %2203 = vmatpush2.msra.mxu0 0.0
        %2204 = vmatprep.subr.mxu0 0.0
        %2205 = vmatpush2.msra.mxu0 0.0
        %2206 = vmatprep.subr.mxu0 0.0
        %2207 = vmatpush2.msra.mxu0 0.0
        %2208 = vmatprep.subr.mxu0 0.0
        %2209 = vmatpush2.msra.mxu0 0.0
        %2210 = vmatprep.subr.mxu0 0.0
        %2211 = vmatpush2.msra.mxu0 0.0
        %2212 = vmatprep.subr.mxu0 0.0
        %2213 = vmatpush2.msra.mxu0 0.0
        %2214 = vmatprep.subr.mxu0 0.0
        %2215 = vmatpush2.msra.mxu0 0.0
        %2216 = vmatprep.subr.mxu0 0.0
        %2217 = vmatpush2.msra.mxu0 0.0
        %2218 = vmatprep.subr.mxu0 0.0
        %2219 = vmatpush2.msra.mxu0 0.0
        %2220 = vmatprep.subr.mxu0 0.0
        %2221 = vmatpush2.msra.mxu0 0.0
        %2222 = vmatprep.mubr.f32.mxu0 0.0
        %2223 = vmatmul.mubr.f32.gmra.mxu0 %v2150
        %v2224 = vpop.f32.mrf.mxu0
        %v2225 = vadd.f32 0.0, %v2224
        %v2226 = vpop.f32.mrf.mxu0
        %v2227 = vadd.f32 0.0, %v2226
        %2228 = vdwg.mxu0
        %2229 = vmatprep.subr.mxu0 0.0
        %2230 = vmatpush1.msra.mxu0 0.0
        %2231 = vmatprep.subr.mxu0 0.0
        %2232 = vmatpush1.msra.mxu0 0.0
        %2233 = vmatprep.subr.mxu0 0.0
        %2234 = vmatpush1.msra.mxu0 0.0
        %2235 = vmatprep.subr.mxu0 0.0
        %2236 = vmatpush1.msra.mxu0 0.0
        %2237 = vmatprep.subr.mxu0 0.0
        %2238 = vmatpush1.msra.mxu0 0.0
        %2239 = vmatprep.subr.mxu0 0.0
        %2240 = vmatpush1.msra.mxu0 0.0
        %2241 = vmatprep.subr.mxu0 0.0
        %2242 = vmatpush1.msra.mxu0 0.0
        %2243 = vmatprep.subr.mxu0 0.0
        %2244 = vmatpush1.msra.mxu0 0.0
        %2245 = vmatprep.subr.mxu0 0.0
        %2246 = vmatpush1.msra.mxu0 0.0
        %2247 = vmatprep.subr.mxu0 0.0
        %2248 = vmatpush1.msra.mxu0 0.0
        %2249 = vmatprep.subr.mxu0 0.0
        %2250 = vmatpush1.msra.mxu0 0.0
        %2251 = vmatprep.subr.mxu0 0.0
        %2252 = vmatpush1.msra.mxu0 0.0
        %2253 = vmatprep.subr.mxu0 0.0
        %2254 = vmatpush1.msra.mxu0 0.0
        %2255 = vmatprep.subr.mxu0 0.0
        %2256 = vmatpush1.msra.mxu0 0.0
        %2257 = vmatprep.subr.mxu0 0.0
        %2258 = vmatpush1.msra.mxu0 0.0
        %2259 = vmatprep.subr.mxu0 0.0
        %2260 = vmatpush1.msra.mxu0 %v2156
        %2261 = vmatprep.subr.mxu0 0.0
        %2262 = vmatpush2.msra.mxu0 0.0
        %2263 = vmatprep.subr.mxu0 0.0
        %2264 = vmatpush2.msra.mxu0 0.0
        %2265 = vmatprep.subr.mxu0 0.0
        %2266 = vmatpush2.msra.mxu0 0.0
        %2267 = vmatprep.subr.mxu0 0.0
        %2268 = vmatpush2.msra.mxu0 0.0
        %2269 = vmatprep.subr.mxu0 0.0
        %2270 = vmatpush2.msra.mxu0 0.0
        %2271 = vmatprep.subr.mxu0 0.0
        %2272 = vmatpush2.msra.mxu0 0.0
        %2273 = vmatprep.subr.mxu0 0.0
        %2274 = vmatpush2.msra.mxu0 0.0
        %2275 = vmatprep.subr.mxu0 0.0
        %2276 = vmatpush2.msra.mxu0 0.0
        %2277 = vmatprep.subr.mxu0 0.0
        %2278 = vmatpush2.msra.mxu0 0.0
        %2279 = vmatprep.subr.mxu0 0.0
        %2280 = vmatpush2.msra.mxu0 0.0
        %2281 = vmatprep.subr.mxu0 0.0
        %2282 = vmatpush2.msra.mxu0 0.0
        %2283 = vmatprep.subr.mxu0 0.0
        %2284 = vmatpush2.msra.mxu0 0.0
        %2285 = vmatprep.subr.mxu0 0.0
        %2286 = vmatpush2.msra.mxu0 0.0
        %2287 = vmatprep.subr.mxu0 0.0
        %2288 = vmatpush2.msra.mxu0 0.0
        %2289 = vmatprep.subr.mxu0 0.0
        %2290 = vmatpush2.msra.mxu0 0.0
        %2291 = vmatprep.subr.mxu0 0.0
        %2292 = vmatpush2.msra.mxu0 0.0
        %2293 = vmatprep.mubr.f32.mxu0 0.0
        %2294 = vmatmul.mubr.f32.gmra.mxu0 %v2150
        %v2295 = vpop.f32.mrf.mxu0
        %v2296 = vadd.f32 0.0, %v2295
        %v2297 = vpop.f32.mrf.mxu0
        %2298 = vdwg.mxu0
        %v2299 = vadd.f32 %v2060, %v2225
        %v2300 = vadd.f32 %v2062, %v2227
        %v2301 = vadd.f32 %v2131, %v2296
        %v2302 = vld [vmem:[#allocation2] sm:$0xff]
        %v2303 = vld [vmem:[#allocation2 + $0x8] sm:$0xf]
        %s2304 = scalar_lea.vmem %s3, 12
        %v2305 = vld [vmem:[%s2304] sm:$0xf]
        %v2308 = vcombine.high %v2302, %v2302
        %2309 = vrot.lane.b32.xlu0 %v2302, 110
        %v2310 = vpop.permute.xlu0 %2309
        %2311 = vrot.lane.b32.xlu0 %v2308, 110
        %v2312 = vpop.permute.xlu0 %2311
        %2313 = vrot.lane.b32.xlu0 %v2303, 110
        %v2314 = vpop.permute.xlu0 %2313
        %v2315 = vsel %vm726, %v2310, %v2312
        %v2316 = vsel %vm726, %v2312, %v2314
        %v2318 = vsel %vm242, %v2305, 0
        %v2320 = vsel %vm246, %v2315, 0
        %v2322 = vsel %vm246, %v2316, 0
        %v2324 = vsel %vm246, %v2314, 0
        %2326 = vmatprep.subr.mxu0 0.0
        %2327 = vmatpush1.msra.mxu0 0.0
        %2328 = vmatprep.subr.mxu0 0.0
        %2329 = vmatpush1.msra.mxu0 0.0
        %2330 = vmatprep.subr.mxu0 0.0
        %2331 = vmatpush1.msra.mxu0 0.0
        %2332 = vmatprep.subr.mxu0 0.0
        %2333 = vmatpush1.msra.mxu0 0.0
        %2334 = vmatprep.subr.mxu0 0.0
        %2335 = vmatpush1.msra.mxu0 0.0
        %2336 = vmatprep.subr.mxu0 0.0
        %2337 = vmatpush1.msra.mxu0 0.0
        %2338 = vmatprep.subr.mxu0 0.0
        %2339 = vmatpush1.msra.mxu0 0.0
        %2340 = vmatprep.subr.mxu0 0.0
        %2341 = vmatpush1.msra.mxu0 0.0
        %2342 = vmatprep.subr.mxu0 0.0
        %2343 = vmatpush1.msra.mxu0 0.0
        %2344 = vmatprep.subr.mxu0 0.0
        %2345 = vmatpush1.msra.mxu0 0.0
        %2346 = vmatprep.subr.mxu0 0.0
        %2347 = vmatpush1.msra.mxu0 0.0
        %2348 = vmatprep.subr.mxu0 0.0
        %2349 = vmatpush1.msra.mxu0 0.0
        %2350 = vmatprep.subr.mxu0 0.0
        %2351 = vmatpush1.msra.mxu0 0.0
        %2352 = vmatprep.subr.mxu0 0.0
        %2353 = vmatpush1.msra.mxu0 0.0
        %2354 = vmatprep.subr.mxu0 0.0
        %2355 = vmatpush1.msra.mxu0 0.0
        %2356 = vmatprep.subr.mxu0 %v2322
        %2357 = vmatpush1.msra.mxu0 %v2320
        %2358 = vmatprep.subr.mxu0 0.0
        %2359 = vmatpush2.msra.mxu0 0.0
        %2360 = vmatprep.subr.mxu0 0.0
        %2361 = vmatpush2.msra.mxu0 0.0
        %2362 = vmatprep.subr.mxu0 0.0
        %2363 = vmatpush2.msra.mxu0 0.0
        %2364 = vmatprep.subr.mxu0 0.0
        %2365 = vmatpush2.msra.mxu0 0.0
        %2366 = vmatprep.subr.mxu0 0.0
        %2367 = vmatpush2.msra.mxu0 0.0
        %2368 = vmatprep.subr.mxu0 0.0
        %2369 = vmatpush2.msra.mxu0 0.0
        %2370 = vmatprep.subr.mxu0 0.0
        %2371 = vmatpush2.msra.mxu0 0.0
        %2372 = vmatprep.subr.mxu0 0.0
        %2373 = vmatpush2.msra.mxu0 0.0
        %2374 = vmatprep.subr.mxu0 0.0
        %2375 = vmatpush2.msra.mxu0 0.0
        %2376 = vmatprep.subr.mxu0 0.0
        %2377 = vmatpush2.msra.mxu0 0.0
        %2378 = vmatprep.subr.mxu0 0.0
        %2379 = vmatpush2.msra.mxu0 0.0
        %2380 = vmatprep.subr.mxu0 0.0
        %2381 = vmatpush2.msra.mxu0 0.0
        %2382 = vmatprep.subr.mxu0 0.0
        %2383 = vmatpush2.msra.mxu0 0.0
        %2384 = vmatprep.subr.mxu0 0.0
        %2385 = vmatpush2.msra.mxu0 0.0
        %2386 = vmatprep.subr.mxu0 0.0
        %2387 = vmatpush2.msra.mxu0 0.0
        %2388 = vmatprep.subr.mxu0 0.0
        %2389 = vmatpush2.msra.mxu0 0.0
        %2390 = vmatprep.mubr.f32.mxu0 0.0
        %2391 = vmatmul.mubr.f32.gmra.mxu0 %v2318
        %v2392 = vpop.f32.mrf.mxu0
        %v2393 = vadd.f32 0.0, %v2392
        %v2394 = vpop.f32.mrf.mxu0
        %v2395 = vadd.f32 0.0, %v2394
        %2396 = vdwg.mxu0
        %2397 = vmatprep.subr.mxu0 0.0
        %2398 = vmatpush1.msra.mxu0 0.0
        %2399 = vmatprep.subr.mxu0 0.0
        %2400 = vmatpush1.msra.mxu0 0.0
        %2401 = vmatprep.subr.mxu0 0.0
        %2402 = vmatpush1.msra.mxu0 0.0
        %2403 = vmatprep.subr.mxu0 0.0
        %2404 = vmatpush1.msra.mxu0 0.0
        %2405 = vmatprep.subr.mxu0 0.0
        %2406 = vmatpush1.msra.mxu0 0.0
        %2407 = vmatprep.subr.mxu0 0.0
        %2408 = vmatpush1.msra.mxu0 0.0
        %2409 = vmatprep.subr.mxu0 0.0
        %2410 = vmatpush1.msra.mxu0 0.0
        %2411 = vmatprep.subr.mxu0 0.0
        %2412 = vmatpush1.msra.mxu0 0.0
        %2413 = vmatprep.subr.mxu0 0.0
        %2414 = vmatpush1.msra.mxu0 0.0
        %2415 = vmatprep.subr.mxu0 0.0
        %2416 = vmatpush1.msra.mxu0 0.0
        %2417 = vmatprep.subr.mxu0 0.0
        %2418 = vmatpush1.msra.mxu0 0.0
        %2419 = vmatprep.subr.mxu0 0.0
        %2420 = vmatpush1.msra.mxu0 0.0
        %2421 = vmatprep.subr.mxu0 0.0
        %2422 = vmatpush1.msra.mxu0 0.0
        %2423 = vmatprep.subr.mxu0 0.0
        %2424 = vmatpush1.msra.mxu0 0.0
        %2425 = vmatprep.subr.mxu0 0.0
        %2426 = vmatpush1.msra.mxu0 0.0
        %2427 = vmatprep.subr.mxu0 0.0
        %2428 = vmatpush1.msra.mxu0 %v2324
        %2429 = vmatprep.subr.mxu0 0.0
        %2430 = vmatpush2.msra.mxu0 0.0
        %2431 = vmatprep.subr.mxu0 0.0
        %2432 = vmatpush2.msra.mxu0 0.0
        %2433 = vmatprep.subr.mxu0 0.0
        %2434 = vmatpush2.msra.mxu0 0.0
        %2435 = vmatprep.subr.mxu0 0.0
        %2436 = vmatpush2.msra.mxu0 0.0
        %2437 = vmatprep.subr.mxu0 0.0
        %2438 = vmatpush2.msra.mxu0 0.0
        %2439 = vmatprep.subr.mxu0 0.0
        %2440 = vmatpush2.msra.mxu0 0.0
        %2441 = vmatprep.subr.mxu0 0.0
        %2442 = vmatpush2.msra.mxu0 0.0
        %2443 = vmatprep.subr.mxu0 0.0
        %2444 = vmatpush2.msra.mxu0 0.0
        %2445 = vmatprep.subr.mxu0 0.0
        %2446 = vmatpush2.msra.mxu0 0.0
        %2447 = vmatprep.subr.mxu0 0.0
        %2448 = vmatpush2.msra.mxu0 0.0
        %2449 = vmatprep.subr.mxu0 0.0
        %2450 = vmatpush2.msra.mxu0 0.0
        %2451 = vmatprep.subr.mxu0 0.0
        %2452 = vmatpush2.msra.mxu0 0.0
        %2453 = vmatprep.subr.mxu0 0.0
        %2454 = vmatpush2.msra.mxu0 0.0
        %2455 = vmatprep.subr.mxu0 0.0
        %2456 = vmatpush2.msra.mxu0 0.0
        %2457 = vmatprep.subr.mxu0 0.0
        %2458 = vmatpush2.msra.mxu0 0.0
        %2459 = vmatprep.subr.mxu0 0.0
        %2460 = vmatpush2.msra.mxu0 0.0
        %2461 = vmatprep.mubr.f32.mxu0 0.0
        %2462 = vmatmul.mubr.f32.gmra.mxu0 %v2318
        %v2463 = vpop.f32.mrf.mxu0
        %v2464 = vadd.f32 0.0, %v2463
        %v2465 = vpop.f32.mrf.mxu0
        %2466 = vdwg.mxu0
        %v2467 = vadd.f32 %v2299, %v2393
        %v2468 = vadd.f32 %v2300, %v2395
        %v2469 = vadd.f32 %v2301, %v2464
        %v2470 = vld [vmem:[#allocation2] sm:$0xff]
        %v2471 = vld [vmem:[#allocation2 + $0x8] sm:$0xf]
        %s2472 = scalar_lea.vmem %s3, 16
        %v2473 = vld [vmem:[%s2472] sm:$0xf]
        %v2476 = vcombine.high %v2470, %v2470
        %2477 = vrot.lane.b32.xlu0 %v2470, 109
        %v2478 = vpop.permute.xlu0 %2477
        %2479 = vrot.lane.b32.xlu0 %v2476, 109
        %v2480 = vpop.permute.xlu0 %2479
        %2481 = vrot.lane.b32.xlu0 %v2471, 109
        %v2482 = vpop.permute.xlu0 %2481
        %v2483 = vsel %vm895, %v2478, %v2480
        %v2484 = vsel %vm895, %v2480, %v2482
        %v2486 = vsel %vm242, %v2473, 0
        %v2488 = vsel %vm246, %v2483, 0
        %v2490 = vsel %vm246, %v2484, 0
        %v2492 = vsel %vm246, %v2482, 0
        %2494 = vmatprep.subr.mxu0 0.0
        %2495 = vmatpush1.msra.mxu0 0.0
        %2496 = vmatprep.subr.mxu0 0.0
        %2497 = vmatpush1.msra.mxu0 0.0
        %2498 = vmatprep.subr.mxu0 0.0
        %2499 = vmatpush1.msra.mxu0 0.0
        %2500 = vmatprep.subr.mxu0 0.0
        %2501 = vmatpush1.msra.mxu0 0.0
        %2502 = vmatprep.subr.mxu0 0.0
        %2503 = vmatpush1.msra.mxu0 0.0
        %2504 = vmatprep.subr.mxu0 0.0
        %2505 = vmatpush1.msra.mxu0 0.0
        %2506 = vmatprep.subr.mxu0 0.0
        %2507 = vmatpush1.msra.mxu0 0.0
        %2508 = vmatprep.subr.mxu0 0.0
        %2509 = vmatpush1.msra.mxu0 0.0
        %2510 = vmatprep.subr.mxu0 0.0
        %2511 = vmatpush1.msra.mxu0 0.0
        %2512 = vmatprep.subr.mxu0 0.0
        %2513 = vmatpush1.msra.mxu0 0.0
        %2514 = vmatprep.subr.mxu0 0.0
        %2515 = vmatpush1.msra.mxu0 0.0
        %2516 = vmatprep.subr.mxu0 0.0
        %2517 = vmatpush1.msra.mxu0 0.0
        %2518 = vmatprep.subr.mxu0 0.0
        %2519 = vmatpush1.msra.mxu0 0.0
        %2520 = vmatprep.subr.mxu0 0.0
        %2521 = vmatpush1.msra.mxu0 0.0
        %2522 = vmatprep.subr.mxu0 0.0
        %2523 = vmatpush1.msra.mxu0 0.0
        %2524 = vmatprep.subr.mxu0 %v2490
        %2525 = vmatpush1.msra.mxu0 %v2488
        %2526 = vmatprep.subr.mxu0 0.0
        %2527 = vmatpush2.msra.mxu0 0.0
        %2528 = vmatprep.subr.mxu0 0.0
        %2529 = vmatpush2.msra.mxu0 0.0
        %2530 = vmatprep.subr.mxu0 0.0
        %2531 = vmatpush2.msra.mxu0 0.0
        %2532 = vmatprep.subr.mxu0 0.0
        %2533 = vmatpush2.msra.mxu0 0.0
        %2534 = vmatprep.subr.mxu0 0.0
        %2535 = vmatpush2.msra.mxu0 0.0
        %2536 = vmatprep.subr.mxu0 0.0
        %2537 = vmatpush2.msra.mxu0 0.0
        %2538 = vmatprep.subr.mxu0 0.0
        %2539 = vmatpush2.msra.mxu0 0.0
        %2540 = vmatprep.subr.mxu0 0.0
        %2541 = vmatpush2.msra.mxu0 0.0
        %2542 = vmatprep.subr.mxu0 0.0
        %2543 = vmatpush2.msra.mxu0 0.0
        %2544 = vmatprep.subr.mxu0 0.0
        %2545 = vmatpush2.msra.mxu0 0.0
        %2546 = vmatprep.subr.mxu0 0.0
        %2547 = vmatpush2.msra.mxu0 0.0
        %2548 = vmatprep.subr.mxu0 0.0
        %2549 = vmatpush2.msra.mxu0 0.0
        %2550 = vmatprep.subr.mxu0 0.0
        %2551 = vmatpush2.msra.mxu0 0.0
        %2552 = vmatprep.subr.mxu0 0.0
        %2553 = vmatpush2.msra.mxu0 0.0
        %2554 = vmatprep.subr.mxu0 0.0
        %2555 = vmatpush2.msra.mxu0 0.0
        %2556 = vmatprep.subr.mxu0 0.0
        %2557 = vmatpush2.msra.mxu0 0.0
        %2558 = vmatprep.mubr.f32.mxu0 0.0
        %2559 = vmatmul.mubr.f32.gmra.mxu0 %v2486
        %v2560 = vpop.f32.mrf.mxu0
        %v2561 = vadd.f32 0.0, %v2560
        %v2562 = vpop.f32.mrf.mxu0
        %v2563 = vadd.f32 0.0, %v2562
        %2564 = vdwg.mxu0
        %2565 = vmatprep.subr.mxu0 0.0
        %2566 = vmatpush1.msra.mxu0 0.0
        %2567 = vmatprep.subr.mxu0 0.0
        %2568 = vmatpush1.msra.mxu0 0.0
        %2569 = vmatprep.subr.mxu0 0.0
        %2570 = vmatpush1.msra.mxu0 0.0
        %2571 = vmatprep.subr.mxu0 0.0
        %2572 = vmatpush1.msra.mxu0 0.0
        %2573 = vmatprep.subr.mxu0 0.0
        %2574 = vmatpush1.msra.mxu0 0.0
        %2575 = vmatprep.subr.mxu0 0.0
        %2576 = vmatpush1.msra.mxu0 0.0
        %2577 = vmatprep.subr.mxu0 0.0
        %2578 = vmatpush1.msra.mxu0 0.0
        %2579 = vmatprep.subr.mxu0 0.0
        %2580 = vmatpush1.msra.mxu0 0.0
        %2581 = vmatprep.subr.mxu0 0.0
        %2582 = vmatpush1.msra.mxu0 0.0
        %2583 = vmatprep.subr.mxu0 0.0
        %2584 = vmatpush1.msra.mxu0 0.0
        %2585 = vmatprep.subr.mxu0 0.0
        %2586 = vmatpush1.msra.mxu0 0.0
        %2587 = vmatprep.subr.mxu0 0.0
        %2588 = vmatpush1.msra.mxu0 0.0
        %2589 = vmatprep.subr.mxu0 0.0
        %2590 = vmatpush1.msra.mxu0 0.0
        %2591 = vmatprep.subr.mxu0 0.0
        %2592 = vmatpush1.msra.mxu0 0.0
        %2593 = vmatprep.subr.mxu0 0.0
        %2594 = vmatpush1.msra.mxu0 0.0
        %2595 = vmatprep.subr.mxu0 0.0
        %2596 = vmatpush1.msra.mxu0 %v2492
        %2597 = vmatprep.subr.mxu0 0.0
        %2598 = vmatpush2.msra.mxu0 0.0
        %2599 = vmatprep.subr.mxu0 0.0
        %2600 = vmatpush2.msra.mxu0 0.0
        %2601 = vmatprep.subr.mxu0 0.0
        %2602 = vmatpush2.msra.mxu0 0.0
        %2603 = vmatprep.subr.mxu0 0.0
        %2604 = vmatpush2.msra.mxu0 0.0
        %2605 = vmatprep.subr.mxu0 0.0
        %2606 = vmatpush2.msra.mxu0 0.0
        %2607 = vmatprep.subr.mxu0 0.0
        %2608 = vmatpush2.msra.mxu0 0.0
        %2609 = vmatprep.subr.mxu0 0.0
        %2610 = vmatpush2.msra.mxu0 0.0
        %2611 = vmatprep.subr.mxu0 0.0
        %2612 = vmatpush2.msra.mxu0 0.0
        %2613 = vmatprep.subr.mxu0 0.0
        %2614 = vmatpush2.msra.mxu0 0.0
        %2615 = vmatprep.subr.mxu0 0.0
        %2616 = vmatpush2.msra.mxu0 0.0
        %2617 = vmatprep.subr.mxu0 0.0
        %2618 = vmatpush2.msra.mxu0 0.0
        %2619 = vmatprep.subr.mxu0 0.0
        %2620 = vmatpush2.msra.mxu0 0.0
        %2621 = vmatprep.subr.mxu0 0.0
        %2622 = vmatpush2.msra.mxu0 0.0
        %2623 = vmatprep.subr.mxu0 0.0
        %2624 = vmatpush2.msra.mxu0 0.0
        %2625 = vmatprep.subr.mxu0 0.0
        %2626 = vmatpush2.msra.mxu0 0.0
        %2627 = vmatprep.subr.mxu0 0.0
        %2628 = vmatpush2.msra.mxu0 0.0
        %2629 = vmatprep.mubr.f32.mxu0 0.0
        %2630 = vmatmul.mubr.f32.gmra.mxu0 %v2486
        %v2631 = vpop.f32.mrf.mxu0
        %v2632 = vadd.f32 0.0, %v2631
        %v2633 = vpop.f32.mrf.mxu0
        %2634 = vdwg.mxu0
        %v2635 = vadd.f32 %v2467, %v2561
        %v2636 = vadd.f32 %v2468, %v2563
        %v2637 = vadd.f32 %v2469, %v2632
        %v2638 = vld [vmem:[#allocation2] sm:$0xff]
        %v2639 = vld [vmem:[#allocation2 + $0x8] sm:$0xf]
        %s2640 = scalar_lea.vmem %s3, 20
        %v2641 = vld [vmem:[%s2640] sm:$0xf]
        %v2644 = vcombine.high %v2638, %v2638
        %2645 = vrot.lane.b32.xlu0 %v2638, 108
        %v2646 = vpop.permute.xlu0 %2645
        %2647 = vrot.lane.b32.xlu0 %v2644, 108
        %v2648 = vpop.permute.xlu0 %2647
        %2649 = vrot.lane.b32.xlu0 %v2639, 108
        %v2650 = vpop.permute.xlu0 %2649
        %v2651 = vsel %vm1064, %v2646, %v2648
        %v2652 = vsel %vm1064, %v2648, %v2650
        %v2654 = vsel %vm242, %v2641, 0
        %v2656 = vsel %vm246, %v2651, 0
        %v2658 = vsel %vm246, %v2652, 0
        %v2660 = vsel %vm246, %v2650, 0
        %2662 = vmatprep.subr.mxu0 0.0
        %2663 = vmatpush1.msra.mxu0 0.0
        %2664 = vmatprep.subr.mxu0 0.0
        %2665 = vmatpush1.msra.mxu0 0.0
        %2666 = vmatprep.subr.mxu0 0.0
        %2667 = vmatpush1.msra.mxu0 0.0
        %2668 = vmatprep.subr.mxu0 0.0
        %2669 = vmatpush1.msra.mxu0 0.0
        %2670 = vmatprep.subr.mxu0 0.0
        %2671 = vmatpush1.msra.mxu0 0.0
        %2672 = vmatprep.subr.mxu0 0.0
        %2673 = vmatpush1.msra.mxu0 0.0
        %2674 = vmatprep.subr.mxu0 0.0
        %2675 = vmatpush1.msra.mxu0 0.0
        %2676 = vmatprep.subr.mxu0 0.0
        %2677 = vmatpush1.msra.mxu0 0.0
        %2678 = vmatprep.subr.mxu0 0.0
        %2679 = vmatpush1.msra.mxu0 0.0
        %2680 = vmatprep.subr.mxu0 0.0
        %2681 = vmatpush1.msra.mxu0 0.0
        %2682 = vmatprep.subr.mxu0 0.0
        %2683 = vmatpush1.msra.mxu0 0.0
        %2684 = vmatprep.subr.mxu0 0.0
        %2685 = vmatpush1.msra.mxu0 0.0
        %2686 = vmatprep.subr.mxu0 0.0
        %2687 = vmatpush1.msra.mxu0 0.0
        %2688 = vmatprep.subr.mxu0 0.0
        %2689 = vmatpush1.msra.mxu0 0.0
        %2690 = vmatprep.subr.mxu0 0.0
        %2691 = vmatpush1.msra.mxu0 0.0
        %2692 = vmatprep.subr.mxu0 %v2658
        %2693 = vmatpush1.msra.mxu0 %v2656
        %2694 = vmatprep.subr.mxu0 0.0
        %2695 = vmatpush2.msra.mxu0 0.0
        %2696 = vmatprep.subr.mxu0 0.0
        %2697 = vmatpush2.msra.mxu0 0.0
        %2698 = vmatprep.subr.mxu0 0.0
        %2699 = vmatpush2.msra.mxu0 0.0
        %2700 = vmatprep.subr.mxu0 0.0
        %2701 = vmatpush2.msra.mxu0 0.0
        %2702 = vmatprep.subr.mxu0 0.0
        %2703 = vmatpush2.msra.mxu0 0.0
        %2704 = vmatprep.subr.mxu0 0.0
        %2705 = vmatpush2.msra.mxu0 0.0
        %2706 = vmatprep.subr.mxu0 0.0
        %2707 = vmatpush2.msra.mxu0 0.0
        %2708 = vmatprep.subr.mxu0 0.0
        %2709 = vmatpush2.msra.mxu0 0.0
        %2710 = vmatprep.subr.mxu0 0.0
        %2711 = vmatpush2.msra.mxu0 0.0
        %2712 = vmatprep.subr.mxu0 0.0
        %2713 = vmatpush2.msra.mxu0 0.0
        %2714 = vmatprep.subr.mxu0 0.0
        %2715 = vmatpush2.msra.mxu0 0.0
        %2716 = vmatprep.subr.mxu0 0.0
        %2717 = vmatpush2.msra.mxu0 0.0
        %2718 = vmatprep.subr.mxu0 0.0
        %2719 = vmatpush2.msra.mxu0 0.0
        %2720 = vmatprep.subr.mxu0 0.0
        %2721 = vmatpush2.msra.mxu0 0.0
        %2722 = vmatprep.subr.mxu0 0.0
        %2723 = vmatpush2.msra.mxu0 0.0
        %2724 = vmatprep.subr.mxu0 0.0
        %2725 = vmatpush2.msra.mxu0 0.0
        %2726 = vmatprep.mubr.f32.mxu0 0.0
        %2727 = vmatmul.mubr.f32.gmra.mxu0 %v2654
        %v2728 = vpop.f32.mrf.mxu0
        %v2729 = vadd.f32 0.0, %v2728
        %v2730 = vpop.f32.mrf.mxu0
        %v2731 = vadd.f32 0.0, %v2730
        %2732 = vdwg.mxu0
        %2733 = vmatprep.subr.mxu0 0.0
        %2734 = vmatpush1.msra.mxu0 0.0
        %2735 = vmatprep.subr.mxu0 0.0
        %2736 = vmatpush1.msra.mxu0 0.0
        %2737 = vmatprep.subr.mxu0 0.0
        %2738 = vmatpush1.msra.mxu0 0.0
        %2739 = vmatprep.subr.mxu0 0.0
        %2740 = vmatpush1.msra.mxu0 0.0
        %2741 = vmatprep.subr.mxu0 0.0
        %2742 = vmatpush1.msra.mxu0 0.0
        %2743 = vmatprep.subr.mxu0 0.0
        %2744 = vmatpush1.msra.mxu0 0.0
        %2745 = vmatprep.subr.mxu0 0.0
        %2746 = vmatpush1.msra.mxu0 0.0
        %2747 = vmatprep.subr.mxu0 0.0
        %2748 = vmatpush1.msra.mxu0 0.0
        %2749 = vmatprep.subr.mxu0 0.0
        %2750 = vmatpush1.msra.mxu0 0.0
        %2751 = vmatprep.subr.mxu0 0.0
        %2752 = vmatpush1.msra.mxu0 0.0
        %2753 = vmatprep.subr.mxu0 0.0
        %2754 = vmatpush1.msra.mxu0 0.0
        %2755 = vmatprep.subr.mxu0 0.0
        %2756 = vmatpush1.msra.mxu0 0.0
        %2757 = vmatprep.subr.mxu0 0.0
        %2758 = vmatpush1.msra.mxu0 0.0
        %2759 = vmatprep.subr.mxu0 0.0
        %2760 = vmatpush1.msra.mxu0 0.0
        %2761 = vmatprep.subr.mxu0 0.0
        %2762 = vmatpush1.msra.mxu0 0.0
        %2763 = vmatprep.subr.mxu0 0.0
        %2764 = vmatpush1.msra.mxu0 %v2660
        %2765 = vmatprep.subr.mxu0 0.0
        %2766 = vmatpush2.msra.mxu0 0.0
        %2767 = vmatprep.subr.mxu0 0.0
        %2768 = vmatpush2.msra.mxu0 0.0
        %2769 = vmatprep.subr.mxu0 0.0
        %2770 = vmatpush2.msra.mxu0 0.0
        %2771 = vmatprep.subr.mxu0 0.0
        %2772 = vmatpush2.msra.mxu0 0.0
        %2773 = vmatprep.subr.mxu0 0.0
        %2774 = vmatpush2.msra.mxu0 0.0
        %2775 = vmatprep.subr.mxu0 0.0
        %2776 = vmatpush2.msra.mxu0 0.0
        %2777 = vmatprep.subr.mxu0 0.0
        %2778 = vmatpush2.msra.mxu0 0.0
        %2779 = vmatprep.subr.mxu0 0.0
        %2780 = vmatpush2.msra.mxu0 0.0
        %2781 = vmatprep.subr.mxu0 0.0
        %2782 = vmatpush2.msra.mxu0 0.0
        %2783 = vmatprep.subr.mxu0 0.0
        %2784 = vmatpush2.msra.mxu0 0.0
        %2785 = vmatprep.subr.mxu0 0.0
        %2786 = vmatpush2.msra.mxu0 0.0
        %2787 = vmatprep.subr.mxu0 0.0
        %2788 = vmatpush2.msra.mxu0 0.0
        %2789 = vmatprep.subr.mxu0 0.0
        %2790 = vmatpush2.msra.mxu0 0.0
        %2791 = vmatprep.subr.mxu0 0.0
        %2792 = vmatpush2.msra.mxu0 0.0
        %2793 = vmatprep.subr.mxu0 0.0
        %2794 = vmatpush2.msra.mxu0 0.0
        %2795 = vmatprep.subr.mxu0 0.0
        %2796 = vmatpush2.msra.mxu0 0.0
        %2797 = vmatprep.mubr.f32.mxu0 0.0
        %2798 = vmatmul.mubr.f32.gmra.mxu0 %v2654
        %v2799 = vpop.f32.mrf.mxu0
        %v2800 = vadd.f32 0.0, %v2799
        %v2801 = vpop.f32.mrf.mxu0
        %2802 = vdwg.mxu0
        %v2803 = vadd.f32 %v2635, %v2729
        %v2804 = vadd.f32 %v2636, %v2731
        %v2805 = vadd.f32 %v2637, %v2800
        %v2806 = vld [vmem:[#allocation2] sm:$0xff]
        %v2807 = vld [vmem:[#allocation2 + $0x8] sm:$0xf]
        %s2808 = scalar_lea.vmem %s3, 24
        %v2809 = vld [vmem:[%s2808] sm:$0xf]
        %v2812 = vcombine.high %v2806, %v2806
        %2813 = vrot.lane.b32.xlu0 %v2806, 92
        %v2814 = vpop.permute.xlu0 %2813
        %2815 = vrot.lane.b32.xlu0 %v2812, 92
        %v2816 = vpop.permute.xlu0 %2815
        %2817 = vrot.lane.b32.xlu0 %v2807, 92
        %v2818 = vpop.permute.xlu0 %2817
        %v2819 = vsel %vm1233, %v2814, %v2816
        %v2820 = vsel %vm1233, %v2816, %v2818
        %v2822 = vsel %vm242, %v2809, 0
        %v2824 = vsel %vm246, %v2819, 0
        %v2826 = vsel %vm246, %v2820, 0
        %v2828 = vsel %vm246, %v2818, 0
        %2830 = vmatprep.subr.mxu0 0.0
        %2831 = vmatpush1.msra.mxu0 0.0
        %2832 = vmatprep.subr.mxu0 0.0
        %2833 = vmatpush1.msra.mxu0 0.0
        %2834 = vmatprep.subr.mxu0 0.0
        %2835 = vmatpush1.msra.mxu0 0.0
        %2836 = vmatprep.subr.mxu0 0.0
        %2837 = vmatpush1.msra.mxu0 0.0
        %2838 = vmatprep.subr.mxu0 0.0
        %2839 = vmatpush1.msra.mxu0 0.0
        %2840 = vmatprep.subr.mxu0 0.0
        %2841 = vmatpush1.msra.mxu0 0.0
        %2842 = vmatprep.subr.mxu0 0.0
        %2843 = vmatpush1.msra.mxu0 0.0
        %2844 = vmatprep.subr.mxu0 0.0
        %2845 = vmatpush1.msra.mxu0 0.0
        %2846 = vmatprep.subr.mxu0 0.0
        %2847 = vmatpush1.msra.mxu0 0.0
        %2848 = vmatprep.subr.mxu0 0.0
        %2849 = vmatpush1.msra.mxu0 0.0
        %2850 = vmatprep.subr.mxu0 0.0
        %2851 = vmatpush1.msra.mxu0 0.0
        %2852 = vmatprep.subr.mxu0 0.0
        %2853 = vmatpush1.msra.mxu0 0.0
        %2854 = vmatprep.subr.mxu0 0.0
        %2855 = vmatpush1.msra.mxu0 0.0
        %2856 = vmatprep.subr.mxu0 0.0
        %2857 = vmatpush1.msra.mxu0 0.0
        %2858 = vmatprep.subr.mxu0 0.0
        %2859 = vmatpush1.msra.mxu0 0.0
        %2860 = vmatprep.subr.mxu0 %v2826
        %2861 = vmatpush1.msra.mxu0 %v2824
        %2862 = vmatprep.subr.mxu0 0.0
        %2863 = vmatpush2.msra.mxu0 0.0
        %2864 = vmatprep.subr.mxu0 0.0
        %2865 = vmatpush2.msra.mxu0 0.0
        %2866 = vmatprep.subr.mxu0 0.0
        %2867 = vmatpush2.msra.mxu0 0.0
        %2868 = vmatprep.subr.mxu0 0.0
        %2869 = vmatpush2.msra.mxu0 0.0
        %2870 = vmatprep.subr.mxu0 0.0
        %2871 = vmatpush2.msra.mxu0 0.0
        %2872 = vmatprep.subr.mxu0 0.0
        %2873 = vmatpush2.msra.mxu0 0.0
        %2874 = vmatprep.subr.mxu0 0.0
        %2875 = vmatpush2.msra.mxu0 0.0
        %2876 = vmatprep.subr.mxu0 0.0
        %2877 = vmatpush2.msra.mxu0 0.0
        %2878 = vmatprep.subr.mxu0 0.0
        %2879 = vmatpush2.msra.mxu0 0.0
        %2880 = vmatprep.subr.mxu0 0.0
        %2881 = vmatpush2.msra.mxu0 0.0
        %2882 = vmatprep.subr.mxu0 0.0
        %2883 = vmatpush2.msra.mxu0 0.0
        %2884 = vmatprep.subr.mxu0 0.0
        %2885 = vmatpush2.msra.mxu0 0.0
        %2886 = vmatprep.subr.mxu0 0.0
        %2887 = vmatpush2.msra.mxu0 0.0
        %2888 = vmatprep.subr.mxu0 0.0
        %2889 = vmatpush2.msra.mxu0 0.0
        %2890 = vmatprep.subr.mxu0 0.0
        %2891 = vmatpush2.msra.mxu0 0.0
        %2892 = vmatprep.subr.mxu0 0.0
        %2893 = vmatpush2.msra.mxu0 0.0
        %2894 = vmatprep.mubr.f32.mxu0 0.0
        %2895 = vmatmul.mubr.f32.gmra.mxu0 %v2822
        %v2896 = vpop.f32.mrf.mxu0
        %v2897 = vadd.f32 0.0, %v2896
        %v2898 = vpop.f32.mrf.mxu0
        %v2899 = vadd.f32 0.0, %v2898
        %2900 = vdwg.mxu0
        %2901 = vmatprep.subr.mxu0 0.0
        %2902 = vmatpush1.msra.mxu0 0.0
        %2903 = vmatprep.subr.mxu0 0.0
        %2904 = vmatpush1.msra.mxu0 0.0
        %2905 = vmatprep.subr.mxu0 0.0
        %2906 = vmatpush1.msra.mxu0 0.0
        %2907 = vmatprep.subr.mxu0 0.0
        %2908 = vmatpush1.msra.mxu0 0.0
        %2909 = vmatprep.subr.mxu0 0.0
        %2910 = vmatpush1.msra.mxu0 0.0
        %2911 = vmatprep.subr.mxu0 0.0
        %2912 = vmatpush1.msra.mxu0 0.0
        %2913 = vmatprep.subr.mxu0 0.0
        %2914 = vmatpush1.msra.mxu0 0.0
        %2915 = vmatprep.subr.mxu0 0.0
        %2916 = vmatpush1.msra.mxu0 0.0
        %2917 = vmatprep.subr.mxu0 0.0
        %2918 = vmatpush1.msra.mxu0 0.0
        %2919 = vmatprep.subr.mxu0 0.0
        %2920 = vmatpush1.msra.mxu0 0.0
        %2921 = vmatprep.subr.mxu0 0.0
        %2922 = vmatpush1.msra.mxu0 0.0
        %2923 = vmatprep.subr.mxu0 0.0
        %2924 = vmatpush1.msra.mxu0 0.0
        %2925 = vmatprep.subr.mxu0 0.0
        %2926 = vmatpush1.msra.mxu0 0.0
        %2927 = vmatprep.subr.mxu0 0.0
        %2928 = vmatpush1.msra.mxu0 0.0
        %2929 = vmatprep.subr.mxu0 0.0
        %2930 = vmatpush1.msra.mxu0 0.0
        %2931 = vmatprep.subr.mxu0 0.0
        %2932 = vmatpush1.msra.mxu0 %v2828
        %2933 = vmatprep.subr.mxu0 0.0
        %2934 = vmatpush2.msra.mxu0 0.0
        %2935 = vmatprep.subr.mxu0 0.0
        %2936 = vmatpush2.msra.mxu0 0.0
        %2937 = vmatprep.subr.mxu0 0.0
        %2938 = vmatpush2.msra.mxu0 0.0
        %2939 = vmatprep.subr.mxu0 0.0
        %2940 = vmatpush2.msra.mxu0 0.0
        %2941 = vmatprep.subr.mxu0 0.0
        %2942 = vmatpush2.msra.mxu0 0.0
        %2943 = vmatprep.subr.mxu0 0.0
        %2944 = vmatpush2.msra.mxu0 0.0
        %2945 = vmatprep.subr.mxu0 0.0
        %2946 = vmatpush2.msra.mxu0 0.0
        %2947 = vmatprep.subr.mxu0 0.0
        %2948 = vmatpush2.msra.mxu0 0.0
        %2949 = vmatprep.subr.mxu0 0.0
        %2950 = vmatpush2.msra.mxu0 0.0
        %2951 = vmatprep.subr.mxu0 0.0
        %2952 = vmatpush2.msra.mxu0 0.0
        %2953 = vmatprep.subr.mxu0 0.0
        %2954 = vmatpush2.msra.mxu0 0.0
        %2955 = vmatprep.subr.mxu0 0.0
        %2956 = vmatpush2.msra.mxu0 0.0
        %2957 = vmatprep.subr.mxu0 0.0
        %2958 = vmatpush2.msra.mxu0 0.0
        %2959 = vmatprep.subr.mxu0 0.0
        %2960 = vmatpush2.msra.mxu0 0.0
        %2961 = vmatprep.subr.mxu0 0.0
        %2962 = vmatpush2.msra.mxu0 0.0
        %2963 = vmatprep.subr.mxu0 0.0
        %2964 = vmatpush2.msra.mxu0 0.0
        %2965 = vmatprep.mubr.f32.mxu0 0.0
        %2966 = vmatmul.mubr.f32.gmra.mxu0 %v2822
        %v2967 = vpop.f32.mrf.mxu0
        %v2968 = vadd.f32 0.0, %v2967
        %v2969 = vpop.f32.mrf.mxu0
        %2970 = vdwg.mxu0
        %v2971 = vadd.f32 %v2803, %v2897
        %v2972 = vadd.f32 %v2804, %v2899
        %v2973 = vadd.f32 %v2805, %v2968
        %v2974 = vld [vmem:[#allocation2] sm:$0xff]
        %v2975 = vld [vmem:[#allocation2 + $0x8] sm:$0xf]
        %s2976 = scalar_lea.vmem %s3, 28
        %v2977 = vld [vmem:[%s2976] sm:$0xf]
        %v2980 = vcombine.high %v2974, %v2974
        %2981 = vrot.lane.b32.xlu0 %v2974, 91
        %v2982 = vpop.permute.xlu0 %2981
        %2983 = vrot.lane.b32.xlu0 %v2980, 91
        %v2984 = vpop.permute.xlu0 %2983
        %2985 = vrot.lane.b32.xlu0 %v2975, 91
        %v2986 = vpop.permute.xlu0 %2985
        %v2987 = vsel %vm1402, %v2982, %v2984
        %v2988 = vsel %vm1402, %v2984, %v2986
        %v2990 = vsel %vm242, %v2977, 0
        %v2992 = vsel %vm246, %v2987, 0
        %v2994 = vsel %vm246, %v2988, 0
        %v2996 = vsel %vm246, %v2986, 0
        %2998 = vmatprep.subr.mxu0 0.0
        %2999 = vmatpush1.msra.mxu0 0.0
        %3000 = vmatprep.subr.mxu0 0.0
        %3001 = vmatpush1.msra.mxu0 0.0
        %3002 = vmatprep.subr.mxu0 0.0
        %3003 = vmatpush1.msra.mxu0 0.0
        %3004 = vmatprep.subr.mxu0 0.0
        %3005 = vmatpush1.msra.mxu0 0.0
        %3006 = vmatprep.subr.mxu0 0.0
        %3007 = vmatpush1.msra.mxu0 0.0
        %3008 = vmatprep.subr.mxu0 0.0
        %3009 = vmatpush1.msra.mxu0 0.0
        %3010 = vmatprep.subr.mxu0 0.0
        %3011 = vmatpush1.msra.mxu0 0.0
        %3012 = vmatprep.subr.mxu0 0.0
        %3013 = vmatpush1.msra.mxu0 0.0
        %3014 = vmatprep.subr.mxu0 0.0
        %3015 = vmatpush1.msra.mxu0 0.0
        %3016 = vmatprep.subr.mxu0 0.0
        %3017 = vmatpush1.msra.mxu0 0.0
        %3018 = vmatprep.subr.mxu0 0.0
        %3019 = vmatpush1.msra.mxu0 0.0
        %3020 = vmatprep.subr.mxu0 0.0
        %3021 = vmatpush1.msra.mxu0 0.0
        %3022 = vmatprep.subr.mxu0 0.0
        %3023 = vmatpush1.msra.mxu0 0.0
        %3024 = vmatprep.subr.mxu0 0.0
        %3025 = vmatpush1.msra.mxu0 0.0
        %3026 = vmatprep.subr.mxu0 0.0
        %3027 = vmatpush1.msra.mxu0 0.0
        %3028 = vmatprep.subr.mxu0 %v2994
        %3029 = vmatpush1.msra.mxu0 %v2992
        %3030 = vmatprep.subr.mxu0 0.0
        %3031 = vmatpush2.msra.mxu0 0.0
        %3032 = vmatprep.subr.mxu0 0.0
        %3033 = vmatpush2.msra.mxu0 0.0
        %3034 = vmatprep.subr.mxu0 0.0
        %3035 = vmatpush2.msra.mxu0 0.0
        %3036 = vmatprep.subr.mxu0 0.0
        %3037 = vmatpush2.msra.mxu0 0.0
        %3038 = vmatprep.subr.mxu0 0.0
        %3039 = vmatpush2.msra.mxu0 0.0
        %3040 = vmatprep.subr.mxu0 0.0
        %3041 = vmatpush2.msra.mxu0 0.0
        %3042 = vmatprep.subr.mxu0 0.0
        %3043 = vmatpush2.msra.mxu0 0.0
        %3044 = vmatprep.subr.mxu0 0.0
        %3045 = vmatpush2.msra.mxu0 0.0
        %3046 = vmatprep.subr.mxu0 0.0
        %3047 = vmatpush2.msra.mxu0 0.0
        %3048 = vmatprep.subr.mxu0 0.0
        %3049 = vmatpush2.msra.mxu0 0.0
        %3050 = vmatprep.subr.mxu0 0.0
        %3051 = vmatpush2.msra.mxu0 0.0
        %3052 = vmatprep.subr.mxu0 0.0
        %3053 = vmatpush2.msra.mxu0 0.0
        %3054 = vmatprep.subr.mxu0 0.0
        %3055 = vmatpush2.msra.mxu0 0.0
        %3056 = vmatprep.subr.mxu0 0.0
        %3057 = vmatpush2.msra.mxu0 0.0
        %3058 = vmatprep.subr.mxu0 0.0
        %3059 = vmatpush2.msra.mxu0 0.0
        %3060 = vmatprep.subr.mxu0 0.0
        %3061 = vmatpush2.msra.mxu0 0.0
        %3062 = vmatprep.mubr.f32.mxu0 0.0
        %3063 = vmatmul.mubr.f32.gmra.mxu0 %v2990
        %v3064 = vpop.f32.mrf.mxu0
        %v3065 = vadd.f32 0.0, %v3064
        %v3066 = vpop.f32.mrf.mxu0
        %v3067 = vadd.f32 0.0, %v3066
        %3068 = vdwg.mxu0
        %3069 = vmatprep.subr.mxu0 0.0
        %3070 = vmatpush1.msra.mxu0 0.0
        %3071 = vmatprep.subr.mxu0 0.0
        %3072 = vmatpush1.msra.mxu0 0.0
        %3073 = vmatprep.subr.mxu0 0.0
        %3074 = vmatpush1.msra.mxu0 0.0
        %3075 = vmatprep.subr.mxu0 0.0
        %3076 = vmatpush1.msra.mxu0 0.0
        %3077 = vmatprep.subr.mxu0 0.0
        %3078 = vmatpush1.msra.mxu0 0.0
        %3079 = vmatprep.subr.mxu0 0.0
        %3080 = vmatpush1.msra.mxu0 0.0
        %3081 = vmatprep.subr.mxu0 0.0
        %3082 = vmatpush1.msra.mxu0 0.0
        %3083 = vmatprep.subr.mxu0 0.0
        %3084 = vmatpush1.msra.mxu0 0.0
        %3085 = vmatprep.subr.mxu0 0.0
        %3086 = vmatpush1.msra.mxu0 0.0
        %3087 = vmatprep.subr.mxu0 0.0
        %3088 = vmatpush1.msra.mxu0 0.0
        %3089 = vmatprep.subr.mxu0 0.0
        %3090 = vmatpush1.msra.mxu0 0.0
        %3091 = vmatprep.subr.mxu0 0.0
        %3092 = vmatpush1.msra.mxu0 0.0
        %3093 = vmatprep.subr.mxu0 0.0
        %3094 = vmatpush1.msra.mxu0 0.0
        %3095 = vmatprep.subr.mxu0 0.0
        %3096 = vmatpush1.msra.mxu0 0.0
        %3097 = vmatprep.subr.mxu0 0.0
        %3098 = vmatpush1.msra.mxu0 0.0
        %3099 = vmatprep.subr.mxu0 0.0
        %3100 = vmatpush1.msra.mxu0 %v2996
        %3101 = vmatprep.subr.mxu0 0.0
        %3102 = vmatpush2.msra.mxu0 0.0
        %3103 = vmatprep.subr.mxu0 0.0
        %3104 = vmatpush2.msra.mxu0 0.0
        %3105 = vmatprep.subr.mxu0 0.0
        %3106 = vmatpush2.msra.mxu0 0.0
        %3107 = vmatprep.subr.mxu0 0.0
        %3108 = vmatpush2.msra.mxu0 0.0
        %3109 = vmatprep.subr.mxu0 0.0
        %3110 = vmatpush2.msra.mxu0 0.0
        %3111 = vmatprep.subr.mxu0 0.0
        %3112 = vmatpush2.msra.mxu0 0.0
        %3113 = vmatprep.subr.mxu0 0.0
        %3114 = vmatpush2.msra.mxu0 0.0
        %3115 = vmatprep.subr.mxu0 0.0
        %3116 = vmatpush2.msra.mxu0 0.0
        %3117 = vmatprep.subr.mxu0 0.0
        %3118 = vmatpush2.msra.mxu0 0.0
        %3119 = vmatprep.subr.mxu0 0.0
        %3120 = vmatpush2.msra.mxu0 0.0
        %3121 = vmatprep.subr.mxu0 0.0
        %3122 = vmatpush2.msra.mxu0 0.0
        %3123 = vmatprep.subr.mxu0 0.0
        %3124 = vmatpush2.msra.mxu0 0.0
        %3125 = vmatprep.subr.mxu0 0.0
        %3126 = vmatpush2.msra.mxu0 0.0
        %3127 = vmatprep.subr.mxu0 0.0
        %3128 = vmatpush2.msra.mxu0 0.0
        %3129 = vmatprep.subr.mxu0 0.0
        %3130 = vmatpush2.msra.mxu0 0.0
        %3131 = vmatprep.subr.mxu0 0.0
        %3132 = vmatpush2.msra.mxu0 0.0
        %3133 = vmatprep.mubr.f32.mxu0 0.0
        %3134 = vmatmul.mubr.f32.gmra.mxu0 %v2990
        %v3135 = vpop.f32.mrf.mxu0
        %v3136 = vadd.f32 0.0, %v3135
        %v3137 = vpop.f32.mrf.mxu0
        %3138 = vdwg.mxu0
        %v3139 = vadd.f32 %v2971, %v3065
        %v3140 = vadd.f32 %v2972, %v3067
        %v3141 = vadd.f32 %v2973, %v3136
        %v3142 = vld [vmem:[#allocation2] sm:$0xff]
        %v3143 = vld [vmem:[#allocation2 + $0x8] sm:$0xf]
        %s3144 = scalar_lea.vmem %s3, 32
        %v3145 = vld [vmem:[%s3144] sm:$0xf]
        %v3148 = vcombine.high %v3142, %v3142
        %3149 = vrot.lane.b32.xlu0 %v3142, 90
        %v3150 = vpop.permute.xlu0 %3149
        %3151 = vrot.lane.b32.xlu0 %v3148, 90
        %v3152 = vpop.permute.xlu0 %3151
        %3153 = vrot.lane.b32.xlu0 %v3143, 90
        %v3154 = vpop.permute.xlu0 %3153
        %v3155 = vsel %vm1571, %v3150, %v3152
        %v3156 = vsel %vm1571, %v3152, %v3154
        %v3158 = vsel %vm242, %v3145, 0
        %v3160 = vsel %vm246, %v3155, 0
        %v3162 = vsel %vm246, %v3156, 0
        %v3164 = vsel %vm246, %v3154, 0
        %3166 = vmatprep.subr.mxu0 0.0
        %3167 = vmatpush1.msra.mxu0 0.0
        %3168 = vmatprep.subr.mxu0 0.0
        %3169 = vmatpush1.msra.mxu0 0.0
        %3170 = vmatprep.subr.mxu0 0.0
        %3171 = vmatpush1.msra.mxu0 0.0
        %3172 = vmatprep.subr.mxu0 0.0
        %3173 = vmatpush1.msra.mxu0 0.0
        %3174 = vmatprep.subr.mxu0 0.0
        %3175 = vmatpush1.msra.mxu0 0.0
        %3176 = vmatprep.subr.mxu0 0.0
        %3177 = vmatpush1.msra.mxu0 0.0
        %3178 = vmatprep.subr.mxu0 0.0
        %3179 = vmatpush1.msra.mxu0 0.0
        %3180 = vmatprep.subr.mxu0 0.0
        %3181 = vmatpush1.msra.mxu0 0.0
        %3182 = vmatprep.subr.mxu0 0.0
        %3183 = vmatpush1.msra.mxu0 0.0
        %3184 = vmatprep.subr.mxu0 0.0
        %3185 = vmatpush1.msra.mxu0 0.0
        %3186 = vmatprep.subr.mxu0 0.0
        %3187 = vmatpush1.msra.mxu0 0.0
        %3188 = vmatprep.subr.mxu0 0.0
        %3189 = vmatpush1.msra.mxu0 0.0
        %3190 = vmatprep.subr.mxu0 0.0
        %3191 = vmatpush1.msra.mxu0 0.0
        %3192 = vmatprep.subr.mxu0 0.0
        %3193 = vmatpush1.msra.mxu0 0.0
        %3194 = vmatprep.subr.mxu0 0.0
        %3195 = vmatpush1.msra.mxu0 0.0
        %3196 = vmatprep.subr.mxu0 %v3162
        %3197 = vmatpush1.msra.mxu0 %v3160
        %3198 = vmatprep.subr.mxu0 0.0
        %3199 = vmatpush2.msra.mxu0 0.0
        %3200 = vmatprep.subr.mxu0 0.0
        %3201 = vmatpush2.msra.mxu0 0.0
        %3202 = vmatprep.subr.mxu0 0.0
        %3203 = vmatpush2.msra.mxu0 0.0
        %3204 = vmatprep.subr.mxu0 0.0
        %3205 = vmatpush2.msra.mxu0 0.0
        %3206 = vmatprep.subr.mxu0 0.0
        %3207 = vmatpush2.msra.mxu0 0.0
        %3208 = vmatprep.subr.mxu0 0.0
        %3209 = vmatpush2.msra.mxu0 0.0
        %3210 = vmatprep.subr.mxu0 0.0
        %3211 = vmatpush2.msra.mxu0 0.0
        %3212 = vmatprep.subr.mxu0 0.0
        %3213 = vmatpush2.msra.mxu0 0.0
        %3214 = vmatprep.subr.mxu0 0.0
        %3215 = vmatpush2.msra.mxu0 0.0
        %3216 = vmatprep.subr.mxu0 0.0
        %3217 = vmatpush2.msra.mxu0 0.0
        %3218 = vmatprep.subr.mxu0 0.0
        %3219 = vmatpush2.msra.mxu0 0.0
        %3220 = vmatprep.subr.mxu0 0.0
        %3221 = vmatpush2.msra.mxu0 0.0
        %3222 = vmatprep.subr.mxu0 0.0
        %3223 = vmatpush2.msra.mxu0 0.0
        %3224 = vmatprep.subr.mxu0 0.0
        %3225 = vmatpush2.msra.mxu0 0.0
        %3226 = vmatprep.subr.mxu0 0.0
        %3227 = vmatpush2.msra.mxu0 0.0
        %3228 = vmatprep.subr.mxu0 0.0
        %3229 = vmatpush2.msra.mxu0 0.0
        %3230 = vmatprep.mubr.f32.mxu0 0.0
        %3231 = vmatmul.mubr.f32.gmra.mxu0 %v3158
        %v3232 = vpop.f32.mrf.mxu0
        %v3233 = vadd.f32 0.0, %v3232
        %v3234 = vpop.f32.mrf.mxu0
        %v3235 = vadd.f32 0.0, %v3234
        %3236 = vdwg.mxu0
        %3237 = vmatprep.subr.mxu0 0.0
        %3238 = vmatpush1.msra.mxu0 0.0
        %3239 = vmatprep.subr.mxu0 0.0
        %3240 = vmatpush1.msra.mxu0 0.0
        %3241 = vmatprep.subr.mxu0 0.0
        %3242 = vmatpush1.msra.mxu0 0.0
        %3243 = vmatprep.subr.mxu0 0.0
        %3244 = vmatpush1.msra.mxu0 0.0
        %3245 = vmatprep.subr.mxu0 0.0
        %3246 = vmatpush1.msra.mxu0 0.0
        %3247 = vmatprep.subr.mxu0 0.0
        %3248 = vmatpush1.msra.mxu0 0.0
        %3249 = vmatprep.subr.mxu0 0.0
        %3250 = vmatpush1.msra.mxu0 0.0
        %3251 = vmatprep.subr.mxu0 0.0
        %3252 = vmatpush1.msra.mxu0 0.0
        %3253 = vmatprep.subr.mxu0 0.0
        %3254 = vmatpush1.msra.mxu0 0.0
        %3255 = vmatprep.subr.mxu0 0.0
        %3256 = vmatpush1.msra.mxu0 0.0
        %3257 = vmatprep.subr.mxu0 0.0
        %3258 = vmatpush1.msra.mxu0 0.0
        %3259 = vmatprep.subr.mxu0 0.0
        %3260 = vmatpush1.msra.mxu0 0.0
        %3261 = vmatprep.subr.mxu0 0.0
        %3262 = vmatpush1.msra.mxu0 0.0
        %3263 = vmatprep.subr.mxu0 0.0
        %3264 = vmatpush1.msra.mxu0 0.0
        %3265 = vmatprep.subr.mxu0 0.0
        %3266 = vmatpush1.msra.mxu0 0.0
        %3267 = vmatprep.subr.mxu0 0.0
        %3268 = vmatpush1.msra.mxu0 %v3164
        %3269 = vmatprep.subr.mxu0 0.0
        %3270 = vmatpush2.msra.mxu0 0.0
        %3271 = vmatprep.subr.mxu0 0.0
        %3272 = vmatpush2.msra.mxu0 0.0
        %3273 = vmatprep.subr.mxu0 0.0
        %3274 = vmatpush2.msra.mxu0 0.0
        %3275 = vmatprep.subr.mxu0 0.0
        %3276 = vmatpush2.msra.mxu0 0.0
        %3277 = vmatprep.subr.mxu0 0.0
        %3278 = vmatpush2.msra.mxu0 0.0
        %3279 = vmatprep.subr.mxu0 0.0
        %3280 = vmatpush2.msra.mxu0 0.0
        %3281 = vmatprep.subr.mxu0 0.0
        %3282 = vmatpush2.msra.mxu0 0.0
        %3283 = vmatprep.subr.mxu0 0.0
        %3284 = vmatpush2.msra.mxu0 0.0
        %3285 = vmatprep.subr.mxu0 0.0
        %3286 = vmatpush2.msra.mxu0 0.0
        %3287 = vmatprep.subr.mxu0 0.0
        %3288 = vmatpush2.msra.mxu0 0.0
        %3289 = vmatprep.subr.mxu0 0.0
        %3290 = vmatpush2.msra.mxu0 0.0
        %3291 = vmatprep.subr.mxu0 0.0
        %3292 = vmatpush2.msra.mxu0 0.0
        %3293 = vmatprep.subr.mxu0 0.0
        %3294 = vmatpush2.msra.mxu0 0.0
        %3295 = vmatprep.subr.mxu0 0.0
        %3296 = vmatpush2.msra.mxu0 0.0
        %3297 = vmatprep.subr.mxu0 0.0
        %3298 = vmatpush2.msra.mxu0 0.0
        %3299 = vmatprep.subr.mxu0 0.0
        %3300 = vmatpush2.msra.mxu0 0.0
        %3301 = vmatprep.mubr.f32.mxu0 0.0
        %3302 = vmatmul.mubr.f32.gmra.mxu0 %v3158
        %v3303 = vpop.f32.mrf.mxu0
        %v3304 = vadd.f32 0.0, %v3303
        %v3305 = vpop.f32.mrf.mxu0
        %3306 = vdwg.mxu0
        %v3307 = vadd.f32 %v3139, %v3233
        %v3308 = vadd.f32 %v3140, %v3235
        %v3309 = vadd.f32 %v3141, %v3304
        %v3310 = vmul.f32 %v3307, %v1742
        %v3311 = vmul.f32 %v3308, %v1746
        %v3312 = vmul.f32 %v3309, %v1750
        %v3313 = vsel %vm246, %v3310, 0.0
        %v3314 = vsel %vm246, %v3311, 0.0
        %v3315 = vadd.f32 %v3313, %v3314
        %v3316 = vsel %vm1760, %v3312, 0.0
        %v3317 = vadd.f32 %v3315, %v3316
        %3318 = vadd.xlane.f32.xlu0 %v3317
        %v3319 = vpop.xlane.xlu0 %3318
        %v3320 = vmul.f32 %v3319, 0.00390625
        %v3321 = vmul.f32 %v3307, %v3307
        %v3322 = vmul.f32 %v3308, %v3308
        %v3323 = vmul.f32 %v3309, %v3309
        %v3324 = vmul.f32 %v3321, %v1742
        %v3325 = vmul.f32 %v3322, %v1746
        %v3326 = vmul.f32 %v3323, %v1750
        %v3327 = vsel %vm246, %v3324, 0.0
        %v3328 = vsel %vm246, %v3325, 0.0
        %v3329 = vadd.f32 %v3327, %v3328
        %v3330 = vsel %vm1760, %v3326, 0.0
        %v3331 = vadd.f32 %v3329, %v3330
        %3332 = vadd.xlane.f32.xlu0 %v3331
        %v3333 = vpop.xlane.xlu0 %3332
        %v3334 = vmul.f32 %v3333, 0.00390625
        %v3335 = vmul.f32 %v3320, %v3320
        %v3336 = vsub.f32 %v3334, %v3335
        %v3337 = vmax.f32 %v3336, 0.0
        %v3338 = vsub.f32 %v3307, %v3320
        %v3339 = vsub.f32 %v3308, %v3320
        %v3340 = vsub.f32 %v3309, %v3320
        %v3341 = vadd.f32 %v3337, 1e-05
        %v3342 = vrsqrt.pop %v3341
        %v3343 = vmul.f32 %v3338, %v3342
        %v3344 = vmul.f32 %v3339, %v3342
        %v3345 = vmul.f32 %v3340, %v3342
        %v3346 = vld [vmem:[%s222] sm:$0xff]
        %v3347 = vld [vmem:[%s222 + $0x8] sm:$0xf]
        %v3351 = vcombine.low %v3343, %v3344
        %3352 = vrot.lane.b32.xlu0 %v3351, 19
        %v3353 = vpop.permute.xlu0 %3352
        %3354 = vrot.lane.b32.xlu0 %v3345, 19
        %v3355 = vpop.permute.xlu0 %3354
        %v3356 = vrot.slane %v3353, 4
        %v3357 = vsel %vm1807, %v3356, %v3353
        %v3358 = vsel %vm1807, %v3356, %v3355
        %v3361 = vadd.f32 %v3346, %v3357
        %v3362 = vadd.f32 %v3347, %v3358
        %3365 = vrot.lane.b32.xlu0 %v3361, 109
        %v3366 = vpop.permute.xlu0 %3365
        %3367 = vrot.lane.b32.xlu0 %v3362, 109
        %v3368 = vpop.permute.xlu0 %3367
        %v3369 = vrot.slane %v3366, 4
        %v3370 = vrot.slane %v3368, 4
        %v3371 = vsel %vm246, %v3369, %v3370
        %v3372 = vsel %vm895, %v3366, %v3371
        %3375 = vst [vmem:[%s217] sm:$0xff] %v3372
        %3376 = vst.msk [vmem:[%s217 + $0x8] sm:$0xf] %vm1760, %v3368
        %s3377 = sand.u32 %s137, 1
        %s3378 = scalar_lea.sflag [#allocation4], %s3377
        %s3379 = sand.u32 %s137, 1
        %s3380 = smul.addr %s3379, 12
        %s3381 = scalar_lea.vmem [#allocation3], %s3380
        // Predicated region
        $region41: #{tpu_custom_call.1} parent=39 // pred_check
          %p3382 = pneg %p147
        $region42: #{tpu_custom_call.1} parent=39 // pred_check_branch
          %3384 = sbr.rel (%p3382) target = $region44
        $region43: #{tpu_custom_call.1} parent=39 // pred_region
          %s3386 = ssub.s32 192, 192
          %3387 = vsyncadd %s3378, %s3386
          %s3388 = smul.addr %s19, 3
          %s3389 = smul.addr %s3388, 64
          %s3390 = scalar_lea.hbm %s5, %s3389
          %s3392 = sshll.u32 %s3381, 4
          %s3393 = int_to_ptr.vmem [resolvable:$true] %s3392
          %3395 = dma.vmem_to_hbm [thread:$0]  %s3393, 192, %s3390, %s3378
        $region44: #{tpu_custom_call.1} parent=39 // pred_fallthru
          _
      $region40: #{tpu_custom_call.1} parent=5 // pred_fallthru
        _
      %p3396 = scmp.le.s32.totalorder 2, %s14
      // Predicated region
      $region45: #{tpu_custom_call.1} parent=5 // pred_check
        %p3397 = pneg %p3396
      $region46: #{tpu_custom_call.1} parent=5 // pred_check_branch
        %3399 = sbr.rel (%p3397) target = $region48
      $region47: #{tpu_custom_call.1} parent=5 // pred_region
        %s3400 = ssub.s32 %s14, 2
        // Predicated region
        $region49: #{tpu_custom_call.1} parent=47 // pred_check
          %p3401 = pneg %p153
        $region50: #{tpu_custom_call.1} parent=47 // pred_check_branch
          %3403 = sbr.rel (%p3401) target = $region52
        $region51: #{tpu_custom_call.1} parent=47 // pred_region
          %s3404 = sand.u32 %s138, 1
          %s3405 = scalar_lea.sflag [#allocation4], %s3404
          %s3406 = sand.u32 %s138, 1
          %s3407 = smul.addr %s3406, 12
          %s3408 = scalar_lea.vmem [#allocation3], %s3407
          %3409 = dma.done %s3405, 192
        $region52: #{tpu_custom_call.1} parent=47 // pred_fallthru
          _
      $region48: #{tpu_custom_call.1} parent=5 // pred_fallthru
        _
    $region6: #{tpu_custom_call.1} parent=1 // loop_footer
      %s18 = sadd.s32 1, %s14
    $region7: #{tpu_custom_call.1} parent=1 // loop_footer_branch
      %13 = sbr.rel target = $region3
    $region8: #{tpu_custom_call.1} parent=1 // loop_exit
      _
    %3410 = vsyncpa [#allocation4], 1
    %s3411 = scalar_lea.sflag [#allocation4], 1
    %3412 = vsyncpa %s3411, 1

</llo_original>
